<compile_context>
chip_gen: v7x
topology: tpu7x:2x2x1
jax: 0.10.0
libtpu: 0.0.40
codegen_flags: <defaults>
</compile_context>

<pallas_src>
import functools

import jax
import jax.numpy as jnp
from jax.experimental import pallas as pl
from jax.experimental.pallas import tpu as pltpu

_LN_EPS = 1e-5          # nn.LayerNorm default eps
_LEAKY_SLOPE = 0.01     # nn.LeakyReLU default negative_slope


def _round_up(x, m):
    return ((x + m - 1) // m) * m


# ------------------------------ fused kernel ---------------------------------

def _mlp(z, w1, b1, g, be, w2, b2):
    """self.model = Linear -> LayerNorm -> LeakyReLU -> Linear on 2-D rows (R, D)."""
    d = z.shape[-1]
    h = jnp.dot(z, w1, preferred_element_type=jnp.float32) + b1
    # Single-pass LayerNorm statistics: two back-to-back XLU reductions, no mu-gated pass.
    s1 = jnp.sum(h, axis=-1, keepdims=True)
    s2 = jnp.sum(h * h, axis=-1, keepdims=True)
    mu = s1 * (1.0 / d)
    var = s2 * (1.0 / d) - mu * mu
    hn = (h - mu) * jax.lax.rsqrt(var + _LN_EPS) * g + be
    a = jnp.where(hn > 0, hn, _LEAKY_SLOPE * hn)
    return jnp.dot(a, w2, preferred_element_type=jnp.float32) + b2


def _make_kernel(with_sims):
    def kernel(x_ref, pos_ref, one_ref, zero_ref,
               w1_ref, b1_ref, g_ref, be_ref, w2_ref, b2_ref,
               *outs_and_scratch):
        if with_sims:
            preds_ref, sone_ref, szero_ref, lo_hat_ref, lz_hat_ref = outs_and_scratch
        else:
            preds_ref, lo_hat_ref, lz_hat_ref = outs_and_scratch

        TB, TT, D = x_ref.shape

        # ---- label branch: once per T-tile (first inner batch step), cached in scratch ----
        @pl.when(pl.program_id(1) == 0)
        def _():
            pos2 = 2.0 * pos_ref[...]                                        # (TT, D)
            lab_in = jnp.concatenate([one_ref[...] + pos2,
                                      zero_ref[...] + pos2], axis=0)         # (2*TT, D), small
            lab = _mlp(lab_in, w1_ref[...], b1_ref[...], g_ref[...], be_ref[...],
                       w2_ref[...], b2_ref[...])
            lo, lz = lab[:TT], lab[TT:]
            lo_hat_ref[...] = lo * jax.lax.rsqrt(jnp.sum(lo * lo, axis=-1, keepdims=True))
            lz_hat_ref[...] = lz * jax.lax.rsqrt(jnp.sum(lz * lz, axis=-1, keepdims=True))

        # ---- main branch: model_output for this (TB, TT) tile of rows ----
        mo2 = _mlp(x_ref[...].reshape(TB * TT, D),
                   w1_ref[...], b1_ref[...], g_ref[...], be_ref[...],
                   w2_ref[...], b2_ref[...])
        mo = mo2.reshape(TB, TT, D)

        dot_one = jnp.sum(mo * lo_hat_ref[...][None, :, :], axis=-1)         # (TB, TT)
        dot_zero = jnp.sum(mo * lz_hat_ref[...][None, :, :], axis=-1)        # (TB, TT)

        if with_sims:
            inv_mo = jax.lax.rsqrt(jnp.sum(mo * mo, axis=-1))                # (TB, TT)
            sim_one = dot_one * inv_mo
            sim_zero = dot_zero * inv_mo
            preds_ref[...] = (sim_one > sim_zero).astype(preds_ref.dtype)
            sone_ref[...] = sim_one
            szero_ref[...] = sim_zero
        else:
            # sign(sim_one - sim_zero) is invariant to the positive 1/||mo|| factor.
            preds_ref[...] = (dot_one > dot_zero).astype(preds_ref.dtype)

    return kernel


# --------------------------------- wrapper ------------------------------------

@functools.partial(jax.jit, static_argnames=("with_sims",))
def embedding_model_forward(x_btd, params, *, with_sims=True):
    """x_btd: (B, T, D). Returns preds (B,T,1) [+ sim_one, sim_zero (B,T) if with_sims]."""
    B, T, D = x_btd.shape
    f32 = jnp.float32

    # Row tiling: aim for <= ~1024 MLP rows per grid step; lane-dense TT (multiple of 128),
    # batch tile TB equal to B (if small) or a multiple of 8.
    if B <= 8:
        TB, B_pad = B, B
    else:
        TB, B_pad = 8, _round_up(B, 8)
    TT = min(max(128, (1024 // TB) // 128 * 128), _round_up(T, 128))
    T_pad = _round_up(T, TT)
    grid = (T_pad // TT, B_pad // TB)           # (T-tiles parallel, batch-tiles inner)

    x_p = jnp.pad(x_btd.astype(f32), ((0, B_pad - B), (0, T_pad - T), (0, 0)))
    pos_p = jnp.pad(params["pos"][:T].astype(f32), ((0, T_pad - T), (0, 0)))

    def const2d(shape):
        return pl.BlockSpec(shape, lambda j, b: (0, 0))

    in_specs = [
        pl.BlockSpec((TB, TT, D), lambda j, b: (b, j, 0)),   # x tile (pipelined)
        pl.BlockSpec((TT, D), lambda j, b: (j, 0)),          # positional-encoding tile
        const2d((1, D)), const2d((1, D)),                    # one / zero label embeddings
        const2d((D, D)), const2d((1, D)),                    # W1^T, b1
        const2d((1, D)), const2d((1, D)),                    # LN gamma, beta
        const2d((D, D)), const2d((1, D)),                    # W2^T, b2
    ]
    n_out = 3 if with_sims else 1
    out_specs = tuple(pl.BlockSpec((TB, TT), lambda j, b: (b, j)) for _ in range(n_out))
    out_shape = tuple(jax.ShapeDtypeStruct((B_pad, T_pad), f32) for _ in range(n_out))

    outs = pl.pallas_call(
        _make_kernel(with_sims),
        out_shape=out_shape,
        grid_spec=pltpu.PrefetchScalarGridSpec(
            num_scalar_prefetch=0,
            grid=grid,
            in_specs=in_specs,
            out_specs=out_specs,
            scratch_shapes=[pltpu.VMEM((TT, D), f32),    # normalized MLP(one-label repr)
                            pltpu.VMEM((TT, D), f32)],   # normalized MLP(zero-label repr)
        ),
        compiler_params=pltpu.CompilerParams(
            dimension_semantics=("parallel", "arbitrary")),
    )(x_p, pos_p, params["one_emb"], params["zero_emb"],
      params["w1_t"], params["b1"], params["gamma"], params["beta"],
      params["w2_t"], params["b2"])

    preds = outs[0][:B, :T, None].astype(x_btd.dtype)
    if with_sims:
        return preds, outs[1][:B, :T], outs[2][:B, :T]
    return preds


# --------------------------------- params -------------------------------------

def init_params(key, input_dim=128, max_positions=5000):
    ks = jax.random.split(key, 8)
    s = 1.0 / jnp.sqrt(input_dim)
    w1 = jax.random.uniform(ks[0], (input_dim, input_dim), jnp.float32, -s, s)
    b1 = jax.random.uniform(ks[1], (input_dim,), jnp.float32, -s, s)
    w2 = jax.random.uniform(ks[2], (input_dim, input_dim), jnp.float32, -s, s)
    b2 = jax.random.uniform(ks[3], (input_dim,), jnp.float32, -s, s)
    # nn.LayerNorm init is ones/zeros; perturbed here for a stronger numeric check.
    gamma = 1.0 + 0.1 * jax.random.normal(ks[4], (input_dim,), jnp.float32)
    beta = 0.1 * jax.random.normal(ks[5], (input_dim,), jnp.float32)
    pos = jax.random.normal(ks[6], (max_positions, input_dim), jnp.float32)
    oz = jax.random.normal(ks[7], (2, input_dim), jnp.float32)
    return dict(w1_t=w1.T, b1=b1.reshape(1, -1),
                gamma=gamma.reshape(1, -1), beta=beta.reshape(1, -1),
                w2_t=w2.T, b2=b2.reshape(1, -1),
                pos=pos,
                one_emb=oz[0:1], zero_emb=oz[1:2])


# ----------------------------- pure-JAX reference ------------------------------

def ref_forward(x, params):
    def mlp(z):
        h = z @ params["w1_t"] + params["b1"]
        mu = h.mean(-1, keepdims=True)
        var = jnp.square(h - mu).mean(-1, keepdims=True)
        hn = (h - mu) / jnp.sqrt(var + _LN_EPS) * params["gamma"] + params["beta"]
        a = jnp.where(hn > 0, hn, _LEAKY_SLOPE * hn)
        return a @ params["w2_t"] + params["b2"]

    B, T, D = x.shape
    mo = mlp(x)                                              # (B, T, D)
    pos2 = 2.0 * params["pos"][:T]
    lo = mlp(params["one_emb"] + pos2)[None]                 # (1, T, D)
    lz = mlp(params["zero_emb"] + pos2)[None]                # (1, T, D)

    def cos(a, b):
        return (a * b).sum(-1) / jnp.linalg.norm(a, axis=-1) / jnp.linalg.norm(b, axis=-1)

    sim_one = cos(mo, lo)
    sim_zero = cos(mo, lz)
    preds = (sim_one > sim_zero).astype(x.dtype)[..., None]
    return preds, sim_one, sim_zero


# ------------------------------------ main -------------------------------------

if __name__ == "__main__":
    B, T, D = 2, 8, 128           # batch=2, seq=8, input_dim=128 (lane-dense feature dim)
    key = jax.random.PRNGKey(0)
    kp, kx = jax.random.split(key)
    params = init_params(kp, input_dim=D)
    x = jax.random.normal(kx, (B, T, D), jnp.float32)

    # Validation path (also returns similarities).
    preds, sim_one, sim_zero = embedding_model_forward(x, params, with_sims=True)
    preds = jax.block_until_ready(preds)
    assert preds.shape == (B, T, 1), preds.shape

    ref_preds, ref_so, ref_sz = ref_forward(x, params)
    assert jnp.allclose(sim_one, ref_so, rtol=1e-4, atol=1e-4), float(jnp.max(jnp.abs(sim_one - ref_so)))
    assert jnp.allclose(sim_zero, ref_sz, rtol=1e-4, atol=1e-4), float(jnp.max(jnp.abs(sim_zero - ref_sz)))
    assert jnp.array_equal(preds, ref_preds)

    # Production path (torch forward with label=None returns only preds).
    preds_fast = embedding_model_forward(x, params, with_sims=False)
    preds_fast = jax.block_until_ready(preds_fast)
    assert jnp.array_equal(preds_fast, ref_preds)

    print("KERNEL_OK")
</pallas_src>

<mosaic_0001>
module attributes {stable_mosaic.version = 11 : i64} {
  func.func @kernel(%arg0: i32, %arg1: i32, %arg2: memref<2x128x128xf32, #tpu.memory_space<vmem>>, %arg3: memref<128x128xf32, #tpu.memory_space<vmem>>, %arg4: memref<1x128xf32, #tpu.memory_space<vmem>>, %arg5: memref<1x128xf32, #tpu.memory_space<vmem>>, %arg6: memref<128x128xf32, #tpu.memory_space<vmem>>, %arg7: memref<1x128xf32, #tpu.memory_space<vmem>>, %arg8: memref<1x128xf32, #tpu.memory_space<vmem>>, %arg9: memref<1x128xf32, #tpu.memory_space<vmem>>, %arg10: memref<128x128xf32, #tpu.memory_space<vmem>>, %arg11: memref<1x128xf32, #tpu.memory_space<vmem>>, %arg12: memref<2x128xf32, #tpu.memory_space<vmem>>, %arg13: memref<2x128xf32, #tpu.memory_space<vmem>>, %arg14: memref<2x128xf32, #tpu.memory_space<vmem>>, %arg15: memref<128x128xf32, #tpu.memory_space<vmem>>, %arg16: memref<128x128xf32, #tpu.memory_space<vmem>>) attributes {dimension_semantics = [#tpu.dimension_semantics<parallel>, #tpu.dimension_semantics<arbitrary>], iteration_bounds = array<i64: 1, 1>, scalar_prefetch = 0 : i64, scratch_operands = 2 : i64, tpu.core_type = #tpu.core_type<tc>, window_params = [{transform_indices = @transform_0, window_bounds = array<i64: 2, 128, 128>}, {transform_indices = @transform_1, window_bounds = array<i64: 128, 128>}, {pipeline_mode = #tpu.pipeline_mode<synchronous>, transform_indices = @transform_2, window_bounds = array<i64: 1, 128>}, {pipeline_mode = #tpu.pipeline_mode<synchronous>, transform_indices = @transform_3, window_bounds = array<i64: 1, 128>}, {pipeline_mode = #tpu.pipeline_mode<synchronous>, transform_indices = @transform_4, window_bounds = array<i64: 128, 128>}, {pipeline_mode = #tpu.pipeline_mode<synchronous>, transform_indices = @transform_5, window_bounds = array<i64: 1, 128>}, {pipeline_mode = #tpu.pipeline_mode<synchronous>, transform_indices = @transform_6, window_bounds = array<i64: 1, 128>}, {pipeline_mode = #tpu.pipeline_mode<synchronous>, transform_indices = @transform_7, window_bounds = array<i64: 1, 128>}, {pipeline_mode = #tpu.pipeline_mode<synchronous>, transform_indices = @transform_8, window_bounds = array<i64: 128, 128>}, {pipeline_mode = #tpu.pipeline_mode<synchronous>, transform_indices = @transform_9, window_bounds = array<i64: 1, 128>}, {transform_indices = @transform_10, window_bounds = array<i64: 2, 128>}, {transform_indices = @transform_11, window_bounds = array<i64: 2, 128>}, {transform_indices = @transform_12, window_bounds = array<i64: 2, 128>}]} {
    %c0_i32 = arith.constant 0 : i32
    %0 = arith.cmpi eq, %arg1, %c0_i32 : i32
    %1 = arith.extui %0 : i1 to i32
    %c0_i32_0 = arith.constant 0 : i32
    %2 = arith.cmpi ne, %1, %c0_i32_0 : i32
    scf.if %2 {
      %c0_36 = arith.constant 0 : index
      %c0_37 = arith.constant 0 : index
      %66 = vector.load %arg3[%c0_36, %c0_37] : memref<128x128xf32, #tpu.memory_space<vmem>>, vector<128x128xf32>
      %cst_38 = arith.constant 2.000000e+00 : f32
      %67 = vector.broadcast %cst_38 : f32 to vector<128x128xf32>
      %68 = arith.mulf %67, %66 : vector<128x128xf32>
      %c0_39 = arith.constant 0 : index
      %c0_40 = arith.constant 0 : index
      %69 = vector.load %arg4[%c0_39, %c0_40] : memref<1x128xf32, #tpu.memory_space<vmem>>, vector<1x128xf32>
      %70 = vector.broadcast %69 : vector<1x128xf32> to vector<128x128xf32>
      %71 = arith.addf %70, %68 : vector<128x128xf32>
      %c0_41 = arith.constant 0 : index
      %c0_42 = arith.constant 0 : index
      %72 = vector.load %arg5[%c0_41, %c0_42] : memref<1x128xf32, #tpu.memory_space<vmem>>, vector<1x128xf32>
      %73 = vector.broadcast %72 : vector<1x128xf32> to vector<128x128xf32>
      %74 = arith.addf %73, %68 : vector<128x128xf32>
      %75 = tpu.concatenate %71, %74 in 0 : vector<128x128xf32>, vector<128x128xf32> -> vector<256x128xf32>
      %c0_43 = arith.constant 0 : index
      %c0_44 = arith.constant 0 : index
      %76 = vector.load %arg6[%c0_43, %c0_44] : memref<128x128xf32, #tpu.memory_space<vmem>>, vector<128x128xf32>
      %c0_45 = arith.constant 0 : index
      %c0_46 = arith.constant 0 : index
      %77 = vector.load %arg7[%c0_45, %c0_46] : memref<1x128xf32, #tpu.memory_space<vmem>>, vector<1x128xf32>
      %c0_47 = arith.constant 0 : index
      %c0_48 = arith.constant 0 : index
      %78 = vector.load %arg8[%c0_47, %c0_48] : memref<1x128xf32, #tpu.memory_space<vmem>>, vector<1x128xf32>
      %c0_49 = arith.constant 0 : index
      %c0_50 = arith.constant 0 : index
      %79 = vector.load %arg9[%c0_49, %c0_50] : memref<1x128xf32, #tpu.memory_space<vmem>>, vector<1x128xf32>
      %c0_51 = arith.constant 0 : index
      %c0_52 = arith.constant 0 : index
      %80 = vector.load %arg10[%c0_51, %c0_52] : memref<128x128xf32, #tpu.memory_space<vmem>>, vector<128x128xf32>
      %c0_53 = arith.constant 0 : index
      %c0_54 = arith.constant 0 : index
      %81 = vector.load %arg11[%c0_53, %c0_54] : memref<1x128xf32, #tpu.memory_space<vmem>>, vector<1x128xf32>
      %cst_55 = arith.constant dense<0.000000e+00> : vector<256x128xf32>
      %82 = tpu.matmul %75, %76, %cst_55 {dimension_numbers = #tpu.dot_dimension_numbers<[1], [0], [0], [1], [0, 0, 1, 1], [], []>} : vector<256x128xf32>, vector<128x128xf32>, vector<256x128xf32> -> vector<256x128xf32>
      %83 = vector.broadcast %77 : vector<1x128xf32> to vector<256x128xf32>
      %84 = arith.addf %82, %83 : vector<256x128xf32>
      %cst_56 = arith.constant dense<0.000000e+00> : vector<256xf32>
      %85 = vector.multi_reduction <add>, %84, %cst_56 [1] : vector<256x128xf32> to vector<256xf32>
      %86 = vector.shape_cast %85 : vector<256xf32> to vector<256x1xf32>
      %87 = arith.mulf %84, %84 : vector<256x128xf32>
      %cst_57 = arith.constant dense<0.000000e+00> : vector<256xf32>
      %88 = vector.multi_reduction <add>, %87, %cst_57 [1] : vector<256x128xf32> to vector<256xf32>
      %89 = vector.shape_cast %88 : vector<256xf32> to vector<256x1xf32>
      %cst_58 = arith.constant 7.812500e-03 : f32
      %90 = vector.broadcast %cst_58 : f32 to vector<256x1xf32>
      %91 = arith.mulf %86, %90 : vector<256x1xf32>
      %cst_59 = arith.constant 7.812500e-03 : f32
      %92 = vector.broadcast %cst_59 : f32 to vector<256x1xf32>
      %93 = arith.mulf %89, %92 : vector<256x1xf32>
      %94 = arith.mulf %91, %91 : vector<256x1xf32>
      %95 = arith.subf %93, %94 : vector<256x1xf32>
      %96 = vector.broadcast %91 : vector<256x1xf32> to vector<256x128xf32>
      %97 = arith.subf %84, %96 : vector<256x128xf32>
      %cst_60 = arith.constant 9.99999974E-6 : f32
      %98 = vector.broadcast %cst_60 : f32 to vector<256x1xf32>
      %99 = arith.addf %95, %98 : vector<256x1xf32>
      %100 = math.rsqrt %99 : vector<256x1xf32>
      %101 = vector.broadcast %100 : vector<256x1xf32> to vector<256x128xf32>
      %102 = arith.mulf %97, %101 : vector<256x128xf32>
      %103 = vector.broadcast %78 : vector<1x128xf32> to vector<256x128xf32>
      %104 = arith.mulf %102, %103 : vector<256x128xf32>
      %105 = vector.broadcast %79 : vector<1x128xf32> to vector<256x128xf32>
      %106 = arith.addf %104, %105 : vector<256x128xf32>
      %cst_61 = arith.constant 0.000000e+00 : f32
      %107 = vector.broadcast %cst_61 : f32 to vector<256x128xf32>
      %108 = arith.cmpf ogt, %106, %107 : vector<256x128xf32>
      %cst_62 = arith.constant 0.00999999977 : f32
      %109 = vector.broadcast %cst_62 : f32 to vector<256x128xf32>
      %110 = arith.mulf %109, %106 : vector<256x128xf32>
      %111 = arith.select %108, %106, %110 : vector<256x128xi1>, vector<256x128xf32>
      %cst_63 = arith.constant dense<0.000000e+00> : vector<256x128xf32>
      %112 = tpu.matmul %111, %80, %cst_63 {dimension_numbers = #tpu.dot_dimension_numbers<[1], [0], [0], [1], [0, 0, 1, 1], [], []>} : vector<256x128xf32>, vector<128x128xf32>, vector<256x128xf32> -> vector<256x128xf32>
      %113 = vector.broadcast %81 : vector<1x128xf32> to vector<256x128xf32>
      %114 = arith.addf %112, %113 : vector<256x128xf32>
      %115 = vector.extract_strided_slice %114 {offsets = [0, 0], sizes = [128, 128], strides = [1, 1]} : vector<256x128xf32> to vector<128x128xf32>
      %116 = vector.extract_strided_slice %114 {offsets = [128, 0], sizes = [128, 128], strides = [1, 1]} : vector<256x128xf32> to vector<128x128xf32>
      %117 = arith.mulf %115, %115 : vector<128x128xf32>
      %cst_64 = arith.constant dense<0.000000e+00> : vector<128xf32>
      %118 = vector.multi_reduction <add>, %117, %cst_64 [1] : vector<128x128xf32> to vector<128xf32>
      %119 = vector.shape_cast %118 : vector<128xf32> to vector<128x1xf32>
      %120 = math.rsqrt %119 : vector<128x1xf32>
      %121 = vector.broadcast %120 : vector<128x1xf32> to vector<128x128xf32>
      %122 = arith.mulf %115, %121 : vector<128x128xf32>
      %c0_65 = arith.constant 0 : index
      %c0_66 = arith.constant 0 : index
      %123 = vector.load %arg15[%c0_65, %c0_66] : memref<128x128xf32, #tpu.memory_space<vmem>>, vector<128x128xf32>
      tpu.vector_store %arg15[%c0_65, %c0_66], %122 {strides = array<i32>} : memref<128x128xf32, #tpu.memory_space<vmem>>, vector<128x128xf32>,
      %124 = arith.mulf %116, %116 : vector<128x128xf32>
      %cst_67 = arith.constant dense<0.000000e+00> : vector<128xf32>
      %125 = vector.multi_reduction <add>, %124, %cst_67 [1] : vector<128x128xf32> to vector<128xf32>
      %126 = vector.shape_cast %125 : vector<128xf32> to vector<128x1xf32>
      %127 = math.rsqrt %126 : vector<128x1xf32>
      %128 = vector.broadcast %127 : vector<128x1xf32> to vector<128x128xf32>
      %129 = arith.mulf %116, %128 : vector<128x128xf32>
      %c0_68 = arith.constant 0 : index
      %c0_69 = arith.constant 0 : index
      %130 = vector.load %arg16[%c0_68, %c0_69] : memref<128x128xf32, #tpu.memory_space<vmem>>, vector<128x128xf32>
      tpu.vector_store %arg16[%c0_68, %c0_69], %129 {strides = array<i32>} : memref<128x128xf32, #tpu.memory_space<vmem>>, vector<128x128xf32>,
    } else {
    }
    %c0 = arith.constant 0 : index
    %c0_1 = arith.constant 0 : index
    %c0_2 = arith.constant 0 : index
    %3 = vector.load %arg2[%c0, %c0_1, %c0_2] : memref<2x128x128xf32, #tpu.memory_space<vmem>>, vector<2x128x128xf32>
    %4 = vector.shape_cast %3 : vector<2x128x128xf32> to vector<256x128xf32>
    %c0_3 = arith.constant 0 : index
    %c0_4 = arith.constant 0 : index
    %5 = vector.load %arg6[%c0_3, %c0_4] : memref<128x128xf32, #tpu.memory_space<vmem>>, vector<128x128xf32>
    %c0_5 = arith.constant 0 : index
    %c0_6 = arith.constant 0 : index
    %6 = vector.load %arg7[%c0_5, %c0_6] : memref<1x128xf32, #tpu.memory_space<vmem>>, vector<1x128xf32>
    %c0_7 = arith.constant 0 : index
    %c0_8 = arith.constant 0 : index
    %7 = vector.load %arg8[%c0_7, %c0_8] : memref<1x128xf32, #tpu.memory_space<vmem>>, vector<1x128xf32>
    %c0_9 = arith.constant 0 : index
    %c0_10 = arith.constant 0 : index
    %8 = vector.load %arg9[%c0_9, %c0_10] : memref<1x128xf32, #tpu.memory_space<vmem>>, vector<1x128xf32>
    %c0_11 = arith.constant 0 : index
    %c0_12 = arith.constant 0 : index
    %9 = vector.load %arg10[%c0_11, %c0_12] : memref<128x128xf32, #tpu.memory_space<vmem>>, vector<128x128xf32>
    %c0_13 = arith.constant 0 : index
    %c0_14 = arith.constant 0 : index
    %10 = vector.load %arg11[%c0_13, %c0_14] : memref<1x128xf32, #tpu.memory_space<vmem>>, vector<1x128xf32>
    %cst = arith.constant dense<0.000000e+00> : vector<256x128xf32>
    %11 = tpu.matmul %4, %5, %cst {dimension_numbers = #tpu.dot_dimension_numbers<[1], [0], [0], [1], [0, 0, 1, 1], [], []>} : vector<256x128xf32>, vector<128x128xf32>, vector<256x128xf32> -> vector<256x128xf32>
    %12 = vector.broadcast %6 : vector<1x128xf32> to vector<256x128xf32>
    %13 = arith.addf %11, %12 : vector<256x128xf32>
    %cst_15 = arith.constant dense<0.000000e+00> : vector<256xf32>
    %14 = vector.multi_reduction <add>, %13, %cst_15 [1] : vector<256x128xf32> to vector<256xf32>
    %15 = vector.shape_cast %14 : vector<256xf32> to vector<256x1xf32>
    %16 = arith.mulf %13, %13 : vector<256x128xf32>
    %cst_16 = arith.constant dense<0.000000e+00> : vector<256xf32>
    %17 = vector.multi_reduction <add>, %16, %cst_16 [1] : vector<256x128xf32> to vector<256xf32>
    %18 = vector.shape_cast %17 : vector<256xf32> to vector<256x1xf32>
    %cst_17 = arith.constant 7.812500e-03 : f32
    %19 = vector.broadcast %cst_17 : f32 to vector<256x1xf32>
    %20 = arith.mulf %15, %19 : vector<256x1xf32>
    %cst_18 = arith.constant 7.812500e-03 : f32
    %21 = vector.broadcast %cst_18 : f32 to vector<256x1xf32>
    %22 = arith.mulf %18, %21 : vector<256x1xf32>
    %23 = arith.mulf %20, %20 : vector<256x1xf32>
    %24 = arith.subf %22, %23 : vector<256x1xf32>
    %25 = vector.broadcast %20 : vector<256x1xf32> to vector<256x128xf32>
    %26 = arith.subf %13, %25 : vector<256x128xf32>
    %cst_19 = arith.constant 9.99999974E-6 : f32
    %27 = vector.broadcast %cst_19 : f32 to vector<256x1xf32>
    %28 = arith.addf %24, %27 : vector<256x1xf32>
    %29 = math.rsqrt %28 : vector<256x1xf32>
    %30 = vector.broadcast %29 : vector<256x1xf32> to vector<256x128xf32>
    %31 = arith.mulf %26, %30 : vector<256x128xf32>
    %32 = vector.broadcast %7 : vector<1x128xf32> to vector<256x128xf32>
    %33 = arith.mulf %31, %32 : vector<256x128xf32>
    %34 = vector.broadcast %8 : vector<1x128xf32> to vector<256x128xf32>
    %35 = arith.addf %33, %34 : vector<256x128xf32>
    %cst_20 = arith.constant 0.000000e+00 : f32
    %36 = vector.broadcast %cst_20 : f32 to vector<256x128xf32>
    %37 = arith.cmpf ogt, %35, %36 : vector<256x128xf32>
    %cst_21 = arith.constant 0.00999999977 : f32
    %38 = vector.broadcast %cst_21 : f32 to vector<256x128xf32>
    %39 = arith.mulf %38, %35 : vector<256x128xf32>
    %40 = arith.select %37, %35, %39 : vector<256x128xi1>, vector<256x128xf32>
    %cst_22 = arith.constant dense<0.000000e+00> : vector<256x128xf32>
    %41 = tpu.matmul %40, %9, %cst_22 {dimension_numbers = #tpu.dot_dimension_numbers<[1], [0], [0], [1], [0, 0, 1, 1], [], []>} : vector<256x128xf32>, vector<128x128xf32>, vector<256x128xf32> -> vector<256x128xf32>
    %42 = vector.broadcast %10 : vector<1x128xf32> to vector<256x128xf32>
    %43 = arith.addf %41, %42 : vector<256x128xf32>
    %44 = vector.shape_cast %43 : vector<256x128xf32> to vector<2x128x128xf32>
    %c0_23 = arith.constant 0 : index
    %c0_24 = arith.constant 0 : index
    %45 = vector.load %arg15[%c0_23, %c0_24] : memref<128x128xf32, #tpu.memory_space<vmem>>, vector<128x128xf32>
    %46 = vector.shape_cast %45 : vector<128x128xf32> to vector<1x128x128xf32>
    %47 = vector.broadcast %46 : vector<1x128x128xf32> to vector<2x128x128xf32>
    %48 = arith.mulf %44, %47 : vector<2x128x128xf32>
    %cst_25 = arith.constant dense<0.000000e+00> : vector<2x128xf32>
    %49 = vector.multi_reduction <add>, %48, %cst_25 [2] : vector<2x128x128xf32> to vector<2x128xf32>
    %c0_26 = arith.constant 0 : index
    %c0_27 = arith.constant 0 : index
    %50 = vector.load %arg16[%c0_26, %c0_27] : memref<128x128xf32, #tpu.memory_space<vmem>>, vector<128x128xf32>
    %51 = vector.shape_cast %50 : vector<128x128xf32> to vector<1x128x128xf32>
    %52 = vector.broadcast %51 : vector<1x128x128xf32> to vector<2x128x128xf32>
    %53 = arith.mulf %44, %52 : vector<2x128x128xf32>
    %cst_28 = arith.constant dense<0.000000e+00> : vector<2x128xf32>
    %54 = vector.multi_reduction <add>, %53, %cst_28 [2] : vector<2x128x128xf32> to vector<2x128xf32>
    %55 = arith.mulf %44, %44 : vector<2x128x128xf32>
    %cst_29 = arith.constant dense<0.000000e+00> : vector<2x128xf32>
    %56 = vector.multi_reduction <add>, %55, %cst_29 [2] : vector<2x128x128xf32> to vector<2x128xf32>
    %57 = math.rsqrt %56 : vector<2x128xf32>
    %58 = arith.mulf %49, %57 : vector<2x128xf32>
    %59 = arith.mulf %54, %57 : vector<2x128xf32>
    %60 = arith.cmpf ogt, %58, %59 : vector<2x128xf32>
    %61 = arith.extui %60 : vector<2x128xi1> to vector<2x128xi32>
    %62 = arith.sitofp %61 : vector<2x128xi32> to vector<2x128xf32>
    %c0_30 = arith.constant 0 : index
    %c0_31 = arith.constant 0 : index
    %63 = vector.load %arg12[%c0_30, %c0_31] : memref<2x128xf32, #tpu.memory_space<vmem>>, vector<2x128xf32>
    tpu.vector_store %arg12[%c0_30, %c0_31], %62 {strides = array<i32>} : memref<2x128xf32, #tpu.memory_space<vmem>>, vector<2x128xf32>,
    %c0_32 = arith.constant 0 : index
    %c0_33 = arith.constant 0 : index
    %64 = vector.load %arg13[%c0_32, %c0_33] : memref<2x128xf32, #tpu.memory_space<vmem>>, vector<2x128xf32>
    tpu.vector_store %arg13[%c0_32, %c0_33], %58 {strides = array<i32>} : memref<2x128xf32, #tpu.memory_space<vmem>>, vector<2x128xf32>,
    %c0_34 = arith.constant 0 : index
    %c0_35 = arith.constant 0 : index
    %65 = vector.load %arg14[%c0_34, %c0_35] : memref<2x128xf32, #tpu.memory_space<vmem>>, vector<2x128xf32>
    tpu.vector_store %arg14[%c0_34, %c0_35], %59 {strides = array<i32>} : memref<2x128xf32, #tpu.memory_space<vmem>>, vector<2x128xf32>,
    return
  }
  func.func @transform_0(%arg0: i32, %arg1: i32) -> (i32, i32, i32) {
    %c0_i32 = arith.constant 0 : i32
    %c0_i32_0 = arith.constant 0 : i32
    return %arg1, %arg0, %c0_i32 : i32, i32, i32
  }
  func.func @transform_1(%arg0: i32, %arg1: i32) -> (i32, i32) {
    %c0_i32 = arith.constant 0 : i32
    %c0_i32_0 = arith.constant 0 : i32
    return %arg0, %c0_i32 : i32, i32
  }
  func.func @transform_2(%arg0: i32, %arg1: i32) -> (i32, i32) {
    %c0_i32 = arith.constant 0 : i32
    %c0_i32_0 = arith.constant 0 : i32
    %c0_i32_1 = arith.constant 0 : i32
    return %c0_i32, %c0_i32_0 : i32, i32
  }
  func.func @transform_3(%arg0: i32, %arg1: i32) -> (i32, i32) {
    %c0_i32 = arith.constant 0 : i32
    %c0_i32_0 = arith.constant 0 : i32
    %c0_i32_1 = arith.constant 0 : i32
    return %c0_i32, %c0_i32_0 : i32, i32
  }
  func.func @transform_4(%arg0: i32, %arg1: i32) -> (i32, i32) {
    %c0_i32 = arith.constant 0 : i32
    %c0_i32_0 = arith.constant 0 : i32
    %c0_i32_1 = arith.constant 0 : i32
    return %c0_i32, %c0_i32_0 : i32, i32
  }
  func.func @transform_5(%arg0: i32, %arg1: i32) -> (i32, i32) {
    %c0_i32 = arith.constant 0 : i32
    %c0_i32_0 = arith.constant 0 : i32
    %c0_i32_1 = arith.constant 0 : i32
    return %c0_i32, %c0_i32_0 : i32, i32
  }
  func.func @transform_6(%arg0: i32, %arg1: i32) -> (i32, i32) {
    %c0_i32 = arith.constant 0 : i32
    %c0_i32_0 = arith.constant 0 : i32
    %c0_i32_1 = arith.constant 0 : i32
    return %c0_i32, %c0_i32_0 : i32, i32
  }
  func.func @transform_7(%arg0: i32, %arg1: i32) -> (i32, i32) {
    %c0_i32 = arith.constant 0 : i32
    %c0_i32_0 = arith.constant 0 : i32
    %c0_i32_1 = arith.constant 0 : i32
    return %c0_i32, %c0_i32_0 : i32, i32
  }
  func.func @transform_8(%arg0: i32, %arg1: i32) -> (i32, i32) {
    %c0_i32 = arith.constant 0 : i32
    %c0_i32_0 = arith.constant 0 : i32
    %c0_i32_1 = arith.constant 0 : i32
    return %c0_i32, %c0_i32_0 : i32, i32
  }
  func.func @transform_9(%arg0: i32, %arg1: i32) -> (i32, i32) {
    %c0_i32 = arith.constant 0 : i32
    %c0_i32_0 = arith.constant 0 : i32
    %c0_i32_1 = arith.constant 0 : i32
    return %c0_i32, %c0_i32_0 : i32, i32
  }
  func.func @transform_10(%arg0: i32, %arg1: i32) -> (i32, i32) {
    %c0_i32 = arith.constant 0 : i32
    return %arg1, %arg0 : i32, i32
  }
  func.func @transform_11(%arg0: i32, %arg1: i32) -> (i32, i32) {
    %c0_i32 = arith.constant 0 : i32
    return %arg1, %arg0 : i32, i32
  }
  func.func @transform_12(%arg0: i32, %arg1: i32) -> (i32, i32) {
    %c0_i32 = arith.constant 0 : i32
    return %arg1, %arg0 : i32, i32
  }
}

</mosaic_0001>

<llo_original>
// kernel: embedding_model_forward.1
$region0: #{embedding_model_forward.1}
  #allocation0 [shape = 'u32[]', space=smem, size = 0x4, offset = 0x4, fixed_abs, tag = 'smem constant byte address 0x4 - core index']
  #allocation1 [shape = 'u32[144,128]{1,0:T(1,128)}', space=vmem, size = 0x12000, scoped, tag = 'internal scratch']
  #allocation2 [shape = 'f32[128,128]{1,0:T(8,128)}', space=vmem, size = 0x10000, scoped, tag = 'scratch operand']
  #allocation3 [shape = 'f32[128,128]{1,0:T(8,128)}', space=vmem, size = 0x10000, scoped, tag = 'scratch operand']
  %s0 = inlined_call_operand.vmem [shape: f32[2,128,128], index: 0, kind: input, shape index: {}]
  %s1 = inlined_call_operand.vmem [shape: f32[128,128], index: 1, kind: input, shape index: {}]
  %s2 = inlined_call_operand.hbm [shape: f32[1,128], index: 2, kind: input, shape index: {}]
  %s3 = inlined_call_operand.hbm [shape: f32[1,128], index: 3, kind: input, shape index: {}]
  %s4 = inlined_call_operand.hbm [shape: f32[128,128], index: 4, kind: input, shape index: {}]
  %s5 = inlined_call_operand.hbm [shape: f32[1,128], index: 5, kind: input, shape index: {}]
  %s6 = inlined_call_operand.hbm [shape: f32[1,128], index: 6, kind: input, shape index: {}]
  %s7 = inlined_call_operand.hbm [shape: f32[1,128], index: 7, kind: input, shape index: {}]
  %s8 = inlined_call_operand.hbm [shape: f32[128,128], index: 8, kind: input, shape index: {}]
  %s9 = inlined_call_operand.hbm [shape: f32[1,128], index: 9, kind: input, shape index: {}]
  %s10 = inlined_call_operand.hbm [shape: f32[2,128], index: 10, kind: output, shape index: {0}]
  %s11 = inlined_call_operand.hbm [shape: f32[2,128], index: 11, kind: output, shape index: {1}]
  %s12 = inlined_call_operand.hbm [shape: f32[2,128], index: 12, kind: output, shape index: {2}]
  %13 = xla_tuple %s10, %s11, %s12
  %s14 = sld [smem:[#allocation0]]
  $region102: #{embedding_model_forward.1} parent=0
    _
  %s16 = ssub.s32 1, %s14
  %s17 = scalar_select 0, %s16, %s14
  $region1: #{embedding_model_forward.1} parent=0
    #allocation4 [shape = 'u8[512]{0}', space=vmem, size = 0x400, scoped, tag = 'input window, operand 2, single buffered']
    #allocation5 [shape = 's32[1]{0}', space=sflag, size = 0x4, scoped, tag = 'scoped memory for embedding_model_forward.1']
    #allocation6 [shape = 's32[1]{0}', space=sflag, size = 0x4, scoped, tag = 'scoped memory for embedding_model_forward.1']
    #allocation7 [shape = 'u8[512]{0}', space=vmem, size = 0x400, scoped, tag = 'input window, operand 3, single buffered']
    #allocation8 [shape = 's32[1]{0}', space=sflag, size = 0x4, scoped, tag = 'scoped memory for embedding_model_forward.1']
    #allocation9 [shape = 'u8[65536]{0}', space=vmem, size = 0x10000, scoped, tag = 'input window, operand 4, single buffered']
    #allocation10 [shape = 'u8[512]{0}', space=vmem, size = 0x400, scoped, tag = 'input window, operand 5, single buffered']
    #allocation11 [shape = 's32[1]{0}', space=sflag, size = 0x4, scoped, tag = 'scoped memory for embedding_model_forward.1']
    #allocation12 [shape = 'u8[512]{0}', space=vmem, size = 0x400, scoped, tag = 'input window, operand 6, single buffered']
    #allocation13 [shape = 'u8[512]{0}', space=vmem, size = 0x400, scoped, tag = 'input window, operand 7, single buffered']
    #allocation14 [shape = 's32[1]{0}', space=sflag, size = 0x4, scoped, tag = 'scoped memory for embedding_model_forward.1']
    #allocation15 [shape = 'u8[65536]{0}', space=vmem, size = 0x10000, scoped, tag = 'input window, operand 8, single buffered']
    #allocation16 [shape = 'u8[512]{0}', space=vmem, size = 0x400, scoped, tag = 'input window, operand 9, single buffered']
    #allocation17 [shape = 's32[1]{0}', space=sflag, size = 0x4, scoped, tag = 'scoped memory for embedding_model_forward.1']
    #allocation18 [shape = 'u8[1024]{0}', space=vmem, size = 0x400, scoped, tag = 'output window, operand 0, single buffered']
    #allocation19 [shape = 'u8[1024]{0}', space=vmem, size = 0x400, scoped, tag = 'output window, operand 1, single buffered']
    #allocation20 [shape = 's32[1]{0}', space=sflag, size = 0x4, scoped, tag = 'scoped memory for embedding_model_forward.1']
    #allocation21 [shape = 'u8[1024]{0}', space=vmem, size = 0x400, scoped, tag = 'output window, operand 2, single buffered']
    %18 = vsyncpa [#allocation5], 0
    %19 = vsyncpa [#allocation8], 0
    %20 = vsyncpa [#allocation11], 0
    %21 = vsyncpa [#allocation14], 0
    %22 = vsyncpa [#allocation17], 0
    %23 = vsyncpa [#allocation6], 0
    %24 = vsyncpa [#allocation20], 0
    // Predicated region
    $region2: #{embedding_model_forward.1} parent=1 // pred_check
      _
    $region3: #{embedding_model_forward.1} parent=1 // pred_check_branch
      %26 = sbr.rel (0) target = $region5
    $region4: #{embedding_model_forward.1} parent=1 // pred_region
      _
    $region5: #{embedding_model_forward.1} parent=1 // pred_fallthru
      _
    // Predicated region
    $region6: #{embedding_model_forward.1} parent=1 // pred_check
      _
    $region7: #{embedding_model_forward.1} parent=1 // pred_check_branch
      %28 = sbr.rel (0) target = $region9
    $region8: #{embedding_model_forward.1} parent=1 // pred_region
      _
    $region9: #{embedding_model_forward.1} parent=1 // pred_fallthru
      _
    // Predicated region
    $region10: #{embedding_model_forward.1} parent=1 // pred_check
      _
    $region11: #{embedding_model_forward.1} parent=1 // pred_check_branch
      %30 = sbr.rel (0) target = $region13
    $region12: #{embedding_model_forward.1} parent=1 // pred_region
      %s32 = ssub.s32 16, 16
      %33 = vsyncadd [#allocation5], %s32
      %s35 = sshll.u32 [#allocation4], 4
      %s36 = int_to_ptr.vmem [resolvable:$true] %s35
      %38 = dma.hbm_to_vmem [thread:$0]  %s2, 16, %s36, [#allocation5]
    $region13: #{embedding_model_forward.1} parent=1 // pred_fallthru
      _
    // Predicated region
    $region14: #{embedding_model_forward.1} parent=1 // pred_check
      _
    $region15: #{embedding_model_forward.1} parent=1 // pred_check_branch
      %40 = sbr.rel (0) target = $region17
    $region16: #{embedding_model_forward.1} parent=1 // pred_region
      %s42 = ssub.s32 16, 16
      %43 = vsyncadd [#allocation8], %s42
      %s45 = sshll.u32 [#allocation7], 4
      %s46 = int_to_ptr.vmem [resolvable:$true] %s45
      %48 = dma.hbm_to_vmem [thread:$0]  %s3, 16, %s46, [#allocation8]
    $region17: #{embedding_model_forward.1} parent=1 // pred_fallthru
      _
    // Predicated region
    $region18: #{embedding_model_forward.1} parent=1 // pred_check
      _
    $region19: #{embedding_model_forward.1} parent=1 // pred_check_branch
      %50 = sbr.rel (0) target = $region21
    $region20: #{embedding_model_forward.1} parent=1 // pred_region
      %s52 = ssub.s32 2048, 2048
      %53 = vsyncadd [#allocation8], %s52
      %s54 = sshll.u32 [#allocation9], 4
      %s55 = int_to_ptr.vmem [resolvable:$true] %s54
      %60 = dma.hbm_to_vmem [thread:$0]  %s4, 2048, %s55, [#allocation8], 128, 128, 8
    $region21: #{embedding_model_forward.1} parent=1 // pred_fallthru
      _
    // Predicated region
    $region22: #{embedding_model_forward.1} parent=1 // pred_check
      _
    $region23: #{embedding_model_forward.1} parent=1 // pred_check_branch
      %62 = sbr.rel (0) target = $region25
    $region24: #{embedding_model_forward.1} parent=1 // pred_region
      %s64 = ssub.s32 16, 16
      %65 = vsyncadd [#allocation11], %s64
      %s67 = sshll.u32 [#allocation10], 4
      %s68 = int_to_ptr.vmem [resolvable:$true] %s67
      %70 = dma.hbm_to_vmem [thread:$0]  %s5, 16, %s68, [#allocation11]
    $region25: #{embedding_model_forward.1} parent=1 // pred_fallthru
      _
    // Predicated region
    $region26: #{embedding_model_forward.1} parent=1 // pred_check
      _
    $region27: #{embedding_model_forward.1} parent=1 // pred_check_branch
      %72 = sbr.rel (0) target = $region29
    $region28: #{embedding_model_forward.1} parent=1 // pred_region
      %s74 = ssub.s32 16, 16
      %75 = vsyncadd [#allocation11], %s74
      %s77 = sshll.u32 [#allocation12], 4
      %s78 = int_to_ptr.vmem [resolvable:$true] %s77
      %80 = dma.hbm_to_vmem [thread:$0]  %s6, 16, %s78, [#allocation11]
    $region29: #{embedding_model_forward.1} parent=1 // pred_fallthru
      _
    // Predicated region
    $region30: #{embedding_model_forward.1} parent=1 // pred_check
      _
    $region31: #{embedding_model_forward.1} parent=1 // pred_check_branch
      %82 = sbr.rel (0) target = $region33
    $region32: #{embedding_model_forward.1} parent=1 // pred_region
      %s84 = ssub.s32 16, 16
      %85 = vsyncadd [#allocation14], %s84
      %s87 = sshll.u32 [#allocation13], 4
      %s88 = int_to_ptr.vmem [resolvable:$true] %s87
      %90 = dma.hbm_to_vmem [thread:$0]  %s7, 16, %s88, [#allocation14]
    $region33: #{embedding_model_forward.1} parent=1 // pred_fallthru
      _
    // Predicated region
    $region34: #{embedding_model_forward.1} parent=1 // pred_check
      _
    $region35: #{embedding_model_forward.1} parent=1 // pred_check_branch
      %92 = sbr.rel (0) target = $region37
    $region36: #{embedding_model_forward.1} parent=1 // pred_region
      %s94 = ssub.s32 2048, 2048
      %95 = vsyncadd [#allocation14], %s94
      %s96 = sshll.u32 [#allocation15], 4
      %s97 = int_to_ptr.vmem [resolvable:$true] %s96
      %102 = dma.hbm_to_vmem [thread:$0]  %s8, 2048, %s97, [#allocation14], 128, 128, 8
    $region37: #{embedding_model_forward.1} parent=1 // pred_fallthru
      _
    // Predicated region
    $region38: #{embedding_model_forward.1} parent=1 // pred_check
      _
    $region39: #{embedding_model_forward.1} parent=1 // pred_check_branch
      %104 = sbr.rel (0) target = $region41
    $region40: #{embedding_model_forward.1} parent=1 // pred_region
      %s106 = ssub.s32 16, 16
      %107 = vsyncadd [#allocation17], %s106
      %s109 = sshll.u32 [#allocation16], 4
      %s110 = int_to_ptr.vmem [resolvable:$true] %s109
      %112 = dma.hbm_to_vmem [thread:$0]  %s9, 16, %s110, [#allocation17]
    $region41: #{embedding_model_forward.1} parent=1 // pred_fallthru
      _
    // Predicated region
    $region42: #{embedding_model_forward.1} parent=1 // pred_check
      _
    $region43: #{embedding_model_forward.1} parent=1 // pred_check_branch
      %114 = sbr.rel (0) target = $region45
    $region44: #{embedding_model_forward.1} parent=1 // pred_region
      %115 = dma.done [#allocation5], 16
    $region45: #{embedding_model_forward.1} parent=1 // pred_fallthru
      _
    // Predicated region
    $region46: #{embedding_model_forward.1} parent=1 // pred_check
      _
    $region47: #{embedding_model_forward.1} parent=1 // pred_check_branch
      %117 = sbr.rel (0) target = $region49
    $region48: #{embedding_model_forward.1} parent=1 // pred_region
      %118 = dma.done [#allocation8], 16
    $region49: #{embedding_model_forward.1} parent=1 // pred_fallthru
      _
    // Predicated region
    $region50: #{embedding_model_forward.1} parent=1 // pred_check
      _
    $region51: #{embedding_model_forward.1} parent=1 // pred_check_branch
      %120 = sbr.rel (0) target = $region53
    $region52: #{embedding_model_forward.1} parent=1 // pred_region
      %121 = dma.done [#allocation8], 2048
    $region53: #{embedding_model_forward.1} parent=1 // pred_fallthru
      _
    // Predicated region
    $region54: #{embedding_model_forward.1} parent=1 // pred_check
      _
    $region55: #{embedding_model_forward.1} parent=1 // pred_check_branch
      %123 = sbr.rel (0) target = $region57
    $region56: #{embedding_model_forward.1} parent=1 // pred_region
      %124 = dma.done [#allocation11], 16
    $region57: #{embedding_model_forward.1} parent=1 // pred_fallthru
      _
    // Predicated region
    $region58: #{embedding_model_forward.1} parent=1 // pred_check
      _
    $region59: #{embedding_model_forward.1} parent=1 // pred_check_branch
      %126 = sbr.rel (0) target = $region61
    $region60: #{embedding_model_forward.1} parent=1 // pred_region
      %127 = dma.done [#allocation11], 16
    $region61: #{embedding_model_forward.1} parent=1 // pred_fallthru
      _
    // Predicated region
    $region62: #{embedding_model_forward.1} parent=1 // pred_check
      _
    $region63: #{embedding_model_forward.1} parent=1 // pred_check_branch
      %129 = sbr.rel (0) target = $region65
    $region64: #{embedding_model_forward.1} parent=1 // pred_region
      %130 = dma.done [#allocation14], 16
    $region65: #{embedding_model_forward.1} parent=1 // pred_fallthru
      _
    // Predicated region
    $region66: #{embedding_model_forward.1} parent=1 // pred_check
      _
    $region67: #{embedding_model_forward.1} parent=1 // pred_check_branch
      %132 = sbr.rel (0) target = $region69
    $region68: #{embedding_model_forward.1} parent=1 // pred_region
      %133 = dma.done [#allocation14], 2048
    $region69: #{embedding_model_forward.1} parent=1 // pred_fallthru
      _
    // Predicated region
    $region70: #{embedding_model_forward.1} parent=1 // pred_check
      _
    $region71: #{embedding_model_forward.1} parent=1 // pred_check_branch
      %135 = sbr.rel (0) target = $region73
    $region72: #{embedding_model_forward.1} parent=1 // pred_region
      %136 = dma.done [#allocation17], 16
    $region73: #{embedding_model_forward.1} parent=1 // pred_fallthru
      _
    %p137 = scmp.eq.s32.totalorder 0, 0
    // Predicated region
    $region74: #{embedding_model_forward.1} parent=1 // pred_check
      %p138 = pneg %p137
    $region75: #{embedding_model_forward.1} parent=1 // pred_check_branch
      %140 = sbr.rel (%p138) target = $region77
    $region76: #{embedding_model_forward.1} parent=1 // pred_region
      %v141 = vld [vmem:[%s1] sm:$0xff]
      %v142 = vld [vmem:[%s1 + $0x8] sm:$0xff]
      %v143 = vld [vmem:[%s1 + $0x10] sm:$0xff]
      %v144 = vld [vmem:[%s1 + $0x18] sm:$0xff]
      %v145 = vld [vmem:[%s1 + $0x20] sm:$0xff]
      %v146 = vld [vmem:[%s1 + $0x28] sm:$0xff]
      %v147 = vld [vmem:[%s1 + $0x30] sm:$0xff]
      %v148 = vld [vmem:[%s1 + $0x38] sm:$0xff]
      %v149 = vld [vmem:[%s1 + $0x40] sm:$0xff]
      %v150 = vld [vmem:[%s1 + $0x48] sm:$0xff]
      %v151 = vld [vmem:[%s1 + $0x50] sm:$0xff]
      %v152 = vld [vmem:[%s1 + $0x58] sm:$0xff]
      %v153 = vld [vmem:[%s1 + $0x60] sm:$0xff]
      %v154 = vld [vmem:[%s1 + $0x68] sm:$0xff]
      %v155 = vld [vmem:[%s1 + $0x70] sm:$0xff]
      %v156 = vld [vmem:[%s1 + $0x78] sm:$0xff]
      %v157 = vmul.f32 %v141, 2.0
      %v158 = vmul.f32 %v142, 2.0
      %v159 = vmul.f32 %v143, 2.0
      %v160 = vmul.f32 %v144, 2.0
      %v161 = vmul.f32 %v145, 2.0
      %v162 = vmul.f32 %v146, 2.0
      %v163 = vmul.f32 %v147, 2.0
      %v164 = vmul.f32 %v148, 2.0
      %v165 = vmul.f32 %v149, 2.0
      %v166 = vmul.f32 %v150, 2.0
      %v167 = vmul.f32 %v151, 2.0
      %v168 = vmul.f32 %v152, 2.0
      %v169 = vmul.f32 %v153, 2.0
      %v170 = vmul.f32 %v154, 2.0
      %v171 = vmul.f32 %v155, 2.0
      %v172 = vmul.f32 %v156, 2.0
      %v173 = vld [vmem:[#allocation4] sm:$0x1]
      %v175 = vlaneseq
      %v176 = vshrl.u32 %v175, 7
      %v177 = vsub.s32 0, %v176
      %v178 = vrot.slane %v173, %v177
      %v180 = vadd.f32 %v178, %v157
      %v181 = vadd.f32 %v178, %v158
      %v182 = vadd.f32 %v178, %v159
      %v183 = vadd.f32 %v178, %v160
      %v184 = vadd.f32 %v178, %v161
      %v185 = vadd.f32 %v178, %v162
      %v186 = vadd.f32 %v178, %v163
      %v187 = vadd.f32 %v178, %v164
      %v188 = vadd.f32 %v178, %v165
      %v189 = vadd.f32 %v178, %v166
      %v190 = vadd.f32 %v178, %v167
      %v191 = vadd.f32 %v178, %v168
      %v192 = vadd.f32 %v178, %v169
      %v193 = vadd.f32 %v178, %v170
      %v194 = vadd.f32 %v178, %v171
      %v195 = vadd.f32 %v178, %v172
      %v196 = vld [vmem:[#allocation7] sm:$0x1]
      %v198 = vlaneseq
      %v199 = vshrl.u32 %v198, 7
      %v200 = vsub.s32 0, %v199
      %v201 = vrot.slane %v196, %v200
      %v203 = vadd.f32 %v201, %v157
      %v204 = vadd.f32 %v201, %v158
      %v205 = vadd.f32 %v201, %v159
      %v206 = vadd.f32 %v201, %v160
      %v207 = vadd.f32 %v201, %v161
      %v208 = vadd.f32 %v201, %v162
      %v209 = vadd.f32 %v201, %v163
      %v210 = vadd.f32 %v201, %v164
      %v211 = vadd.f32 %v201, %v165
      %v212 = vadd.f32 %v201, %v166
      %v213 = vadd.f32 %v201, %v167
      %v214 = vadd.f32 %v201, %v168
      %v215 = vadd.f32 %v201, %v169
      %v216 = vadd.f32 %v201, %v170
      %v217 = vadd.f32 %v201, %v171
      %v218 = vadd.f32 %v201, %v172
      %v219 = vld [vmem:[#allocation9] sm:$0xff]
      %v220 = vld [vmem:[#allocation9 + $0x8] sm:$0xff]
      %v221 = vld [vmem:[#allocation9 + $0x10] sm:$0xff]
      %v222 = vld [vmem:[#allocation9 + $0x18] sm:$0xff]
      %v223 = vld [vmem:[#allocation9 + $0x20] sm:$0xff]
      %v224 = vld [vmem:[#allocation9 + $0x28] sm:$0xff]
      %v225 = vld [vmem:[#allocation9 + $0x30] sm:$0xff]
      %v226 = vld [vmem:[#allocation9 + $0x38] sm:$0xff]
      %v227 = vld [vmem:[#allocation9 + $0x40] sm:$0xff]
      %v228 = vld [vmem:[#allocation9 + $0x48] sm:$0xff]
      %v229 = vld [vmem:[#allocation9 + $0x50] sm:$0xff]
      %v230 = vld [vmem:[#allocation9 + $0x58] sm:$0xff]
      %v231 = vld [vmem:[#allocation9 + $0x60] sm:$0xff]
      %v232 = vld [vmem:[#allocation9 + $0x68] sm:$0xff]
      %v233 = vld [vmem:[#allocation9 + $0x70] sm:$0xff]
      %v234 = vld [vmem:[#allocation9 + $0x78] sm:$0xff]
      %v235 = vld [vmem:[#allocation10] sm:$0x1]
      %v236 = vld [vmem:[#allocation12] sm:$0x1]
      %v237 = vld [vmem:[#allocation13] sm:$0x1]
      %v238 = vld [vmem:[#allocation15] sm:$0xff]
      %v239 = vld [vmem:[#allocation15 + $0x8] sm:$0xff]
      %v240 = vld [vmem:[#allocation15 + $0x10] sm:$0xff]
      %v241 = vld [vmem:[#allocation15 + $0x18] sm:$0xff]
      %v242 = vld [vmem:[#allocation15 + $0x20] sm:$0xff]
      %v243 = vld [vmem:[#allocation15 + $0x28] sm:$0xff]
      %v244 = vld [vmem:[#allocation15 + $0x30] sm:$0xff]
      %v245 = vld [vmem:[#allocation15 + $0x38] sm:$0xff]
      %v246 = vld [vmem:[#allocation15 + $0x40] sm:$0xff]
      %v247 = vld [vmem:[#allocation15 + $0x48] sm:$0xff]
      %v248 = vld [vmem:[#allocation15 + $0x50] sm:$0xff]
      %v249 = vld [vmem:[#allocation15 + $0x58] sm:$0xff]
      %v250 = vld [vmem:[#allocation15 + $0x60] sm:$0xff]
      %v251 = vld [vmem:[#allocation15 + $0x68] sm:$0xff]
      %v252 = vld [vmem:[#allocation15 + $0x70] sm:$0xff]
      %v253 = vld [vmem:[#allocation15 + $0x78] sm:$0xff]
      %v254 = vld [vmem:[#allocation16] sm:$0x1]
      %v256 = vlaneseq
      %v257 = vshrl.u32 %v256, 7
      %v258 = vsub.s32 0, %v257
      %v259 = vrot.slane %v235, %v258
      %261 = vmatprep.subr.mxu0 0.0
      %262 = vmatpush1.msra.mxu0 %v219
      %263 = vmatprep.subr.mxu0 0.0
      %264 = vmatpush1.msra.mxu0 %v220
      %265 = vmatprep.subr.mxu0 0.0
      %266 = vmatpush1.msra.mxu0 %v221
      %267 = vmatprep.subr.mxu0 0.0
      %268 = vmatpush1.msra.mxu0 %v222
      %269 = vmatprep.subr.mxu0 0.0
      %270 = vmatpush1.msra.mxu0 %v223
      %271 = vmatprep.subr.mxu0 0.0
      %272 = vmatpush1.msra.mxu0 %v224
      %273 = vmatprep.subr.mxu0 0.0
      %274 = vmatpush1.msra.mxu0 %v225
      %275 = vmatprep.subr.mxu0 0.0
      %276 = vmatpush1.msra.mxu0 %v226
      %277 = vmatprep.subr.mxu0 0.0
      %278 = vmatpush1.msra.mxu0 %v227
      %279 = vmatprep.subr.mxu0 0.0
      %280 = vmatpush1.msra.mxu0 %v228
      %281 = vmatprep.subr.mxu0 0.0
      %282 = vmatpush1.msra.mxu0 %v229
      %283 = vmatprep.subr.mxu0 0.0
      %284 = vmatpush1.msra.mxu0 %v230
      %285 = vmatprep.subr.mxu0 0.0
      %286 = vmatpush1.msra.mxu0 %v231
      %287 = vmatprep.subr.mxu0 0.0
      %288 = vmatpush1.msra.mxu0 %v232
      %289 = vmatprep.subr.mxu0 0.0
      %290 = vmatpush1.msra.mxu0 %v233
      %291 = vmatprep.subr.mxu0 0.0
      %292 = vmatpush1.msra.mxu0 %v234
      %293 = vmatprep.subr.mxu0 0.0
      %294 = vmatpush1.msra.mxu0 0.0
      %295 = vmatprep.subr.mxu0 0.0
      %296 = vmatpush1.msra.mxu0 0.0
      %297 = vmatprep.subr.mxu0 0.0
      %298 = vmatpush1.msra.mxu0 0.0
      %299 = vmatprep.subr.mxu0 0.0
      %300 = vmatpush1.msra.mxu0 0.0
      %301 = vmatprep.subr.mxu0 0.0
      %302 = vmatpush1.msra.mxu0 0.0
      %303 = vmatprep.subr.mxu0 0.0
      %304 = vmatpush1.msra.mxu0 0.0
      %305 = vmatprep.subr.mxu0 0.0
      %306 = vmatpush1.msra.mxu0 0.0
      %307 = vmatprep.subr.mxu0 0.0
      %308 = vmatpush1.msra.mxu0 0.0
      %309 = vmatprep.subr.mxu0 0.0
      %310 = vmatpush1.msra.mxu0 0.0
      %311 = vmatprep.subr.mxu0 0.0
      %312 = vmatpush1.msra.mxu0 0.0
      %313 = vmatprep.subr.mxu0 0.0
      %314 = vmatpush1.msra.mxu0 0.0
      %315 = vmatprep.subr.mxu0 0.0
      %316 = vmatpush1.msra.mxu0 0.0
      %317 = vmatprep.subr.mxu0 0.0
      %318 = vmatpush1.msra.mxu0 0.0
      %319 = vmatprep.subr.mxu0 0.0
      %320 = vmatpush1.msra.mxu0 0.0
      %321 = vmatprep.subr.mxu0 0.0
      %322 = vmatpush1.msra.mxu0 0.0
      %323 = vmatprep.subr.mxu0 0.0
      %324 = vmatpush1.msra.mxu0 0.0
      %325 = vmatprep.mubr.f32.mxu0 0.0
      %326 = vmatmul.mubr.f32.gmra.mrb[0].mxu0 %v180
      %v327 = vpop.f32.mrb[0].mxu0
      %v328 = vadd.f32 %v259, %v327
      %v329 = vpop.f32.mrb[0].mxu0
      %330 = vmatprep.mubr.f32.mxu0 0.0
      %331 = vmatmul.mubr.f32.gmra.mrb[0].mxu0 %v181
      %v332 = vpop.f32.mrb[0].mxu0
      %v333 = vadd.f32 %v259, %v332
      %v334 = vpop.f32.mrb[0].mxu0
      %335 = vmatprep.mubr.f32.mxu0 0.0
      %336 = vmatmul.mubr.f32.gmra.mrb[0].mxu0 %v182
      %v337 = vpop.f32.mrb[0].mxu0
      %v338 = vadd.f32 %v259, %v337
      %v339 = vpop.f32.mrb[0].mxu0
      %340 = vmatprep.mubr.f32.mxu0 0.0
      %341 = vmatmul.mubr.f32.gmra.mrb[0].mxu0 %v183
      %v342 = vpop.f32.mrb[0].mxu0
      %v343 = vadd.f32 %v259, %v342
      %v344 = vpop.f32.mrb[0].mxu0
      %345 = vmatprep.mubr.f32.mxu0 0.0
      %346 = vmatmul.mubr.f32.gmra.mrb[0].mxu0 %v184
      %v347 = vpop.f32.mrb[0].mxu0
      %v348 = vadd.f32 %v259, %v347
      %v349 = vpop.f32.mrb[0].mxu0
      %350 = vmatprep.mubr.f32.mxu0 0.0
      %351 = vmatmul.mubr.f32.gmra.mrb[0].mxu0 %v185
      %v352 = vpop.f32.mrb[0].mxu0
      %v353 = vadd.f32 %v259, %v352
      %v354 = vpop.f32.mrb[0].mxu0
      %355 = vmatprep.mubr.f32.mxu0 0.0
      %356 = vmatmul.mubr.f32.gmra.mrb[0].mxu0 %v186
      %v357 = vpop.f32.mrb[0].mxu0
      %v358 = vadd.f32 %v259, %v357
      %v359 = vpop.f32.mrb[0].mxu0
      %360 = vmatprep.mubr.f32.mxu0 0.0
      %361 = vmatmul.mubr.f32.gmra.mrb[0].mxu0 %v187
      %v362 = vpop.f32.mrb[0].mxu0
      %v363 = vadd.f32 %v259, %v362
      %v364 = vpop.f32.mrb[0].mxu0
      %365 = vmatprep.mubr.f32.mxu0 0.0
      %366 = vmatmul.mubr.f32.gmra.mrb[0].mxu0 %v188
      %v367 = vpop.f32.mrb[0].mxu0
      %v368 = vadd.f32 %v259, %v367
      %v369 = vpop.f32.mrb[0].mxu0
      %370 = vmatprep.mubr.f32.mxu0 0.0
      %371 = vmatmul.mubr.f32.gmra.mrb[0].mxu0 %v189
      %v372 = vpop.f32.mrb[0].mxu0
      %v373 = vadd.f32 %v259, %v372
      %v374 = vpop.f32.mrb[0].mxu0
      %375 = vmatprep.mubr.f32.mxu0 0.0
      %376 = vmatmul.mubr.f32.gmra.mrb[0].mxu0 %v190
      %v377 = vpop.f32.mrb[0].mxu0
      %v378 = vadd.f32 %v259, %v377
      %v379 = vpop.f32.mrb[0].mxu0
      %380 = vmatprep.mubr.f32.mxu0 0.0
      %381 = vmatmul.mubr.f32.gmra.mrb[0].mxu0 %v191
      %v382 = vpop.f32.mrb[0].mxu0
      %v383 = vadd.f32 %v259, %v382
      %v384 = vpop.f32.mrb[0].mxu0
      %385 = vmatprep.mubr.f32.mxu0 0.0
      %386 = vmatmul.mubr.f32.gmra.mrb[0].mxu0 %v192
      %v387 = vpop.f32.mrb[0].mxu0
      %v388 = vadd.f32 %v259, %v387
      %v389 = vpop.f32.mrb[0].mxu0
      %390 = vmatprep.mubr.f32.mxu0 0.0
      %391 = vmatmul.mubr.f32.gmra.mrb[0].mxu0 %v193
      %v392 = vpop.f32.mrb[0].mxu0
      %v393 = vadd.f32 %v259, %v392
      %v394 = vpop.f32.mrb[0].mxu0
      %395 = vmatprep.mubr.f32.mxu0 0.0
      %396 = vmatmul.mubr.f32.gmra.mrb[0].mxu0 %v194
      %v397 = vpop.f32.mrb[0].mxu0
      %v398 = vadd.f32 %v259, %v397
      %v399 = vpop.f32.mrb[0].mxu0
      %400 = vmatprep.mubr.f32.mxu0 0.0
      %401 = vmatmul.mubr.f32.gmra.mrb[0].mxu0 %v195
      %v402 = vpop.f32.mrb[0].mxu0
      %v403 = vadd.f32 %v259, %v402
      %v404 = vpop.f32.mrb[0].mxu0
      %405 = vmatprep.mubr.f32.mxu0 0.0
      %406 = vmatmul.mubr.f32.gmra.mrb[0].mxu0 %v203
      %v407 = vpop.f32.mrb[0].mxu0
      %v408 = vadd.f32 %v259, %v407
      %v409 = vpop.f32.mrb[0].mxu0
      %410 = vmatprep.mubr.f32.mxu0 0.0
      %411 = vmatmul.mubr.f32.gmra.mrb[0].mxu0 %v204
      %v412 = vpop.f32.mrb[0].mxu0
      %v413 = vadd.f32 %v259, %v412
      %v414 = vpop.f32.mrb[0].mxu0
      %415 = vmatprep.mubr.f32.mxu0 0.0
      %416 = vmatmul.mubr.f32.gmra.mrb[0].mxu0 %v205
      %v417 = vpop.f32.mrb[0].mxu0
      %v418 = vadd.f32 %v259, %v417
      %v419 = vpop.f32.mrb[0].mxu0
      %420 = vmatprep.mubr.f32.mxu0 0.0
      %421 = vmatmul.mubr.f32.gmra.mrb[0].mxu0 %v206
      %v422 = vpop.f32.mrb[0].mxu0
      %v423 = vadd.f32 %v259, %v422
      %v424 = vpop.f32.mrb[0].mxu0
      %425 = vmatprep.mubr.f32.mxu0 0.0
      %426 = vmatmul.mubr.f32.gmra.mrb[0].mxu0 %v207
      %v427 = vpop.f32.mrb[0].mxu0
      %v428 = vadd.f32 %v259, %v427
      %v429 = vpop.f32.mrb[0].mxu0
      %430 = vmatprep.mubr.f32.mxu0 0.0
      %431 = vmatmul.mubr.f32.gmra.mrb[0].mxu0 %v208
      %v432 = vpop.f32.mrb[0].mxu0
      %v433 = vadd.f32 %v259, %v432
      %v434 = vpop.f32.mrb[0].mxu0
      %435 = vmatprep.mubr.f32.mxu0 0.0
      %436 = vmatmul.mubr.f32.gmra.mrb[0].mxu0 %v209
      %v437 = vpop.f32.mrb[0].mxu0
      %v438 = vadd.f32 %v259, %v437
      %v439 = vpop.f32.mrb[0].mxu0
      %440 = vmatprep.mubr.f32.mxu0 0.0
      %441 = vmatmul.mubr.f32.gmra.mrb[0].mxu0 %v210
      %v442 = vpop.f32.mrb[0].mxu0
      %v443 = vadd.f32 %v259, %v442
      %v444 = vpop.f32.mrb[0].mxu0
      %445 = vmatprep.mubr.f32.mxu0 0.0
      %446 = vmatmul.mubr.f32.gmra.mrb[0].mxu0 %v211
      %v447 = vpop.f32.mrb[0].mxu0
      %v448 = vadd.f32 %v259, %v447
      %v449 = vpop.f32.mrb[0].mxu0
      %450 = vmatprep.mubr.f32.mxu0 0.0
      %451 = vmatmul.mubr.f32.gmra.mrb[0].mxu0 %v212
      %v452 = vpop.f32.mrb[0].mxu0
      %v453 = vadd.f32 %v259, %v452
      %v454 = vpop.f32.mrb[0].mxu0
      %455 = vmatprep.mubr.f32.mxu0 0.0
      %456 = vmatmul.mubr.f32.gmra.mrb[0].mxu0 %v213
      %v457 = vpop.f32.mrb[0].mxu0
      %v458 = vadd.f32 %v259, %v457
      %v459 = vpop.f32.mrb[0].mxu0
      %460 = vmatprep.mubr.f32.mxu0 0.0
      %461 = vmatmul.mubr.f32.gmra.mrb[0].mxu0 %v214
      %v462 = vpop.f32.mrb[0].mxu0
      %v463 = vadd.f32 %v259, %v462
      %v464 = vpop.f32.mrb[0].mxu0
      %465 = vmatprep.mubr.f32.mxu0 0.0
      %466 = vmatmul.mubr.f32.gmra.mrb[0].mxu0 %v215
      %v467 = vpop.f32.mrb[0].mxu0
      %v468 = vadd.f32 %v259, %v467
      %v469 = vpop.f32.mrb[0].mxu0
      %470 = vmatprep.mubr.f32.mxu0 0.0
      %471 = vmatmul.mubr.f32.gmra.mrb[0].mxu0 %v216
      %v472 = vpop.f32.mrb[0].mxu0
      %v473 = vadd.f32 %v259, %v472
      %v474 = vpop.f32.mrb[0].mxu0
      %475 = vmatprep.mubr.f32.mxu0 0.0
      %476 = vmatmul.mubr.f32.gmra.mrb[0].mxu0 %v217
      %v477 = vpop.f32.mrb[0].mxu0
      %v478 = vadd.f32 %v259, %v477
      %v479 = vpop.f32.mrb[0].mxu0
      %480 = vmatprep.mubr.f32.mxu0 0.0
      %481 = vmatmul.mubr.f32.gmra.mrb[0].mxu0 %v218
      %v482 = vpop.f32.mrb[0].mxu0
      %v483 = vadd.f32 %v259, %v482
      %v484 = vpop.f32.mrb[0].mxu0
      %485 = vdwg.mxu0
      %486 = vadd.xlane.f32.xlu0 %v328
      %v487 = vpop.xlane.xlu0 %486
      %488 = vadd.xlane.f32.xlu0 %v333
      %v489 = vpop.xlane.xlu0 %488
      %490 = vadd.xlane.f32.xlu0 %v338
      %v491 = vpop.xlane.xlu0 %490
      %492 = vadd.xlane.f32.xlu0 %v343
      %v493 = vpop.xlane.xlu0 %492
      %494 = vadd.xlane.f32.xlu0 %v348
      %v495 = vpop.xlane.xlu0 %494
      %496 = vadd.xlane.f32.xlu0 %v353
      %v497 = vpop.xlane.xlu0 %496
      %498 = vadd.xlane.f32.xlu0 %v358
      %v499 = vpop.xlane.xlu0 %498
      %500 = vadd.xlane.f32.xlu0 %v363
      %v501 = vpop.xlane.xlu0 %500
      %502 = vadd.xlane.f32.xlu0 %v368
      %v503 = vpop.xlane.xlu0 %502
      %504 = vadd.xlane.f32.xlu0 %v373
      %v505 = vpop.xlane.xlu0 %504
      %506 = vadd.xlane.f32.xlu0 %v378
      %v507 = vpop.xlane.xlu0 %506
      %508 = vadd.xlane.f32.xlu0 %v383
      %v509 = vpop.xlane.xlu0 %508
      %510 = vadd.xlane.f32.xlu0 %v388
      %v511 = vpop.xlane.xlu0 %510
      %512 = vadd.xlane.f32.xlu0 %v393
      %v513 = vpop.xlane.xlu0 %512
      %514 = vadd.xlane.f32.xlu0 %v398
      %v515 = vpop.xlane.xlu0 %514
      %516 = vadd.xlane.f32.xlu0 %v403
      %v517 = vpop.xlane.xlu0 %516
      %518 = vadd.xlane.f32.xlu0 %v408
      %v519 = vpop.xlane.xlu0 %518
      %520 = vadd.xlane.f32.xlu0 %v413
      %v521 = vpop.xlane.xlu0 %520
      %522 = vadd.xlane.f32.xlu0 %v418
      %v523 = vpop.xlane.xlu0 %522
      %524 = vadd.xlane.f32.xlu0 %v423
      %v525 = vpop.xlane.xlu0 %524
      %526 = vadd.xlane.f32.xlu0 %v428
      %v527 = vpop.xlane.xlu0 %526
      %528 = vadd.xlane.f32.xlu0 %v433
      %v529 = vpop.xlane.xlu0 %528
      %530 = vadd.xlane.f32.xlu0 %v438
      %v531 = vpop.xlane.xlu0 %530
      %532 = vadd.xlane.f32.xlu0 %v443
      %v533 = vpop.xlane.xlu0 %532
      %534 = vadd.xlane.f32.xlu0 %v448
      %v535 = vpop.xlane.xlu0 %534
      %536 = vadd.xlane.f32.xlu0 %v453
      %v537 = vpop.xlane.xlu0 %536
      %538 = vadd.xlane.f32.xlu0 %v458
      %v539 = vpop.xlane.xlu0 %538
      %540 = vadd.xlane.f32.xlu0 %v463
      %v541 = vpop.xlane.xlu0 %540
      %542 = vadd.xlane.f32.xlu0 %v468
      %v543 = vpop.xlane.xlu0 %542
      %544 = vadd.xlane.f32.xlu0 %v473
      %v545 = vpop.xlane.xlu0 %544
      %546 = vadd.xlane.f32.xlu0 %v478
      %v547 = vpop.xlane.xlu0 %546
      %548 = vadd.xlane.f32.xlu0 %v483
      %v549 = vpop.xlane.xlu0 %548
      %v550 = vmul.f32 %v328, %v328
      %v551 = vmul.f32 %v333, %v333
      %v552 = vmul.f32 %v338, %v338
      %v553 = vmul.f32 %v343, %v343
      %v554 = vmul.f32 %v348, %v348
      %v555 = vmul.f32 %v353, %v353
      %v556 = vmul.f32 %v358, %v358
      %v557 = vmul.f32 %v363, %v363
      %v558 = vmul.f32 %v368, %v368
      %v559 = vmul.f32 %v373, %v373
      %v560 = vmul.f32 %v378, %v378
      %v561 = vmul.f32 %v383, %v383
      %v562 = vmul.f32 %v388, %v388
      %v563 = vmul.f32 %v393, %v393
      %v564 = vmul.f32 %v398, %v398
      %v565 = vmul.f32 %v403, %v403
      %v566 = vmul.f32 %v408, %v408
      %v567 = vmul.f32 %v413, %v413
      %v568 = vmul.f32 %v418, %v418
      %v569 = vmul.f32 %v423, %v423
      %v570 = vmul.f32 %v428, %v428
      %v571 = vmul.f32 %v433, %v433
      %v572 = vmul.f32 %v438, %v438
      %v573 = vmul.f32 %v443, %v443
      %v574 = vmul.f32 %v448, %v448
      %v575 = vmul.f32 %v453, %v453
      %v576 = vmul.f32 %v458, %v458
      %v577 = vmul.f32 %v463, %v463
      %v578 = vmul.f32 %v468, %v468
      %v579 = vmul.f32 %v473, %v473
      %v580 = vmul.f32 %v478, %v478
      %v581 = vmul.f32 %v483, %v483
      %582 = vadd.xlane.f32.xlu0 %v550
      %v583 = vpop.xlane.xlu0 %582
      %584 = vadd.xlane.f32.xlu0 %v551
      %v585 = vpop.xlane.xlu0 %584
      %586 = vadd.xlane.f32.xlu0 %v552
      %v587 = vpop.xlane.xlu0 %586
      %588 = vadd.xlane.f32.xlu0 %v553
      %v589 = vpop.xlane.xlu0 %588
      %590 = vadd.xlane.f32.xlu0 %v554
      %v591 = vpop.xlane.xlu0 %590
      %592 = vadd.xlane.f32.xlu0 %v555
      %v593 = vpop.xlane.xlu0 %592
      %594 = vadd.xlane.f32.xlu0 %v556
      %v595 = vpop.xlane.xlu0 %594
      %596 = vadd.xlane.f32.xlu0 %v557
      %v597 = vpop.xlane.xlu0 %596
      %598 = vadd.xlane.f32.xlu0 %v558
      %v599 = vpop.xlane.xlu0 %598
      %600 = vadd.xlane.f32.xlu0 %v559
      %v601 = vpop.xlane.xlu0 %600
      %602 = vadd.xlane.f32.xlu0 %v560
      %v603 = vpop.xlane.xlu0 %602
      %604 = vadd.xlane.f32.xlu0 %v561
      %v605 = vpop.xlane.xlu0 %604
      %606 = vadd.xlane.f32.xlu0 %v562
      %v607 = vpop.xlane.xlu0 %606
      %608 = vadd.xlane.f32.xlu0 %v563
      %v609 = vpop.xlane.xlu0 %608
      %610 = vadd.xlane.f32.xlu0 %v564
      %v611 = vpop.xlane.xlu0 %610
      %612 = vadd.xlane.f32.xlu0 %v565
      %v613 = vpop.xlane.xlu0 %612
      %614 = vadd.xlane.f32.xlu0 %v566
      %v615 = vpop.xlane.xlu0 %614
      %616 = vadd.xlane.f32.xlu0 %v567
      %v617 = vpop.xlane.xlu0 %616
      %618 = vadd.xlane.f32.xlu0 %v568
      %v619 = vpop.xlane.xlu0 %618
      %620 = vadd.xlane.f32.xlu0 %v569
      %v621 = vpop.xlane.xlu0 %620
      %622 = vadd.xlane.f32.xlu0 %v570
      %v623 = vpop.xlane.xlu0 %622
      %624 = vadd.xlane.f32.xlu0 %v571
      %v625 = vpop.xlane.xlu0 %624
      %626 = vadd.xlane.f32.xlu0 %v572
      %v627 = vpop.xlane.xlu0 %626
      %628 = vadd.xlane.f32.xlu0 %v573
      %v629 = vpop.xlane.xlu0 %628
      %630 = vadd.xlane.f32.xlu0 %v574
      %v631 = vpop.xlane.xlu0 %630
      %632 = vadd.xlane.f32.xlu0 %v575
      %v633 = vpop.xlane.xlu0 %632
      %634 = vadd.xlane.f32.xlu0 %v576
      %v635 = vpop.xlane.xlu0 %634
      %636 = vadd.xlane.f32.xlu0 %v577
      %v637 = vpop.xlane.xlu0 %636
      %638 = vadd.xlane.f32.xlu0 %v578
      %v639 = vpop.xlane.xlu0 %638
      %640 = vadd.xlane.f32.xlu0 %v579
      %v641 = vpop.xlane.xlu0 %640
      %642 = vadd.xlane.f32.xlu0 %v580
      %v643 = vpop.xlane.xlu0 %642
      %644 = vadd.xlane.f32.xlu0 %v581
      %v645 = vpop.xlane.xlu0 %644
      %v646 = vmul.f32 %v487, 0.0078125
      %v647 = vmul.f32 %v489, 0.0078125
      %v648 = vmul.f32 %v491, 0.0078125
      %v649 = vmul.f32 %v493, 0.0078125
      %v650 = vmul.f32 %v495, 0.0078125
      %v651 = vmul.f32 %v497, 0.0078125
      %v652 = vmul.f32 %v499, 0.0078125
      %v653 = vmul.f32 %v501, 0.0078125
      %v654 = vmul.f32 %v503, 0.0078125
      %v655 = vmul.f32 %v505, 0.0078125
      %v656 = vmul.f32 %v507, 0.0078125
      %v657 = vmul.f32 %v509, 0.0078125
      %v658 = vmul.f32 %v511, 0.0078125
      %v659 = vmul.f32 %v513, 0.0078125
      %v660 = vmul.f32 %v515, 0.0078125
      %v661 = vmul.f32 %v517, 0.0078125
      %v662 = vmul.f32 %v519, 0.0078125
      %v663 = vmul.f32 %v521, 0.0078125
      %v664 = vmul.f32 %v523, 0.0078125
      %v665 = vmul.f32 %v525, 0.0078125
      %v666 = vmul.f32 %v527, 0.0078125
      %v667 = vmul.f32 %v529, 0.0078125
      %v668 = vmul.f32 %v531, 0.0078125
      %v669 = vmul.f32 %v533, 0.0078125
      %v670 = vmul.f32 %v535, 0.0078125
      %v671 = vmul.f32 %v537, 0.0078125
      %v672 = vmul.f32 %v539, 0.0078125
      %v673 = vmul.f32 %v541, 0.0078125
      %v674 = vmul.f32 %v543, 0.0078125
      %v675 = vmul.f32 %v545, 0.0078125
      %v676 = vmul.f32 %v547, 0.0078125
      %v677 = vmul.f32 %v549, 0.0078125
      %v678 = vmul.f32 %v583, 0.0078125
      %v679 = vmul.f32 %v585, 0.0078125
      %v680 = vmul.f32 %v587, 0.0078125
      %v681 = vmul.f32 %v589, 0.0078125
      %v682 = vmul.f32 %v591, 0.0078125
      %v683 = vmul.f32 %v593, 0.0078125
      %v684 = vmul.f32 %v595, 0.0078125
      %v685 = vmul.f32 %v597, 0.0078125
      %v686 = vmul.f32 %v599, 0.0078125
      %v687 = vmul.f32 %v601, 0.0078125
      %v688 = vmul.f32 %v603, 0.0078125
      %v689 = vmul.f32 %v605, 0.0078125
      %v690 = vmul.f32 %v607, 0.0078125
      %v691 = vmul.f32 %v609, 0.0078125
      %v692 = vmul.f32 %v611, 0.0078125
      %v693 = vmul.f32 %v613, 0.0078125
      %v694 = vmul.f32 %v615, 0.0078125
      %v695 = vmul.f32 %v617, 0.0078125
      %v696 = vmul.f32 %v619, 0.0078125
      %v697 = vmul.f32 %v621, 0.0078125
      %v698 = vmul.f32 %v623, 0.0078125
      %v699 = vmul.f32 %v625, 0.0078125
      %v700 = vmul.f32 %v627, 0.0078125
      %v701 = vmul.f32 %v629, 0.0078125
      %v702 = vmul.f32 %v631, 0.0078125
      %v703 = vmul.f32 %v633, 0.0078125
      %v704 = vmul.f32 %v635, 0.0078125
      %v705 = vmul.f32 %v637, 0.0078125
      %v706 = vmul.f32 %v639, 0.0078125
      %v707 = vmul.f32 %v641, 0.0078125
      %v708 = vmul.f32 %v643, 0.0078125
      %v709 = vmul.f32 %v645, 0.0078125
      %v710 = vmul.f32 %v646, %v646
      %v711 = vmul.f32 %v647, %v647
      %v712 = vmul.f32 %v648, %v648
      %v713 = vmul.f32 %v649, %v649
      %v714 = vmul.f32 %v650, %v650
      %v715 = vmul.f32 %v651, %v651
      %v716 = vmul.f32 %v652, %v652
      %v717 = vmul.f32 %v653, %v653
      %v718 = vmul.f32 %v654, %v654
      %v719 = vmul.f32 %v655, %v655
      %v720 = vmul.f32 %v656, %v656
      %v721 = vmul.f32 %v657, %v657
      %v722 = vmul.f32 %v658, %v658
      %v723 = vmul.f32 %v659, %v659
      %v724 = vmul.f32 %v660, %v660
      %v725 = vmul.f32 %v661, %v661
      %v726 = vmul.f32 %v662, %v662
      %v727 = vmul.f32 %v663, %v663
      %v728 = vmul.f32 %v664, %v664
      %v729 = vmul.f32 %v665, %v665
      %v730 = vmul.f32 %v666, %v666
      %v731 = vmul.f32 %v667, %v667
      %v732 = vmul.f32 %v668, %v668
      %v733 = vmul.f32 %v669, %v669
      %v734 = vmul.f32 %v670, %v670
      %v735 = vmul.f32 %v671, %v671
      %v736 = vmul.f32 %v672, %v672
      %v737 = vmul.f32 %v673, %v673
      %v738 = vmul.f32 %v674, %v674
      %v739 = vmul.f32 %v675, %v675
      %v740 = vmul.f32 %v676, %v676
      %v741 = vmul.f32 %v677, %v677
      %v742 = vsub.f32 %v678, %v710
      %v743 = vsub.f32 %v679, %v711
      %v744 = vsub.f32 %v680, %v712
      %v745 = vsub.f32 %v681, %v713
      %v746 = vsub.f32 %v682, %v714
      %v747 = vsub.f32 %v683, %v715
      %v748 = vsub.f32 %v684, %v716
      %v749 = vsub.f32 %v685, %v717
      %v750 = vsub.f32 %v686, %v718
      %v751 = vsub.f32 %v687, %v719
      %v752 = vsub.f32 %v688, %v720
      %v753 = vsub.f32 %v689, %v721
      %v754 = vsub.f32 %v690, %v722
      %v755 = vsub.f32 %v691, %v723
      %v756 = vsub.f32 %v692, %v724
      %v757 = vsub.f32 %v693, %v725
      %v758 = vsub.f32 %v694, %v726
      %v759 = vsub.f32 %v695, %v727
      %v760 = vsub.f32 %v696, %v728
      %v761 = vsub.f32 %v697, %v729
      %v762 = vsub.f32 %v698, %v730
      %v763 = vsub.f32 %v699, %v731
      %v764 = vsub.f32 %v700, %v732
      %v765 = vsub.f32 %v701, %v733
      %v766 = vsub.f32 %v702, %v734
      %v767 = vsub.f32 %v703, %v735
      %v768 = vsub.f32 %v704, %v736
      %v769 = vsub.f32 %v705, %v737
      %v770 = vsub.f32 %v706, %v738
      %v771 = vsub.f32 %v707, %v739
      %v772 = vsub.f32 %v708, %v740
      %v773 = vsub.f32 %v709, %v741
      %v774 = vsub.f32 %v328, %v646
      %v775 = vsub.f32 %v333, %v647
      %v776 = vsub.f32 %v338, %v648
      %v777 = vsub.f32 %v343, %v649
      %v778 = vsub.f32 %v348, %v650
      %v779 = vsub.f32 %v353, %v651
      %v780 = vsub.f32 %v358, %v652
      %v781 = vsub.f32 %v363, %v653
      %v782 = vsub.f32 %v368, %v654
      %v783 = vsub.f32 %v373, %v655
      %v784 = vsub.f32 %v378, %v656
      %v785 = vsub.f32 %v383, %v657
      %v786 = vsub.f32 %v388, %v658
      %v787 = vsub.f32 %v393, %v659
      %v788 = vsub.f32 %v398, %v660
      %v789 = vsub.f32 %v403, %v661
      %v790 = vsub.f32 %v408, %v662
      %v791 = vsub.f32 %v413, %v663
      %v792 = vsub.f32 %v418, %v664
      %v793 = vsub.f32 %v423, %v665
      %v794 = vsub.f32 %v428, %v666
      %v795 = vsub.f32 %v433, %v667
      %v796 = vsub.f32 %v438, %v668
      %v797 = vsub.f32 %v443, %v669
      %v798 = vsub.f32 %v448, %v670
      %v799 = vsub.f32 %v453, %v671
      %v800 = vsub.f32 %v458, %v672
      %v801 = vsub.f32 %v463, %v673
      %v802 = vsub.f32 %v468, %v674
      %v803 = vsub.f32 %v473, %v675
      %v804 = vsub.f32 %v478, %v676
      %v805 = vsub.f32 %v483, %v677
      %v806 = vadd.f32 %v742, 1e-05
      %v807 = vadd.f32 %v743, 1e-05
      %v808 = vadd.f32 %v744, 1e-05
      %v809 = vadd.f32 %v745, 1e-05
      %v810 = vadd.f32 %v746, 1e-05
      %v811 = vadd.f32 %v747, 1e-05
      %v812 = vadd.f32 %v748, 1e-05
      %v813 = vadd.f32 %v749, 1e-05
      %v814 = vadd.f32 %v750, 1e-05
      %v815 = vadd.f32 %v751, 1e-05
      %v816 = vadd.f32 %v752, 1e-05
      %v817 = vadd.f32 %v753, 1e-05
      %v818 = vadd.f32 %v754, 1e-05
      %v819 = vadd.f32 %v755, 1e-05
      %v820 = vadd.f32 %v756, 1e-05
      %v821 = vadd.f32 %v757, 1e-05
      %v822 = vadd.f32 %v758, 1e-05
      %v823 = vadd.f32 %v759, 1e-05
      %v824 = vadd.f32 %v760, 1e-05
      %v825 = vadd.f32 %v761, 1e-05
      %v826 = vadd.f32 %v762, 1e-05
      %v827 = vadd.f32 %v763, 1e-05
      %v828 = vadd.f32 %v764, 1e-05
      %v829 = vadd.f32 %v765, 1e-05
      %v830 = vadd.f32 %v766, 1e-05
      %v831 = vadd.f32 %v767, 1e-05
      %v832 = vadd.f32 %v768, 1e-05
      %v833 = vadd.f32 %v769, 1e-05
      %v834 = vadd.f32 %v770, 1e-05
      %v835 = vadd.f32 %v771, 1e-05
      %v836 = vadd.f32 %v772, 1e-05
      %v837 = vadd.f32 %v773, 1e-05
      %v838 = vrsqrt.pop %v806
      %v839 = vrsqrt.pop %v807
      %v840 = vrsqrt.pop %v808
      %v841 = vrsqrt.pop %v809
      %v842 = vrsqrt.pop %v810
      %v843 = vrsqrt.pop %v811
      %v844 = vrsqrt.pop %v812
      %v845 = vrsqrt.pop %v813
      %v846 = vrsqrt.pop %v814
      %v847 = vrsqrt.pop %v815
      %v848 = vrsqrt.pop %v816
      %v849 = vrsqrt.pop %v817
      %v850 = vrsqrt.pop %v818
      %v851 = vrsqrt.pop %v819
      %v852 = vrsqrt.pop %v820
      %v853 = vrsqrt.pop %v821
      %v854 = vrsqrt.pop %v822
      %v855 = vrsqrt.pop %v823
      %v856 = vrsqrt.pop %v824
      %v857 = vrsqrt.pop %v825
      %v858 = vrsqrt.pop %v826
      %v859 = vrsqrt.pop %v827
      %v860 = vrsqrt.pop %v828
      %v861 = vrsqrt.pop %v829
      %v862 = vrsqrt.pop %v830
      %v863 = vrsqrt.pop %v831
      %v864 = vrsqrt.pop %v832
      %v865 = vrsqrt.pop %v833
      %v866 = vrsqrt.pop %v834
      %v867 = vrsqrt.pop %v835
      %v868 = vrsqrt.pop %v836
      %v869 = vrsqrt.pop %v837
      %v870 = vmul.f32 %v774, %v838
      %v871 = vmul.f32 %v775, %v839
      %v872 = vmul.f32 %v776, %v840
      %v873 = vmul.f32 %v777, %v841
      %v874 = vmul.f32 %v778, %v842
      %v875 = vmul.f32 %v779, %v843
      %v876 = vmul.f32 %v780, %v844
      %v877 = vmul.f32 %v781, %v845
      %v878 = vmul.f32 %v782, %v846
      %v879 = vmul.f32 %v783, %v847
      %v880 = vmul.f32 %v784, %v848
      %v881 = vmul.f32 %v785, %v849
      %v882 = vmul.f32 %v786, %v850
      %v883 = vmul.f32 %v787, %v851
      %v884 = vmul.f32 %v788, %v852
      %v885 = vmul.f32 %v789, %v853
      %v886 = vmul.f32 %v790, %v854
      %v887 = vmul.f32 %v791, %v855
      %v888 = vmul.f32 %v792, %v856
      %v889 = vmul.f32 %v793, %v857
      %v890 = vmul.f32 %v794, %v858
      %v891 = vmul.f32 %v795, %v859
      %v892 = vmul.f32 %v796, %v860
      %v893 = vmul.f32 %v797, %v861
      %v894 = vmul.f32 %v798, %v862
      %v895 = vmul.f32 %v799, %v863
      %v896 = vmul.f32 %v800, %v864
      %v897 = vmul.f32 %v801, %v865
      %v898 = vmul.f32 %v802, %v866
      %v899 = vmul.f32 %v803, %v867
      %v900 = vmul.f32 %v804, %v868
      %v901 = vmul.f32 %v805, %v869
      %v903 = vlaneseq
      %v904 = vshrl.u32 %v903, 7
      %v905 = vsub.s32 0, %v904
      %v906 = vrot.slane %v236, %v905
      %v908 = vmul.f32 %v870, %v906
      %v909 = vmul.f32 %v871, %v906
      %v910 = vmul.f32 %v872, %v906
      %v911 = vmul.f32 %v873, %v906
      %v912 = vmul.f32 %v874, %v906
      %v913 = vmul.f32 %v875, %v906
      %v914 = vmul.f32 %v876, %v906
      %v915 = vmul.f32 %v877, %v906
      %v916 = vmul.f32 %v878, %v906
      %v917 = vmul.f32 %v879, %v906
      %v918 = vmul.f32 %v880, %v906
      %v919 = vmul.f32 %v881, %v906
      %v920 = vmul.f32 %v882, %v906
      %v921 = vmul.f32 %v883, %v906
      %v922 = vmul.f32 %v884, %v906
      %v923 = vmul.f32 %v885, %v906
      %v924 = vmul.f32 %v886, %v906
      %v925 = vmul.f32 %v887, %v906
      %v926 = vmul.f32 %v888, %v906
      %v927 = vmul.f32 %v889, %v906
      %v928 = vmul.f32 %v890, %v906
      %v929 = vmul.f32 %v891, %v906
      %v930 = vmul.f32 %v892, %v906
      %v931 = vmul.f32 %v893, %v906
      %v932 = vmul.f32 %v894, %v906
      %v933 = vmul.f32 %v895, %v906
      %v934 = vmul.f32 %v896, %v906
      %v935 = vmul.f32 %v897, %v906
      %v936 = vmul.f32 %v898, %v906
      %v937 = vmul.f32 %v899, %v906
      %v938 = vmul.f32 %v900, %v906
      %v939 = vmul.f32 %v901, %v906
      %v941 = vlaneseq
      %v942 = vshrl.u32 %v941, 7
      %v943 = vsub.s32 0, %v942
      %v944 = vrot.slane %v237, %v943
      %v946 = vadd.f32 %v908, %v944
      %v947 = vadd.f32 %v909, %v944
      %v948 = vadd.f32 %v910, %v944
      %v949 = vadd.f32 %v911, %v944
      %v950 = vadd.f32 %v912, %v944
      %v951 = vadd.f32 %v913, %v944
      %v952 = vadd.f32 %v914, %v944
      %v953 = vadd.f32 %v915, %v944
      %v954 = vadd.f32 %v916, %v944
      %v955 = vadd.f32 %v917, %v944
      %v956 = vadd.f32 %v918, %v944
      %v957 = vadd.f32 %v919, %v944
      %v958 = vadd.f32 %v920, %v944
      %v959 = vadd.f32 %v921, %v944
      %v960 = vadd.f32 %v922, %v944
      %v961 = vadd.f32 %v923, %v944
      %v962 = vadd.f32 %v924, %v944
      %v963 = vadd.f32 %v925, %v944
      %v964 = vadd.f32 %v926, %v944
      %v965 = vadd.f32 %v927, %v944
      %v966 = vadd.f32 %v928, %v944
      %v967 = vadd.f32 %v929, %v944
      %v968 = vadd.f32 %v930, %v944
      %v969 = vadd.f32 %v931, %v944
      %v970 = vadd.f32 %v932, %v944
      %v971 = vadd.f32 %v933, %v944
      %v972 = vadd.f32 %v934, %v944
      %v973 = vadd.f32 %v935, %v944
      %v974 = vadd.f32 %v936, %v944
      %v975 = vadd.f32 %v937, %v944
      %v976 = vadd.f32 %v938, %v944
      %v977 = vadd.f32 %v939, %v944
      %vm978 = vcmp.gt.f32.partialorder %v946, 0.0
      %vm979 = vcmp.gt.f32.partialorder %v947, 0.0
      %vm980 = vcmp.gt.f32.partialorder %v948, 0.0
      %vm981 = vcmp.gt.f32.partialorder %v949, 0.0
      %vm982 = vcmp.gt.f32.partialorder %v950, 0.0
      %vm983 = vcmp.gt.f32.partialorder %v951, 0.0
      %vm984 = vcmp.gt.f32.partialorder %v952, 0.0
      %vm985 = vcmp.gt.f32.partialorder %v953, 0.0
      %vm986 = vcmp.gt.f32.partialorder %v954, 0.0
      %vm987 = vcmp.gt.f32.partialorder %v955, 0.0
      %vm988 = vcmp.gt.f32.partialorder %v956, 0.0
      %vm989 = vcmp.gt.f32.partialorder %v957, 0.0
      %vm990 = vcmp.gt.f32.partialorder %v958, 0.0
      %vm991 = vcmp.gt.f32.partialorder %v959, 0.0
      %vm992 = vcmp.gt.f32.partialorder %v960, 0.0
      %vm993 = vcmp.gt.f32.partialorder %v961, 0.0
      %vm994 = vcmp.gt.f32.partialorder %v962, 0.0
      %vm995 = vcmp.gt.f32.partialorder %v963, 0.0
      %vm996 = vcmp.gt.f32.partialorder %v964, 0.0
      %vm997 = vcmp.gt.f32.partialorder %v965, 0.0
      %vm998 = vcmp.gt.f32.partialorder %v966, 0.0
      %vm999 = vcmp.gt.f32.partialorder %v967, 0.0
      %vm1000 = vcmp.gt.f32.partialorder %v968, 0.0
      %vm1001 = vcmp.gt.f32.partialorder %v969, 0.0
      %vm1002 = vcmp.gt.f32.partialorder %v970, 0.0
      %vm1003 = vcmp.gt.f32.partialorder %v971, 0.0
      %vm1004 = vcmp.gt.f32.partialorder %v972, 0.0
      %vm1005 = vcmp.gt.f32.partialorder %v973, 0.0
      %vm1006 = vcmp.gt.f32.partialorder %v974, 0.0
      %vm1007 = vcmp.gt.f32.partialorder %v975, 0.0
      %vm1008 = vcmp.gt.f32.partialorder %v976, 0.0
      %vm1009 = vcmp.gt.f32.partialorder %v977, 0.0
      %v1010 = vmul.f32 %v946, 0.01
      %v1011 = vmul.f32 %v947, 0.01
      %v1012 = vmul.f32 %v948, 0.01
      %v1013 = vmul.f32 %v949, 0.01
      %v1014 = vmul.f32 %v950, 0.01
      %v1015 = vmul.f32 %v951, 0.01
      %v1016 = vmul.f32 %v952, 0.01
      %v1017 = vmul.f32 %v953, 0.01
      %v1018 = vmul.f32 %v954, 0.01
      %v1019 = vmul.f32 %v955, 0.01
      %v1020 = vmul.f32 %v956, 0.01
      %v1021 = vmul.f32 %v957, 0.01
      %v1022 = vmul.f32 %v958, 0.01
      %v1023 = vmul.f32 %v959, 0.01
      %v1024 = vmul.f32 %v960, 0.01
      %v1025 = vmul.f32 %v961, 0.01
      %v1026 = vmul.f32 %v962, 0.01
      %v1027 = vmul.f32 %v963, 0.01
      %v1028 = vmul.f32 %v964, 0.01
      %v1029 = vmul.f32 %v965, 0.01
      %v1030 = vmul.f32 %v966, 0.01
      %v1031 = vmul.f32 %v967, 0.01
      %v1032 = vmul.f32 %v968, 0.01
      %v1033 = vmul.f32 %v969, 0.01
      %v1034 = vmul.f32 %v970, 0.01
      %v1035 = vmul.f32 %v971, 0.01
      %v1036 = vmul.f32 %v972, 0.01
      %v1037 = vmul.f32 %v973, 0.01
      %v1038 = vmul.f32 %v974, 0.01
      %v1039 = vmul.f32 %v975, 0.01
      %v1040 = vmul.f32 %v976, 0.01
      %v1041 = vmul.f32 %v977, 0.01
      %v1042 = vsel %vm978, %v946, %v1010
      %v1043 = vsel %vm979, %v947, %v1011
      %v1044 = vsel %vm980, %v948, %v1012
      %v1045 = vsel %vm981, %v949, %v1013
      %v1046 = vsel %vm982, %v950, %v1014
      %v1047 = vsel %vm983, %v951, %v1015
      %v1048 = vsel %vm984, %v952, %v1016
      %v1049 = vsel %vm985, %v953, %v1017
      %v1050 = vsel %vm986, %v954, %v1018
      %v1051 = vsel %vm987, %v955, %v1019
      %v1052 = vsel %vm988, %v956, %v1020
      %v1053 = vsel %vm989, %v957, %v1021
      %v1054 = vsel %vm990, %v958, %v1022
      %v1055 = vsel %vm991, %v959, %v1023
      %v1056 = vsel %vm992, %v960, %v1024
      %v1057 = vsel %vm993, %v961, %v1025
      %v1058 = vsel %vm994, %v962, %v1026
      %v1059 = vsel %vm995, %v963, %v1027
      %v1060 = vsel %vm996, %v964, %v1028
      %v1061 = vsel %vm997, %v965, %v1029
      %v1062 = vsel %vm998, %v966, %v1030
      %v1063 = vsel %vm999, %v967, %v1031
      %v1064 = vsel %vm1000, %v968, %v1032
      %v1065 = vsel %vm1001, %v969, %v1033
      %v1066 = vsel %vm1002, %v970, %v1034
      %v1067 = vsel %vm1003, %v971, %v1035
      %v1068 = vsel %vm1004, %v972, %v1036
      %v1069 = vsel %vm1005, %v973, %v1037
      %v1070 = vsel %vm1006, %v974, %v1038
      %v1071 = vsel %vm1007, %v975, %v1039
      %v1072 = vsel %vm1008, %v976, %v1040
      %v1073 = vsel %vm1009, %v977, %v1041
      %v1075 = vlaneseq
      %v1076 = vshrl.u32 %v1075, 7
      %v1077 = vsub.s32 0, %v1076
      %v1078 = vrot.slane %v254, %v1077
      %1080 = vmatprep.subr.mxu0 0.0
      %1081 = vmatpush1.msra.mxu0 %v238
      %1082 = vmatprep.subr.mxu0 0.0
      %1083 = vmatpush1.msra.mxu0 %v239
      %1084 = vmatprep.subr.mxu0 0.0
      %1085 = vmatpush1.msra.mxu0 %v240
      %1086 = vmatprep.subr.mxu0 0.0
      %1087 = vmatpush1.msra.mxu0 %v241
      %1088 = vmatprep.subr.mxu0 0.0
      %1089 = vmatpush1.msra.mxu0 %v242
      %1090 = vmatprep.subr.mxu0 0.0
      %1091 = vmatpush1.msra.mxu0 %v243
      %1092 = vmatprep.subr.mxu0 0.0
      %1093 = vmatpush1.msra.mxu0 %v244
      %1094 = vmatprep.subr.mxu0 0.0
      %1095 = vmatpush1.msra.mxu0 %v245
      %1096 = vmatprep.subr.mxu0 0.0
      %1097 = vmatpush1.msra.mxu0 %v246
      %1098 = vmatprep.subr.mxu0 0.0
      %1099 = vmatpush1.msra.mxu0 %v247
      %1100 = vmatprep.subr.mxu0 0.0
      %1101 = vmatpush1.msra.mxu0 %v248
      %1102 = vmatprep.subr.mxu0 0.0
      %1103 = vmatpush1.msra.mxu0 %v249
      %1104 = vmatprep.subr.mxu0 0.0
      %1105 = vmatpush1.msra.mxu0 %v250
      %1106 = vmatprep.subr.mxu0 0.0
      %1107 = vmatpush1.msra.mxu0 %v251
      %1108 = vmatprep.subr.mxu0 0.0
      %1109 = vmatpush1.msra.mxu0 %v252
      %1110 = vmatprep.subr.mxu0 0.0
      %1111 = vmatpush1.msra.mxu0 %v253
      %1112 = vmatprep.subr.mxu0 0.0
      %1113 = vmatpush1.msra.mxu0 0.0
      %1114 = vmatprep.subr.mxu0 0.0
      %1115 = vmatpush1.msra.mxu0 0.0
      %1116 = vmatprep.subr.mxu0 0.0
      %1117 = vmatpush1.msra.mxu0 0.0
      %1118 = vmatprep.subr.mxu0 0.0
      %1119 = vmatpush1.msra.mxu0 0.0
      %1120 = vmatprep.subr.mxu0 0.0
      %1121 = vmatpush1.msra.mxu0 0.0
      %1122 = vmatprep.subr.mxu0 0.0
      %1123 = vmatpush1.msra.mxu0 0.0
      %1124 = vmatprep.subr.mxu0 0.0
      %1125 = vmatpush1.msra.mxu0 0.0
      %1126 = vmatprep.subr.mxu0 0.0
      %1127 = vmatpush1.msra.mxu0 0.0
      %1128 = vmatprep.subr.mxu0 0.0
      %1129 = vmatpush1.msra.mxu0 0.0
      %1130 = vmatprep.subr.mxu0 0.0
      %1131 = vmatpush1.msra.mxu0 0.0
      %1132 = vmatprep.subr.mxu0 0.0
      %1133 = vmatpush1.msra.mxu0 0.0
      %1134 = vmatprep.subr.mxu0 0.0
      %1135 = vmatpush1.msra.mxu0 0.0
      %1136 = vmatprep.subr.mxu0 0.0
      %1137 = vmatpush1.msra.mxu0 0.0
      %1138 = vmatprep.subr.mxu0 0.0
      %1139 = vmatpush1.msra.mxu0 0.0
      %1140 = vmatprep.subr.mxu0 0.0
      %1141 = vmatpush1.msra.mxu0 0.0
      %1142 = vmatprep.subr.mxu0 0.0
      %1143 = vmatpush1.msra.mxu0 0.0
      %1144 = vmatprep.mubr.f32.mxu0 0.0
      %1145 = vmatmul.mubr.f32.gmra.mrb[0].mxu0 %v1042
      %v1146 = vpop.f32.mrb[0].mxu0
      %v1147 = vadd.f32 %v1078, %v1146
      %v1148 = vpop.f32.mrb[0].mxu0
      %1149 = vmatprep.mubr.f32.mxu0 0.0
      %1150 = vmatmul.mubr.f32.gmra.mrb[0].mxu0 %v1043
      %v1151 = vpop.f32.mrb[0].mxu0
      %v1152 = vadd.f32 %v1078, %v1151
      %v1153 = vpop.f32.mrb[0].mxu0
      %1154 = vmatprep.mubr.f32.mxu0 0.0
      %1155 = vmatmul.mubr.f32.gmra.mrb[0].mxu0 %v1044
      %v1156 = vpop.f32.mrb[0].mxu0
      %v1157 = vadd.f32 %v1078, %v1156
      %v1158 = vpop.f32.mrb[0].mxu0
      %1159 = vmatprep.mubr.f32.mxu0 0.0
      %1160 = vmatmul.mubr.f32.gmra.mrb[0].mxu0 %v1045
      %v1161 = vpop.f32.mrb[0].mxu0
      %v1162 = vadd.f32 %v1078, %v1161
      %v1163 = vpop.f32.mrb[0].mxu0
      %1164 = vmatprep.mubr.f32.mxu0 0.0
      %1165 = vmatmul.mubr.f32.gmra.mrb[0].mxu0 %v1046
      %v1166 = vpop.f32.mrb[0].mxu0
      %v1167 = vadd.f32 %v1078, %v1166
      %v1168 = vpop.f32.mrb[0].mxu0
      %1169 = vmatprep.mubr.f32.mxu0 0.0
      %1170 = vmatmul.mubr.f32.gmra.mrb[0].mxu0 %v1047
      %v1171 = vpop.f32.mrb[0].mxu0
      %v1172 = vadd.f32 %v1078, %v1171
      %v1173 = vpop.f32.mrb[0].mxu0
      %1174 = vmatprep.mubr.f32.mxu0 0.0
      %1175 = vmatmul.mubr.f32.gmra.mrb[0].mxu0 %v1048
      %v1176 = vpop.f32.mrb[0].mxu0
      %v1177 = vadd.f32 %v1078, %v1176
      %v1178 = vpop.f32.mrb[0].mxu0
      %1179 = vmatprep.mubr.f32.mxu0 0.0
      %1180 = vmatmul.mubr.f32.gmra.mrb[0].mxu0 %v1049
      %v1181 = vpop.f32.mrb[0].mxu0
      %v1182 = vadd.f32 %v1078, %v1181
      %v1183 = vpop.f32.mrb[0].mxu0
      %1184 = vmatprep.mubr.f32.mxu0 0.0
      %1185 = vmatmul.mubr.f32.gmra.mrb[0].mxu0 %v1050
      %v1186 = vpop.f32.mrb[0].mxu0
      %v1187 = vadd.f32 %v1078, %v1186
      %v1188 = vpop.f32.mrb[0].mxu0
      %1189 = vmatprep.mubr.f32.mxu0 0.0
      %1190 = vmatmul.mubr.f32.gmra.mrb[0].mxu0 %v1051
      %v1191 = vpop.f32.mrb[0].mxu0
      %v1192 = vadd.f32 %v1078, %v1191
      %v1193 = vpop.f32.mrb[0].mxu0
      %1194 = vmatprep.mubr.f32.mxu0 0.0
      %1195 = vmatmul.mubr.f32.gmra.mrb[0].mxu0 %v1052
      %v1196 = vpop.f32.mrb[0].mxu0
      %v1197 = vadd.f32 %v1078, %v1196
      %v1198 = vpop.f32.mrb[0].mxu0
      %1199 = vmatprep.mubr.f32.mxu0 0.0
      %1200 = vmatmul.mubr.f32.gmra.mrb[0].mxu0 %v1053
      %v1201 = vpop.f32.mrb[0].mxu0
      %v1202 = vadd.f32 %v1078, %v1201
      %v1203 = vpop.f32.mrb[0].mxu0
      %1204 = vmatprep.mubr.f32.mxu0 0.0
      %1205 = vmatmul.mubr.f32.gmra.mrb[0].mxu0 %v1054
      %v1206 = vpop.f32.mrb[0].mxu0
      %v1207 = vadd.f32 %v1078, %v1206
      %v1208 = vpop.f32.mrb[0].mxu0
      %1209 = vmatprep.mubr.f32.mxu0 0.0
      %1210 = vmatmul.mubr.f32.gmra.mrb[0].mxu0 %v1055
      %v1211 = vpop.f32.mrb[0].mxu0
      %v1212 = vadd.f32 %v1078, %v1211
      %v1213 = vpop.f32.mrb[0].mxu0
      %1214 = vmatprep.mubr.f32.mxu0 0.0
      %1215 = vmatmul.mubr.f32.gmra.mrb[0].mxu0 %v1056
      %v1216 = vpop.f32.mrb[0].mxu0
      %v1217 = vadd.f32 %v1078, %v1216
      %v1218 = vpop.f32.mrb[0].mxu0
      %1219 = vmatprep.mubr.f32.mxu0 0.0
      %1220 = vmatmul.mubr.f32.gmra.mrb[0].mxu0 %v1057
      %v1221 = vpop.f32.mrb[0].mxu0
      %v1222 = vadd.f32 %v1078, %v1221
      %v1223 = vpop.f32.mrb[0].mxu0
      %1224 = vmatprep.mubr.f32.mxu0 0.0
      %1225 = vmatmul.mubr.f32.gmra.mrb[0].mxu0 %v1058
      %v1226 = vpop.f32.mrb[0].mxu0
      %v1227 = vadd.f32 %v1078, %v1226
      %v1228 = vpop.f32.mrb[0].mxu0
      %1229 = vmatprep.mubr.f32.mxu0 0.0
      %1230 = vmatmul.mubr.f32.gmra.mrb[0].mxu0 %v1059
      %v1231 = vpop.f32.mrb[0].mxu0
      %v1232 = vadd.f32 %v1078, %v1231
      %v1233 = vpop.f32.mrb[0].mxu0
      %1234 = vmatprep.mubr.f32.mxu0 0.0
      %1235 = vmatmul.mubr.f32.gmra.mrb[0].mxu0 %v1060
      %v1236 = vpop.f32.mrb[0].mxu0
      %v1237 = vadd.f32 %v1078, %v1236
      %v1238 = vpop.f32.mrb[0].mxu0
      %1239 = vmatprep.mubr.f32.mxu0 0.0
      %1240 = vmatmul.mubr.f32.gmra.mrb[0].mxu0 %v1061
      %v1241 = vpop.f32.mrb[0].mxu0
      %v1242 = vadd.f32 %v1078, %v1241
      %v1243 = vpop.f32.mrb[0].mxu0
      %1244 = vmatprep.mubr.f32.mxu0 0.0
      %1245 = vmatmul.mubr.f32.gmra.mrb[0].mxu0 %v1062
      %v1246 = vpop.f32.mrb[0].mxu0
      %v1247 = vadd.f32 %v1078, %v1246
      %v1248 = vpop.f32.mrb[0].mxu0
      %1249 = vmatprep.mubr.f32.mxu0 0.0
      %1250 = vmatmul.mubr.f32.gmra.mrb[0].mxu0 %v1063
      %v1251 = vpop.f32.mrb[0].mxu0
      %v1252 = vadd.f32 %v1078, %v1251
      %v1253 = vpop.f32.mrb[0].mxu0
      %1254 = vmatprep.mubr.f32.mxu0 0.0
      %1255 = vmatmul.mubr.f32.gmra.mrb[0].mxu0 %v1064
      %v1256 = vpop.f32.mrb[0].mxu0
      %v1257 = vadd.f32 %v1078, %v1256
      %v1258 = vpop.f32.mrb[0].mxu0
      %1259 = vmatprep.mubr.f32.mxu0 0.0
      %1260 = vmatmul.mubr.f32.gmra.mrb[0].mxu0 %v1065
      %v1261 = vpop.f32.mrb[0].mxu0
      %v1262 = vadd.f32 %v1078, %v1261
      %v1263 = vpop.f32.mrb[0].mxu0
      %1264 = vmatprep.mubr.f32.mxu0 0.0
      %1265 = vmatmul.mubr.f32.gmra.mrb[0].mxu0 %v1066
      %v1266 = vpop.f32.mrb[0].mxu0
      %v1267 = vadd.f32 %v1078, %v1266
      %v1268 = vpop.f32.mrb[0].mxu0
      %1269 = vmatprep.mubr.f32.mxu0 0.0
      %1270 = vmatmul.mubr.f32.gmra.mrb[0].mxu0 %v1067
      %v1271 = vpop.f32.mrb[0].mxu0
      %v1272 = vadd.f32 %v1078, %v1271
      %v1273 = vpop.f32.mrb[0].mxu0
      %1274 = vmatprep.mubr.f32.mxu0 0.0
      %1275 = vmatmul.mubr.f32.gmra.mrb[0].mxu0 %v1068
      %v1276 = vpop.f32.mrb[0].mxu0
      %v1277 = vadd.f32 %v1078, %v1276
      %v1278 = vpop.f32.mrb[0].mxu0
      %1279 = vmatprep.mubr.f32.mxu0 0.0
      %1280 = vmatmul.mubr.f32.gmra.mrb[0].mxu0 %v1069
      %v1281 = vpop.f32.mrb[0].mxu0
      %v1282 = vadd.f32 %v1078, %v1281
      %v1283 = vpop.f32.mrb[0].mxu0
      %1284 = vmatprep.mubr.f32.mxu0 0.0
      %1285 = vmatmul.mubr.f32.gmra.mrb[0].mxu0 %v1070
      %v1286 = vpop.f32.mrb[0].mxu0
      %v1287 = vadd.f32 %v1078, %v1286
      %v1288 = vpop.f32.mrb[0].mxu0
      %1289 = vmatprep.mubr.f32.mxu0 0.0
      %1290 = vmatmul.mubr.f32.gmra.mrb[0].mxu0 %v1071
      %v1291 = vpop.f32.mrb[0].mxu0
      %v1292 = vadd.f32 %v1078, %v1291
      %v1293 = vpop.f32.mrb[0].mxu0
      %1294 = vmatprep.mubr.f32.mxu0 0.0
      %1295 = vmatmul.mubr.f32.gmra.mrb[0].mxu0 %v1072
      %v1296 = vpop.f32.mrb[0].mxu0
      %v1297 = vadd.f32 %v1078, %v1296
      %v1298 = vpop.f32.mrb[0].mxu0
      %1299 = vmatprep.mubr.f32.mxu0 0.0
      %1300 = vmatmul.mubr.f32.gmra.mrb[0].mxu0 %v1073
      %v1301 = vpop.f32.mrb[0].mxu0
      %v1302 = vadd.f32 %v1078, %v1301
      %v1303 = vpop.f32.mrb[0].mxu0
      %1304 = vdwg.mxu0
      %v1305 = vmul.f32 %v1147, %v1147
      %v1306 = vmul.f32 %v1152, %v1152
      %v1307 = vmul.f32 %v1157, %v1157
      %v1308 = vmul.f32 %v1162, %v1162
      %v1309 = vmul.f32 %v1167, %v1167
      %v1310 = vmul.f32 %v1172, %v1172
      %v1311 = vmul.f32 %v1177, %v1177
      %v1312 = vmul.f32 %v1182, %v1182
      %v1313 = vmul.f32 %v1187, %v1187
      %v1314 = vmul.f32 %v1192, %v1192
      %v1315 = vmul.f32 %v1197, %v1197
      %v1316 = vmul.f32 %v1202, %v1202
      %v1317 = vmul.f32 %v1207, %v1207
      %v1318 = vmul.f32 %v1212, %v1212
      %v1319 = vmul.f32 %v1217, %v1217
      %v1320 = vmul.f32 %v1222, %v1222
      %1321 = vadd.xlane.f32.xlu0 %v1305
      %v1322 = vpop.xlane.xlu0 %1321
      %1323 = vadd.xlane.f32.xlu0 %v1306
      %v1324 = vpop.xlane.xlu0 %1323
      %1325 = vadd.xlane.f32.xlu0 %v1307
      %v1326 = vpop.xlane.xlu0 %1325
      %1327 = vadd.xlane.f32.xlu0 %v1308
      %v1328 = vpop.xlane.xlu0 %1327
      %1329 = vadd.xlane.f32.xlu0 %v1309
      %v1330 = vpop.xlane.xlu0 %1329
      %1331 = vadd.xlane.f32.xlu0 %v1310
      %v1332 = vpop.xlane.xlu0 %1331
      %1333 = vadd.xlane.f32.xlu0 %v1311
      %v1334 = vpop.xlane.xlu0 %1333
      %1335 = vadd.xlane.f32.xlu0 %v1312
      %v1336 = vpop.xlane.xlu0 %1335
      %1337 = vadd.xlane.f32.xlu0 %v1313
      %v1338 = vpop.xlane.xlu0 %1337
      %1339 = vadd.xlane.f32.xlu0 %v1314
      %v1340 = vpop.xlane.xlu0 %1339
      %1341 = vadd.xlane.f32.xlu0 %v1315
      %v1342 = vpop.xlane.xlu0 %1341
      %1343 = vadd.xlane.f32.xlu0 %v1316
      %v1344 = vpop.xlane.xlu0 %1343
      %1345 = vadd.xlane.f32.xlu0 %v1317
      %v1346 = vpop.xlane.xlu0 %1345
      %1347 = vadd.xlane.f32.xlu0 %v1318
      %v1348 = vpop.xlane.xlu0 %1347
      %1349 = vadd.xlane.f32.xlu0 %v1319
      %v1350 = vpop.xlane.xlu0 %1349
      %1351 = vadd.xlane.f32.xlu0 %v1320
      %v1352 = vpop.xlane.xlu0 %1351
      %v1353 = vrsqrt.pop %v1322
      %v1354 = vrsqrt.pop %v1324
      %v1355 = vrsqrt.pop %v1326
      %v1356 = vrsqrt.pop %v1328
      %v1357 = vrsqrt.pop %v1330
      %v1358 = vrsqrt.pop %v1332
      %v1359 = vrsqrt.pop %v1334
      %v1360 = vrsqrt.pop %v1336
      %v1361 = vrsqrt.pop %v1338
      %v1362 = vrsqrt.pop %v1340
      %v1363 = vrsqrt.pop %v1342
      %v1364 = vrsqrt.pop %v1344
      %v1365 = vrsqrt.pop %v1346
      %v1366 = vrsqrt.pop %v1348
      %v1367 = vrsqrt.pop %v1350
      %v1368 = vrsqrt.pop %v1352
      %v1369 = vmul.f32 %v1147, %v1353
      %v1370 = vmul.f32 %v1152, %v1354
      %v1371 = vmul.f32 %v1157, %v1355
      %v1372 = vmul.f32 %v1162, %v1356
      %v1373 = vmul.f32 %v1167, %v1357
      %v1374 = vmul.f32 %v1172, %v1358
      %v1375 = vmul.f32 %v1177, %v1359
      %v1376 = vmul.f32 %v1182, %v1360
      %v1377 = vmul.f32 %v1187, %v1361
      %v1378 = vmul.f32 %v1192, %v1362
      %v1379 = vmul.f32 %v1197, %v1363
      %v1380 = vmul.f32 %v1202, %v1364
      %v1381 = vmul.f32 %v1207, %v1365
      %v1382 = vmul.f32 %v1212, %v1366
      %v1383 = vmul.f32 %v1217, %v1367
      %v1384 = vmul.f32 %v1222, %v1368
      %1385 = vst [vmem:[#allocation2] sm:$0xff] %v1369
      %1386 = vst [vmem:[#allocation2 + $0x8] sm:$0xff] %v1370
      %1387 = vst [vmem:[#allocation2 + $0x10] sm:$0xff] %v1371
      %1388 = vst [vmem:[#allocation2 + $0x18] sm:$0xff] %v1372
      %1389 = vst [vmem:[#allocation2 + $0x20] sm:$0xff] %v1373
      %1390 = vst [vmem:[#allocation2 + $0x28] sm:$0xff] %v1374
      %1391 = vst [vmem:[#allocation2 + $0x30] sm:$0xff] %v1375
      %1392 = vst [vmem:[#allocation2 + $0x38] sm:$0xff] %v1376
      %1393 = vst [vmem:[#allocation2 + $0x40] sm:$0xff] %v1377
      %1394 = vst [vmem:[#allocation2 + $0x48] sm:$0xff] %v1378
      %1395 = vst [vmem:[#allocation2 + $0x50] sm:$0xff] %v1379
      %1396 = vst [vmem:[#allocation2 + $0x58] sm:$0xff] %v1380
      %1397 = vst [vmem:[#allocation2 + $0x60] sm:$0xff] %v1381
      %1398 = vst [vmem:[#allocation2 + $0x68] sm:$0xff] %v1382
      %1399 = vst [vmem:[#allocation2 + $0x70] sm:$0xff] %v1383
      %1400 = vst [vmem:[#allocation2 + $0x78] sm:$0xff] %v1384
      %v1401 = vmul.f32 %v1227, %v1227
      %v1402 = vmul.f32 %v1232, %v1232
      %v1403 = vmul.f32 %v1237, %v1237
      %v1404 = vmul.f32 %v1242, %v1242
      %v1405 = vmul.f32 %v1247, %v1247
      %v1406 = vmul.f32 %v1252, %v1252
      %v1407 = vmul.f32 %v1257, %v1257
      %v1408 = vmul.f32 %v1262, %v1262
      %v1409 = vmul.f32 %v1267, %v1267
      %v1410 = vmul.f32 %v1272, %v1272
      %v1411 = vmul.f32 %v1277, %v1277
      %v1412 = vmul.f32 %v1282, %v1282
      %v1413 = vmul.f32 %v1287, %v1287
      %v1414 = vmul.f32 %v1292, %v1292
      %v1415 = vmul.f32 %v1297, %v1297
      %v1416 = vmul.f32 %v1302, %v1302
      %1417 = vadd.xlane.f32.xlu0 %v1401
      %v1418 = vpop.xlane.xlu0 %1417
      %1419 = vadd.xlane.f32.xlu0 %v1402
      %v1420 = vpop.xlane.xlu0 %1419
      %1421 = vadd.xlane.f32.xlu0 %v1403
      %v1422 = vpop.xlane.xlu0 %1421
      %1423 = vadd.xlane.f32.xlu0 %v1404
      %v1424 = vpop.xlane.xlu0 %1423
      %1425 = vadd.xlane.f32.xlu0 %v1405
      %v1426 = vpop.xlane.xlu0 %1425
      %1427 = vadd.xlane.f32.xlu0 %v1406
      %v1428 = vpop.xlane.xlu0 %1427
      %1429 = vadd.xlane.f32.xlu0 %v1407
      %v1430 = vpop.xlane.xlu0 %1429
      %1431 = vadd.xlane.f32.xlu0 %v1408
      %v1432 = vpop.xlane.xlu0 %1431
      %1433 = vadd.xlane.f32.xlu0 %v1409
      %v1434 = vpop.xlane.xlu0 %1433
      %1435 = vadd.xlane.f32.xlu0 %v1410
      %v1436 = vpop.xlane.xlu0 %1435
      %1437 = vadd.xlane.f32.xlu0 %v1411
      %v1438 = vpop.xlane.xlu0 %1437
      %1439 = vadd.xlane.f32.xlu0 %v1412
      %v1440 = vpop.xlane.xlu0 %1439
      %1441 = vadd.xlane.f32.xlu0 %v1413
      %v1442 = vpop.xlane.xlu0 %1441
      %1443 = vadd.xlane.f32.xlu0 %v1414
      %v1444 = vpop.xlane.xlu0 %1443
      %1445 = vadd.xlane.f32.xlu0 %v1415
      %v1446 = vpop.xlane.xlu0 %1445
      %1447 = vadd.xlane.f32.xlu0 %v1416
      %v1448 = vpop.xlane.xlu0 %1447
      %v1449 = vrsqrt.pop %v1418
      %v1450 = vrsqrt.pop %v1420
      %v1451 = vrsqrt.pop %v1422
      %v1452 = vrsqrt.pop %v1424
      %v1453 = vrsqrt.pop %v1426
      %v1454 = vrsqrt.pop %v1428
      %v1455 = vrsqrt.pop %v1430
      %v1456 = vrsqrt.pop %v1432
      %v1457 = vrsqrt.pop %v1434
      %v1458 = vrsqrt.pop %v1436
      %v1459 = vrsqrt.pop %v1438
      %v1460 = vrsqrt.pop %v1440
      %v1461 = vrsqrt.pop %v1442
      %v1462 = vrsqrt.pop %v1444
      %v1463 = vrsqrt.pop %v1446
      %v1464 = vrsqrt.pop %v1448
      %v1465 = vmul.f32 %v1227, %v1449
      %v1466 = vmul.f32 %v1232, %v1450
      %v1467 = vmul.f32 %v1237, %v1451
      %v1468 = vmul.f32 %v1242, %v1452
      %v1469 = vmul.f32 %v1247, %v1453
      %v1470 = vmul.f32 %v1252, %v1454
      %v1471 = vmul.f32 %v1257, %v1455
      %v1472 = vmul.f32 %v1262, %v1456
      %v1473 = vmul.f32 %v1267, %v1457
      %v1474 = vmul.f32 %v1272, %v1458
      %v1475 = vmul.f32 %v1277, %v1459
      %v1476 = vmul.f32 %v1282, %v1460
      %v1477 = vmul.f32 %v1287, %v1461
      %v1478 = vmul.f32 %v1292, %v1462
      %v1479 = vmul.f32 %v1297, %v1463
      %v1480 = vmul.f32 %v1302, %v1464
      %1481 = vst [vmem:[#allocation3] sm:$0xff] %v1465
      %1482 = vst [vmem:[#allocation3 + $0x8] sm:$0xff] %v1466
      %1483 = vst [vmem:[#allocation3 + $0x10] sm:$0xff] %v1467
      %1484 = vst [vmem:[#allocation3 + $0x18] sm:$0xff] %v1468
      %1485 = vst [vmem:[#allocation3 + $0x20] sm:$0xff] %v1469
      %1486 = vst [vmem:[#allocation3 + $0x28] sm:$0xff] %v1470
      %1487 = vst [vmem:[#allocation3 + $0x30] sm:$0xff] %v1471
      %1488 = vst [vmem:[#allocation3 + $0x38] sm:$0xff] %v1472
      %1489 = vst [vmem:[#allocation3 + $0x40] sm:$0xff] %v1473
      %1490 = vst [vmem:[#allocation3 + $0x48] sm:$0xff] %v1474
      %1491 = vst [vmem:[#allocation3 + $0x50] sm:$0xff] %v1475
      %1492 = vst [vmem:[#allocation3 + $0x58] sm:$0xff] %v1476
      %1493 = vst [vmem:[#allocation3 + $0x60] sm:$0xff] %v1477
      %1494 = vst [vmem:[#allocation3 + $0x68] sm:$0xff] %v1478
      %1495 = vst [vmem:[#allocation3 + $0x70] sm:$0xff] %v1479
      %1496 = vst [vmem:[#allocation3 + $0x78] sm:$0xff] %v1480
    $region77: #{embedding_model_forward.1} parent=1 // pred_fallthru
      _
    %v1497 = vld [vmem:[%s0] sm:$0xff]
    %v1498 = vld [vmem:[%s0 + $0x8] sm:$0xff]
    %v1499 = vld [vmem:[%s0 + $0x10] sm:$0xff]
    %v1500 = vld [vmem:[%s0 + $0x18] sm:$0xff]
    %v1501 = vld [vmem:[%s0 + $0x20] sm:$0xff]
    %v1502 = vld [vmem:[%s0 + $0x28] sm:$0xff]
    %v1503 = vld [vmem:[%s0 + $0x30] sm:$0xff]
    %v1504 = vld [vmem:[%s0 + $0x38] sm:$0xff]
    %v1505 = vld [vmem:[%s0 + $0x40] sm:$0xff]
    %v1506 = vld [vmem:[%s0 + $0x48] sm:$0xff]
    %v1507 = vld [vmem:[%s0 + $0x50] sm:$0xff]
    %v1508 = vld [vmem:[%s0 + $0x58] sm:$0xff]
    %v1509 = vld [vmem:[%s0 + $0x60] sm:$0xff]
    %v1510 = vld [vmem:[%s0 + $0x68] sm:$0xff]
    %v1511 = vld [vmem:[%s0 + $0x70] sm:$0xff]
    %v1512 = vld [vmem:[%s0 + $0x78] sm:$0xff]
    %v1513 = vld [vmem:[%s0 + $0x80] sm:$0xff]
    %v1514 = vld [vmem:[%s0 + $0x88] sm:$0xff]
    %v1515 = vld [vmem:[%s0 + $0x90] sm:$0xff]
    %v1516 = vld [vmem:[%s0 + $0x98] sm:$0xff]
    %v1517 = vld [vmem:[%s0 + $0xa0] sm:$0xff]
    %v1518 = vld [vmem:[%s0 + $0xa8] sm:$0xff]
    %v1519 = vld [vmem:[%s0 + $0xb0] sm:$0xff]
    %v1520 = vld [vmem:[%s0 + $0xb8] sm:$0xff]
    %v1521 = vld [vmem:[%s0 + $0xc0] sm:$0xff]
    %v1522 = vld [vmem:[%s0 + $0xc8] sm:$0xff]
    %v1523 = vld [vmem:[%s0 + $0xd0] sm:$0xff]
    %v1524 = vld [vmem:[%s0 + $0xd8] sm:$0xff]
    %v1525 = vld [vmem:[%s0 + $0xe0] sm:$0xff]
    %v1526 = vld [vmem:[%s0 + $0xe8] sm:$0xff]
    %v1527 = vld [vmem:[%s0 + $0xf0] sm:$0xff]
    %v1528 = vld [vmem:[%s0 + $0xf8] sm:$0xff]
    %v1529 = vld [vmem:[#allocation9] sm:$0xff]
    %v1530 = vld [vmem:[#allocation9 + $0x8] sm:$0xff]
    %v1531 = vld [vmem:[#allocation9 + $0x10] sm:$0xff]
    %v1532 = vld [vmem:[#allocation9 + $0x18] sm:$0xff]
    %v1533 = vld [vmem:[#allocation9 + $0x20] sm:$0xff]
    %v1534 = vld [vmem:[#allocation9 + $0x28] sm:$0xff]
    %v1535 = vld [vmem:[#allocation9 + $0x30] sm:$0xff]
    %v1536 = vld [vmem:[#allocation9 + $0x38] sm:$0xff]
    %v1537 = vld [vmem:[#allocation9 + $0x40] sm:$0xff]
    %v1538 = vld [vmem:[#allocation9 + $0x48] sm:$0xff]
    %v1539 = vld [vmem:[#allocation9 + $0x50] sm:$0xff]
    %v1540 = vld [vmem:[#allocation9 + $0x58] sm:$0xff]
    %v1541 = vld [vmem:[#allocation9 + $0x60] sm:$0xff]
    %v1542 = vld [vmem:[#allocation9 + $0x68] sm:$0xff]
    %v1543 = vld [vmem:[#allocation9 + $0x70] sm:$0xff]
    %v1544 = vld [vmem:[#allocation9 + $0x78] sm:$0xff]
    %v1545 = vld [vmem:[#allocation10] sm:$0x1]
    %v1546 = vld [vmem:[#allocation12] sm:$0x1]
    %v1547 = vld [vmem:[#allocation13] sm:$0x1]
    %v1548 = vld [vmem:[#allocation15] sm:$0xff]
    %v1549 = vld [vmem:[#allocation15 + $0x8] sm:$0xff]
    %v1550 = vld [vmem:[#allocation15 + $0x10] sm:$0xff]
    %v1551 = vld [vmem:[#allocation15 + $0x18] sm:$0xff]
    %v1552 = vld [vmem:[#allocation15 + $0x20] sm:$0xff]
    %v1553 = vld [vmem:[#allocation15 + $0x28] sm:$0xff]
    %v1554 = vld [vmem:[#allocation15 + $0x30] sm:$0xff]
    %v1555 = vld [vmem:[#allocation15 + $0x38] sm:$0xff]
    %v1556 = vld [vmem:[#allocation15 + $0x40] sm:$0xff]
    %v1557 = vld [vmem:[#allocation15 + $0x48] sm:$0xff]
    %v1558 = vld [vmem:[#allocation15 + $0x50] sm:$0xff]
    %v1559 = vld [vmem:[#allocation15 + $0x58] sm:$0xff]
    %v1560 = vld [vmem:[#allocation15 + $0x60] sm:$0xff]
    %v1561 = vld [vmem:[#allocation15 + $0x68] sm:$0xff]
    %v1562 = vld [vmem:[#allocation15 + $0x70] sm:$0xff]
    %v1563 = vld [vmem:[#allocation15 + $0x78] sm:$0xff]
    %v1564 = vld [vmem:[#allocation16] sm:$0x1]
    %v1566 = vlaneseq
    %v1567 = vshrl.u32 %v1566, 7
    %v1568 = vsub.s32 0, %v1567
    %v1569 = vrot.slane %v1545, %v1568
    %1571 = vmatprep.subr.mxu0 0.0
    %1572 = vmatpush1.msra.mxu0 %v1529
    %1573 = vmatprep.subr.mxu0 0.0
    %1574 = vmatpush1.msra.mxu0 %v1530
    %1575 = vmatprep.subr.mxu0 0.0
    %1576 = vmatpush1.msra.mxu0 %v1531
    %1577 = vmatprep.subr.mxu0 0.0
    %1578 = vmatpush1.msra.mxu0 %v1532
    %1579 = vmatprep.subr.mxu0 0.0
    %1580 = vmatpush1.msra.mxu0 %v1533
    %1581 = vmatprep.subr.mxu0 0.0
    %1582 = vmatpush1.msra.mxu0 %v1534
    %1583 = vmatprep.subr.mxu0 0.0
    %1584 = vmatpush1.msra.mxu0 %v1535
    %1585 = vmatprep.subr.mxu0 0.0
    %1586 = vmatpush1.msra.mxu0 %v1536
    %1587 = vmatprep.subr.mxu0 0.0
    %1588 = vmatpush1.msra.mxu0 %v1537
    %1589 = vmatprep.subr.mxu0 0.0
    %1590 = vmatpush1.msra.mxu0 %v1538
    %1591 = vmatprep.subr.mxu0 0.0
    %1592 = vmatpush1.msra.mxu0 %v1539
    %1593 = vmatprep.subr.mxu0 0.0
    %1594 = vmatpush1.msra.mxu0 %v1540
    %1595 = vmatprep.subr.mxu0 0.0
    %1596 = vmatpush1.msra.mxu0 %v1541
    %1597 = vmatprep.subr.mxu0 0.0
    %1598 = vmatpush1.msra.mxu0 %v1542
    %1599 = vmatprep.subr.mxu0 0.0
    %1600 = vmatpush1.msra.mxu0 %v1543
    %1601 = vmatprep.subr.mxu0 0.0
    %1602 = vmatpush1.msra.mxu0 %v1544
    %1603 = vmatprep.subr.mxu0 0.0
    %1604 = vmatpush1.msra.mxu0 0.0
    %1605 = vmatprep.subr.mxu0 0.0
    %1606 = vmatpush1.msra.mxu0 0.0
    %1607 = vmatprep.subr.mxu0 0.0
    %1608 = vmatpush1.msra.mxu0 0.0
    %1609 = vmatprep.subr.mxu0 0.0
    %1610 = vmatpush1.msra.mxu0 0.0
    %1611 = vmatprep.subr.mxu0 0.0
    %1612 = vmatpush1.msra.mxu0 0.0
    %1613 = vmatprep.subr.mxu0 0.0
    %1614 = vmatpush1.msra.mxu0 0.0
    %1615 = vmatprep.subr.mxu0 0.0
    %1616 = vmatpush1.msra.mxu0 0.0
    %1617 = vmatprep.subr.mxu0 0.0
    %1618 = vmatpush1.msra.mxu0 0.0
    %1619 = vmatprep.subr.mxu0 0.0
    %1620 = vmatpush1.msra.mxu0 0.0
    %1621 = vmatprep.subr.mxu0 0.0
    %1622 = vmatpush1.msra.mxu0 0.0
    %1623 = vmatprep.subr.mxu0 0.0
    %1624 = vmatpush1.msra.mxu0 0.0
    %1625 = vmatprep.subr.mxu0 0.0
    %1626 = vmatpush1.msra.mxu0 0.0
    %1627 = vmatprep.subr.mxu0 0.0
    %1628 = vmatpush1.msra.mxu0 0.0
    %1629 = vmatprep.subr.mxu0 0.0
    %1630 = vmatpush1.msra.mxu0 0.0
    %1631 = vmatprep.subr.mxu0 0.0
    %1632 = vmatpush1.msra.mxu0 0.0
    %1633 = vmatprep.subr.mxu0 0.0
    %1634 = vmatpush1.msra.mxu0 0.0
    %1635 = vmatprep.mubr.f32.mxu0 0.0
    %1636 = vmatmul.mubr.f32.gmra.mrb[0].mxu0 %v1497
    %v1637 = vpop.f32.mrb[0].mxu0
    %v1638 = vadd.f32 %v1569, %v1637
    %v1639 = vpop.f32.mrb[0].mxu0
    %1640 = vmatprep.mubr.f32.mxu0 0.0
    %1641 = vmatmul.mubr.f32.gmra.mrb[0].mxu0 %v1498
    %v1642 = vpop.f32.mrb[0].mxu0
    %v1643 = vadd.f32 %v1569, %v1642
    %v1644 = vpop.f32.mrb[0].mxu0
    %1645 = vmatprep.mubr.f32.mxu0 0.0
    %1646 = vmatmul.mubr.f32.gmra.mrb[0].mxu0 %v1499
    %v1647 = vpop.f32.mrb[0].mxu0
    %v1648 = vadd.f32 %v1569, %v1647
    %v1649 = vpop.f32.mrb[0].mxu0
    %1650 = vmatprep.mubr.f32.mxu0 0.0
    %1651 = vmatmul.mubr.f32.gmra.mrb[0].mxu0 %v1500
    %v1652 = vpop.f32.mrb[0].mxu0
    %v1653 = vadd.f32 %v1569, %v1652
    %v1654 = vpop.f32.mrb[0].mxu0
    %1655 = vmatprep.mubr.f32.mxu0 0.0
    %1656 = vmatmul.mubr.f32.gmra.mrb[0].mxu0 %v1501
    %v1657 = vpop.f32.mrb[0].mxu0
    %v1658 = vadd.f32 %v1569, %v1657
    %v1659 = vpop.f32.mrb[0].mxu0
    %1660 = vmatprep.mubr.f32.mxu0 0.0
    %1661 = vmatmul.mubr.f32.gmra.mrb[0].mxu0 %v1502
    %v1662 = vpop.f32.mrb[0].mxu0
    %v1663 = vadd.f32 %v1569, %v1662
    %v1664 = vpop.f32.mrb[0].mxu0
    %1665 = vmatprep.mubr.f32.mxu0 0.0
    %1666 = vmatmul.mubr.f32.gmra.mrb[0].mxu0 %v1503
    %v1667 = vpop.f32.mrb[0].mxu0
    %v1668 = vadd.f32 %v1569, %v1667
    %v1669 = vpop.f32.mrb[0].mxu0
    %1670 = vmatprep.mubr.f32.mxu0 0.0
    %1671 = vmatmul.mubr.f32.gmra.mrb[0].mxu0 %v1504
    %v1672 = vpop.f32.mrb[0].mxu0
    %v1673 = vadd.f32 %v1569, %v1672
    %v1674 = vpop.f32.mrb[0].mxu0
    %1675 = vmatprep.mubr.f32.mxu0 0.0
    %1676 = vmatmul.mubr.f32.gmra.mrb[0].mxu0 %v1505
    %v1677 = vpop.f32.mrb[0].mxu0
    %v1678 = vadd.f32 %v1569, %v1677
    %v1679 = vpop.f32.mrb[0].mxu0
    %1680 = vmatprep.mubr.f32.mxu0 0.0
    %1681 = vmatmul.mubr.f32.gmra.mrb[0].mxu0 %v1506
    %v1682 = vpop.f32.mrb[0].mxu0
    %v1683 = vadd.f32 %v1569, %v1682
    %v1684 = vpop.f32.mrb[0].mxu0
    %1685 = vmatprep.mubr.f32.mxu0 0.0
    %1686 = vmatmul.mubr.f32.gmra.mrb[0].mxu0 %v1507
    %v1687 = vpop.f32.mrb[0].mxu0
    %v1688 = vadd.f32 %v1569, %v1687
    %v1689 = vpop.f32.mrb[0].mxu0
    %1690 = vmatprep.mubr.f32.mxu0 0.0
    %1691 = vmatmul.mubr.f32.gmra.mrb[0].mxu0 %v1508
    %v1692 = vpop.f32.mrb[0].mxu0
    %v1693 = vadd.f32 %v1569, %v1692
    %v1694 = vpop.f32.mrb[0].mxu0
    %1695 = vmatprep.mubr.f32.mxu0 0.0
    %1696 = vmatmul.mubr.f32.gmra.mrb[0].mxu0 %v1509
    %v1697 = vpop.f32.mrb[0].mxu0
    %v1698 = vadd.f32 %v1569, %v1697
    %v1699 = vpop.f32.mrb[0].mxu0
    %1700 = vmatprep.mubr.f32.mxu0 0.0
    %1701 = vmatmul.mubr.f32.gmra.mrb[0].mxu0 %v1510
    %v1702 = vpop.f32.mrb[0].mxu0
    %v1703 = vadd.f32 %v1569, %v1702
    %v1704 = vpop.f32.mrb[0].mxu0
    %1705 = vmatprep.mubr.f32.mxu0 0.0
    %1706 = vmatmul.mubr.f32.gmra.mrb[0].mxu0 %v1511
    %v1707 = vpop.f32.mrb[0].mxu0
    %v1708 = vadd.f32 %v1569, %v1707
    %v1709 = vpop.f32.mrb[0].mxu0
    %1710 = vmatprep.mubr.f32.mxu0 0.0
    %1711 = vmatmul.mubr.f32.gmra.mrb[0].mxu0 %v1512
    %v1712 = vpop.f32.mrb[0].mxu0
    %v1713 = vadd.f32 %v1569, %v1712
    %v1714 = vpop.f32.mrb[0].mxu0
    %1715 = vmatprep.mubr.f32.mxu0 0.0
    %1716 = vmatmul.mubr.f32.gmra.mrb[0].mxu0 %v1513
    %v1717 = vpop.f32.mrb[0].mxu0
    %v1718 = vadd.f32 %v1569, %v1717
    %v1719 = vpop.f32.mrb[0].mxu0
    %1720 = vmatprep.mubr.f32.mxu0 0.0
    %1721 = vmatmul.mubr.f32.gmra.mrb[0].mxu0 %v1514
    %v1722 = vpop.f32.mrb[0].mxu0
    %v1723 = vadd.f32 %v1569, %v1722
    %v1724 = vpop.f32.mrb[0].mxu0
    %1725 = vmatprep.mubr.f32.mxu0 0.0
    %1726 = vmatmul.mubr.f32.gmra.mrb[0].mxu0 %v1515
    %v1727 = vpop.f32.mrb[0].mxu0
    %v1728 = vadd.f32 %v1569, %v1727
    %v1729 = vpop.f32.mrb[0].mxu0
    %1730 = vmatprep.mubr.f32.mxu0 0.0
    %1731 = vmatmul.mubr.f32.gmra.mrb[0].mxu0 %v1516
    %v1732 = vpop.f32.mrb[0].mxu0
    %v1733 = vadd.f32 %v1569, %v1732
    %v1734 = vpop.f32.mrb[0].mxu0
    %1735 = vmatprep.mubr.f32.mxu0 0.0
    %1736 = vmatmul.mubr.f32.gmra.mrb[0].mxu0 %v1517
    %v1737 = vpop.f32.mrb[0].mxu0
    %v1738 = vadd.f32 %v1569, %v1737
    %v1739 = vpop.f32.mrb[0].mxu0
    %1740 = vmatprep.mubr.f32.mxu0 0.0
    %1741 = vmatmul.mubr.f32.gmra.mrb[0].mxu0 %v1518
    %v1742 = vpop.f32.mrb[0].mxu0
    %v1743 = vadd.f32 %v1569, %v1742
    %v1744 = vpop.f32.mrb[0].mxu0
    %1745 = vmatprep.mubr.f32.mxu0 0.0
    %1746 = vmatmul.mubr.f32.gmra.mrb[0].mxu0 %v1519
    %v1747 = vpop.f32.mrb[0].mxu0
    %v1748 = vadd.f32 %v1569, %v1747
    %v1749 = vpop.f32.mrb[0].mxu0
    %1750 = vmatprep.mubr.f32.mxu0 0.0
    %1751 = vmatmul.mubr.f32.gmra.mrb[0].mxu0 %v1520
    %v1752 = vpop.f32.mrb[0].mxu0
    %v1753 = vadd.f32 %v1569, %v1752
    %v1754 = vpop.f32.mrb[0].mxu0
    %1755 = vmatprep.mubr.f32.mxu0 0.0
    %1756 = vmatmul.mubr.f32.gmra.mrb[0].mxu0 %v1521
    %v1757 = vpop.f32.mrb[0].mxu0
    %v1758 = vadd.f32 %v1569, %v1757
    %v1759 = vpop.f32.mrb[0].mxu0
    %1760 = vmatprep.mubr.f32.mxu0 0.0
    %1761 = vmatmul.mubr.f32.gmra.mrb[0].mxu0 %v1522
    %v1762 = vpop.f32.mrb[0].mxu0
    %v1763 = vadd.f32 %v1569, %v1762
    %v1764 = vpop.f32.mrb[0].mxu0
    %1765 = vmatprep.mubr.f32.mxu0 0.0
    %1766 = vmatmul.mubr.f32.gmra.mrb[0].mxu0 %v1523
    %v1767 = vpop.f32.mrb[0].mxu0
    %v1768 = vadd.f32 %v1569, %v1767
    %v1769 = vpop.f32.mrb[0].mxu0
    %1770 = vmatprep.mubr.f32.mxu0 0.0
    %1771 = vmatmul.mubr.f32.gmra.mrb[0].mxu0 %v1524
    %v1772 = vpop.f32.mrb[0].mxu0
    %v1773 = vadd.f32 %v1569, %v1772
    %v1774 = vpop.f32.mrb[0].mxu0
    %1775 = vmatprep.mubr.f32.mxu0 0.0
    %1776 = vmatmul.mubr.f32.gmra.mrb[0].mxu0 %v1525
    %v1777 = vpop.f32.mrb[0].mxu0
    %v1778 = vadd.f32 %v1569, %v1777
    %v1779 = vpop.f32.mrb[0].mxu0
    %1780 = vmatprep.mubr.f32.mxu0 0.0
    %1781 = vmatmul.mubr.f32.gmra.mrb[0].mxu0 %v1526
    %v1782 = vpop.f32.mrb[0].mxu0
    %v1783 = vadd.f32 %v1569, %v1782
    %v1784 = vpop.f32.mrb[0].mxu0
    %1785 = vmatprep.mubr.f32.mxu0 0.0
    %1786 = vmatmul.mubr.f32.gmra.mrb[0].mxu0 %v1527
    %v1787 = vpop.f32.mrb[0].mxu0
    %v1788 = vadd.f32 %v1569, %v1787
    %v1789 = vpop.f32.mrb[0].mxu0
    %1790 = vmatprep.mubr.f32.mxu0 0.0
    %1791 = vmatmul.mubr.f32.gmra.mrb[0].mxu0 %v1528
    %v1792 = vpop.f32.mrb[0].mxu0
    %v1793 = vadd.f32 %v1569, %v1792
    %v1794 = vpop.f32.mrb[0].mxu0
    %1795 = vdwg.mxu0
    %1796 = vadd.xlane.f32.xlu0 %v1638
    %v1797 = vpop.xlane.xlu0 %1796
    %1798 = vadd.xlane.f32.xlu0 %v1643
    %v1799 = vpop.xlane.xlu0 %1798
    %1800 = vadd.xlane.f32.xlu0 %v1648
    %v1801 = vpop.xlane.xlu0 %1800
    %1802 = vadd.xlane.f32.xlu0 %v1653
    %v1803 = vpop.xlane.xlu0 %1802
    %1804 = vadd.xlane.f32.xlu0 %v1658
    %v1805 = vpop.xlane.xlu0 %1804
    %1806 = vadd.xlane.f32.xlu0 %v1663
    %v1807 = vpop.xlane.xlu0 %1806
    %1808 = vadd.xlane.f32.xlu0 %v1668
    %v1809 = vpop.xlane.xlu0 %1808
    %1810 = vadd.xlane.f32.xlu0 %v1673
    %v1811 = vpop.xlane.xlu0 %1810
    %1812 = vadd.xlane.f32.xlu0 %v1678
    %v1813 = vpop.xlane.xlu0 %1812
    %1814 = vadd.xlane.f32.xlu0 %v1683
    %v1815 = vpop.xlane.xlu0 %1814
    %1816 = vadd.xlane.f32.xlu0 %v1688
    %v1817 = vpop.xlane.xlu0 %1816
    %1818 = vadd.xlane.f32.xlu0 %v1693
    %v1819 = vpop.xlane.xlu0 %1818
    %1820 = vadd.xlane.f32.xlu0 %v1698
    %v1821 = vpop.xlane.xlu0 %1820
    %1822 = vadd.xlane.f32.xlu0 %v1703
    %v1823 = vpop.xlane.xlu0 %1822
    %1824 = vadd.xlane.f32.xlu0 %v1708
    %v1825 = vpop.xlane.xlu0 %1824
    %1826 = vadd.xlane.f32.xlu0 %v1713
    %v1827 = vpop.xlane.xlu0 %1826
    %1828 = vadd.xlane.f32.xlu0 %v1718
    %v1829 = vpop.xlane.xlu0 %1828
    %1830 = vadd.xlane.f32.xlu0 %v1723
    %v1831 = vpop.xlane.xlu0 %1830
    %1832 = vadd.xlane.f32.xlu0 %v1728
    %v1833 = vpop.xlane.xlu0 %1832
    %1834 = vadd.xlane.f32.xlu0 %v1733
    %v1835 = vpop.xlane.xlu0 %1834
    %1836 = vadd.xlane.f32.xlu0 %v1738
    %v1837 = vpop.xlane.xlu0 %1836
    %1838 = vadd.xlane.f32.xlu0 %v1743
    %v1839 = vpop.xlane.xlu0 %1838
    %1840 = vadd.xlane.f32.xlu0 %v1748
    %v1841 = vpop.xlane.xlu0 %1840
    %1842 = vadd.xlane.f32.xlu0 %v1753
    %v1843 = vpop.xlane.xlu0 %1842
    %1844 = vadd.xlane.f32.xlu0 %v1758
    %v1845 = vpop.xlane.xlu0 %1844
    %1846 = vadd.xlane.f32.xlu0 %v1763
    %v1847 = vpop.xlane.xlu0 %1846
    %1848 = vadd.xlane.f32.xlu0 %v1768
    %v1849 = vpop.xlane.xlu0 %1848
    %1850 = vadd.xlane.f32.xlu0 %v1773
    %v1851 = vpop.xlane.xlu0 %1850
    %1852 = vadd.xlane.f32.xlu0 %v1778
    %v1853 = vpop.xlane.xlu0 %1852
    %1854 = vadd.xlane.f32.xlu0 %v1783
    %v1855 = vpop.xlane.xlu0 %1854
    %1856 = vadd.xlane.f32.xlu0 %v1788
    %v1857 = vpop.xlane.xlu0 %1856
    %1858 = vadd.xlane.f32.xlu0 %v1793
    %v1859 = vpop.xlane.xlu0 %1858
    %v1860 = vmul.f32 %v1638, %v1638
    %v1861 = vmul.f32 %v1643, %v1643
    %v1862 = vmul.f32 %v1648, %v1648
    %v1863 = vmul.f32 %v1653, %v1653
    %v1864 = vmul.f32 %v1658, %v1658
    %v1865 = vmul.f32 %v1663, %v1663
    %v1866 = vmul.f32 %v1668, %v1668
    %v1867 = vmul.f32 %v1673, %v1673
    %v1868 = vmul.f32 %v1678, %v1678
    %v1869 = vmul.f32 %v1683, %v1683
    %v1870 = vmul.f32 %v1688, %v1688
    %v1871 = vmul.f32 %v1693, %v1693
    %v1872 = vmul.f32 %v1698, %v1698
    %v1873 = vmul.f32 %v1703, %v1703
    %v1874 = vmul.f32 %v1708, %v1708
    %v1875 = vmul.f32 %v1713, %v1713
    %v1876 = vmul.f32 %v1718, %v1718
    %v1877 = vmul.f32 %v1723, %v1723
    %v1878 = vmul.f32 %v1728, %v1728
    %v1879 = vmul.f32 %v1733, %v1733
    %v1880 = vmul.f32 %v1738, %v1738
    %v1881 = vmul.f32 %v1743, %v1743
    %v1882 = vmul.f32 %v1748, %v1748
    %v1883 = vmul.f32 %v1753, %v1753
    %v1884 = vmul.f32 %v1758, %v1758
    %v1885 = vmul.f32 %v1763, %v1763
    %v1886 = vmul.f32 %v1768, %v1768
    %v1887 = vmul.f32 %v1773, %v1773
    %v1888 = vmul.f32 %v1778, %v1778
    %v1889 = vmul.f32 %v1783, %v1783
    %v1890 = vmul.f32 %v1788, %v1788
    %v1891 = vmul.f32 %v1793, %v1793
    %1892 = vadd.xlane.f32.xlu0 %v1860
    %v1893 = vpop.xlane.xlu0 %1892
    %1894 = vadd.xlane.f32.xlu0 %v1861
    %v1895 = vpop.xlane.xlu0 %1894
    %1896 = vadd.xlane.f32.xlu0 %v1862
    %v1897 = vpop.xlane.xlu0 %1896
    %1898 = vadd.xlane.f32.xlu0 %v1863
    %v1899 = vpop.xlane.xlu0 %1898
    %1900 = vadd.xlane.f32.xlu0 %v1864
    %v1901 = vpop.xlane.xlu0 %1900
    %1902 = vadd.xlane.f32.xlu0 %v1865
    %v1903 = vpop.xlane.xlu0 %1902
    %1904 = vadd.xlane.f32.xlu0 %v1866
    %v1905 = vpop.xlane.xlu0 %1904
    %1906 = vadd.xlane.f32.xlu0 %v1867
    %v1907 = vpop.xlane.xlu0 %1906
    %1908 = vadd.xlane.f32.xlu0 %v1868
    %v1909 = vpop.xlane.xlu0 %1908
    %1910 = vadd.xlane.f32.xlu0 %v1869
    %v1911 = vpop.xlane.xlu0 %1910
    %1912 = vadd.xlane.f32.xlu0 %v1870
    %v1913 = vpop.xlane.xlu0 %1912
    %1914 = vadd.xlane.f32.xlu0 %v1871
    %v1915 = vpop.xlane.xlu0 %1914
    %1916 = vadd.xlane.f32.xlu0 %v1872
    %v1917 = vpop.xlane.xlu0 %1916
    %1918 = vadd.xlane.f32.xlu0 %v1873
    %v1919 = vpop.xlane.xlu0 %1918
    %1920 = vadd.xlane.f32.xlu0 %v1874
    %v1921 = vpop.xlane.xlu0 %1920
    %1922 = vadd.xlane.f32.xlu0 %v1875
    %v1923 = vpop.xlane.xlu0 %1922
    %1924 = vadd.xlane.f32.xlu0 %v1876
    %v1925 = vpop.xlane.xlu0 %1924
    %1926 = vadd.xlane.f32.xlu0 %v1877
    %v1927 = vpop.xlane.xlu0 %1926
    %1928 = vadd.xlane.f32.xlu0 %v1878
    %v1929 = vpop.xlane.xlu0 %1928
    %1930 = vadd.xlane.f32.xlu0 %v1879
    %v1931 = vpop.xlane.xlu0 %1930
    %1932 = vadd.xlane.f32.xlu0 %v1880
    %v1933 = vpop.xlane.xlu0 %1932
    %1934 = vadd.xlane.f32.xlu0 %v1881
    %v1935 = vpop.xlane.xlu0 %1934
    %1936 = vadd.xlane.f32.xlu0 %v1882
    %v1937 = vpop.xlane.xlu0 %1936
    %1938 = vadd.xlane.f32.xlu0 %v1883
    %v1939 = vpop.xlane.xlu0 %1938
    %1940 = vadd.xlane.f32.xlu0 %v1884
    %v1941 = vpop.xlane.xlu0 %1940
    %1942 = vadd.xlane.f32.xlu0 %v1885
    %v1943 = vpop.xlane.xlu0 %1942
    %1944 = vadd.xlane.f32.xlu0 %v1886
    %v1945 = vpop.xlane.xlu0 %1944
    %1946 = vadd.xlane.f32.xlu0 %v1887
    %v1947 = vpop.xlane.xlu0 %1946
    %1948 = vadd.xlane.f32.xlu0 %v1888
    %v1949 = vpop.xlane.xlu0 %1948
    %1950 = vadd.xlane.f32.xlu0 %v1889
    %v1951 = vpop.xlane.xlu0 %1950
    %1952 = vadd.xlane.f32.xlu0 %v1890
    %v1953 = vpop.xlane.xlu0 %1952
    %1954 = vadd.xlane.f32.xlu0 %v1891
    %v1955 = vpop.xlane.xlu0 %1954
    %v1956 = vmul.f32 %v1797, 0.0078125
    %v1957 = vmul.f32 %v1799, 0.0078125
    %v1958 = vmul.f32 %v1801, 0.0078125
    %v1959 = vmul.f32 %v1803, 0.0078125
    %v1960 = vmul.f32 %v1805, 0.0078125
    %v1961 = vmul.f32 %v1807, 0.0078125
    %v1962 = vmul.f32 %v1809, 0.0078125
    %v1963 = vmul.f32 %v1811, 0.0078125
    %v1964 = vmul.f32 %v1813, 0.0078125
    %v1965 = vmul.f32 %v1815, 0.0078125
    %v1966 = vmul.f32 %v1817, 0.0078125
    %v1967 = vmul.f32 %v1819, 0.0078125
    %v1968 = vmul.f32 %v1821, 0.0078125
    %v1969 = vmul.f32 %v1823, 0.0078125
    %v1970 = vmul.f32 %v1825, 0.0078125
    %v1971 = vmul.f32 %v1827, 0.0078125
    %v1972 = vmul.f32 %v1829, 0.0078125
    %v1973 = vmul.f32 %v1831, 0.0078125
    %v1974 = vmul.f32 %v1833, 0.0078125
    %v1975 = vmul.f32 %v1835, 0.0078125
    %v1976 = vmul.f32 %v1837, 0.0078125
    %v1977 = vmul.f32 %v1839, 0.0078125
    %v1978 = vmul.f32 %v1841, 0.0078125
    %v1979 = vmul.f32 %v1843, 0.0078125
    %v1980 = vmul.f32 %v1845, 0.0078125
    %v1981 = vmul.f32 %v1847, 0.0078125
    %v1982 = vmul.f32 %v1849, 0.0078125
    %v1983 = vmul.f32 %v1851, 0.0078125
    %v1984 = vmul.f32 %v1853, 0.0078125
    %v1985 = vmul.f32 %v1855, 0.0078125
    %v1986 = vmul.f32 %v1857, 0.0078125
    %v1987 = vmul.f32 %v1859, 0.0078125
    %v1988 = vmul.f32 %v1893, 0.0078125
    %v1989 = vmul.f32 %v1895, 0.0078125
    %v1990 = vmul.f32 %v1897, 0.0078125
    %v1991 = vmul.f32 %v1899, 0.0078125
    %v1992 = vmul.f32 %v1901, 0.0078125
    %v1993 = vmul.f32 %v1903, 0.0078125
    %v1994 = vmul.f32 %v1905, 0.0078125
    %v1995 = vmul.f32 %v1907, 0.0078125
    %v1996 = vmul.f32 %v1909, 0.0078125
    %v1997 = vmul.f32 %v1911, 0.0078125
    %v1998 = vmul.f32 %v1913, 0.0078125
    %v1999 = vmul.f32 %v1915, 0.0078125
    %v2000 = vmul.f32 %v1917, 0.0078125
    %v2001 = vmul.f32 %v1919, 0.0078125
    %v2002 = vmul.f32 %v1921, 0.0078125
    %v2003 = vmul.f32 %v1923, 0.0078125
    %v2004 = vmul.f32 %v1925, 0.0078125
    %v2005 = vmul.f32 %v1927, 0.0078125
    %v2006 = vmul.f32 %v1929, 0.0078125
    %v2007 = vmul.f32 %v1931, 0.0078125
    %v2008 = vmul.f32 %v1933, 0.0078125
    %v2009 = vmul.f32 %v1935, 0.0078125
    %v2010 = vmul.f32 %v1937, 0.0078125
    %v2011 = vmul.f32 %v1939, 0.0078125
    %v2012 = vmul.f32 %v1941, 0.0078125
    %v2013 = vmul.f32 %v1943, 0.0078125
    %v2014 = vmul.f32 %v1945, 0.0078125
    %v2015 = vmul.f32 %v1947, 0.0078125
    %v2016 = vmul.f32 %v1949, 0.0078125
    %v2017 = vmul.f32 %v1951, 0.0078125
    %v2018 = vmul.f32 %v1953, 0.0078125
    %v2019 = vmul.f32 %v1955, 0.0078125
    %v2020 = vmul.f32 %v1956, %v1956
    %v2021 = vmul.f32 %v1957, %v1957
    %v2022 = vmul.f32 %v1958, %v1958
    %v2023 = vmul.f32 %v1959, %v1959
    %v2024 = vmul.f32 %v1960, %v1960
    %v2025 = vmul.f32 %v1961, %v1961
    %v2026 = vmul.f32 %v1962, %v1962
    %v2027 = vmul.f32 %v1963, %v1963
    %v2028 = vmul.f32 %v1964, %v1964
    %v2029 = vmul.f32 %v1965, %v1965
    %v2030 = vmul.f32 %v1966, %v1966
    %v2031 = vmul.f32 %v1967, %v1967
    %v2032 = vmul.f32 %v1968, %v1968
    %v2033 = vmul.f32 %v1969, %v1969
    %v2034 = vmul.f32 %v1970, %v1970
    %v2035 = vmul.f32 %v1971, %v1971
    %v2036 = vmul.f32 %v1972, %v1972
    %v2037 = vmul.f32 %v1973, %v1973
    %v2038 = vmul.f32 %v1974, %v1974
    %v2039 = vmul.f32 %v1975, %v1975
    %v2040 = vmul.f32 %v1976, %v1976
    %v2041 = vmul.f32 %v1977, %v1977
    %v2042 = vmul.f32 %v1978, %v1978
    %v2043 = vmul.f32 %v1979, %v1979
    %v2044 = vmul.f32 %v1980, %v1980
    %v2045 = vmul.f32 %v1981, %v1981
    %v2046 = vmul.f32 %v1982, %v1982
    %v2047 = vmul.f32 %v1983, %v1983
    %v2048 = vmul.f32 %v1984, %v1984
    %v2049 = vmul.f32 %v1985, %v1985
    %v2050 = vmul.f32 %v1986, %v1986
    %v2051 = vmul.f32 %v1987, %v1987
    %v2052 = vsub.f32 %v1988, %v2020
    %v2053 = vsub.f32 %v1989, %v2021
    %v2054 = vsub.f32 %v1990, %v2022
    %v2055 = vsub.f32 %v1991, %v2023
    %v2056 = vsub.f32 %v1992, %v2024
    %v2057 = vsub.f32 %v1993, %v2025
    %v2058 = vsub.f32 %v1994, %v2026
    %v2059 = vsub.f32 %v1995, %v2027
    %v2060 = vsub.f32 %v1996, %v2028
    %v2061 = vsub.f32 %v1997, %v2029
    %v2062 = vsub.f32 %v1998, %v2030
    %v2063 = vsub.f32 %v1999, %v2031
    %v2064 = vsub.f32 %v2000, %v2032
    %v2065 = vsub.f32 %v2001, %v2033
    %v2066 = vsub.f32 %v2002, %v2034
    %v2067 = vsub.f32 %v2003, %v2035
    %v2068 = vsub.f32 %v2004, %v2036
    %v2069 = vsub.f32 %v2005, %v2037
    %v2070 = vsub.f32 %v2006, %v2038
    %v2071 = vsub.f32 %v2007, %v2039
    %v2072 = vsub.f32 %v2008, %v2040
    %v2073 = vsub.f32 %v2009, %v2041
    %v2074 = vsub.f32 %v2010, %v2042
    %v2075 = vsub.f32 %v2011, %v2043
    %v2076 = vsub.f32 %v2012, %v2044
    %v2077 = vsub.f32 %v2013, %v2045
    %v2078 = vsub.f32 %v2014, %v2046
    %v2079 = vsub.f32 %v2015, %v2047
    %v2080 = vsub.f32 %v2016, %v2048
    %v2081 = vsub.f32 %v2017, %v2049
    %v2082 = vsub.f32 %v2018, %v2050
    %v2083 = vsub.f32 %v2019, %v2051
    %v2084 = vsub.f32 %v1638, %v1956
    %v2085 = vsub.f32 %v1643, %v1957
    %v2086 = vsub.f32 %v1648, %v1958
    %v2087 = vsub.f32 %v1653, %v1959
    %v2088 = vsub.f32 %v1658, %v1960
    %v2089 = vsub.f32 %v1663, %v1961
    %v2090 = vsub.f32 %v1668, %v1962
    %v2091 = vsub.f32 %v1673, %v1963
    %v2092 = vsub.f32 %v1678, %v1964
    %v2093 = vsub.f32 %v1683, %v1965
    %v2094 = vsub.f32 %v1688, %v1966
    %v2095 = vsub.f32 %v1693, %v1967
    %v2096 = vsub.f32 %v1698, %v1968
    %v2097 = vsub.f32 %v1703, %v1969
    %v2098 = vsub.f32 %v1708, %v1970
    %v2099 = vsub.f32 %v1713, %v1971
    %v2100 = vsub.f32 %v1718, %v1972
    %v2101 = vsub.f32 %v1723, %v1973
    %v2102 = vsub.f32 %v1728, %v1974
    %v2103 = vsub.f32 %v1733, %v1975
    %v2104 = vsub.f32 %v1738, %v1976
    %v2105 = vsub.f32 %v1743, %v1977
    %v2106 = vsub.f32 %v1748, %v1978
    %v2107 = vsub.f32 %v1753, %v1979
    %v2108 = vsub.f32 %v1758, %v1980
    %v2109 = vsub.f32 %v1763, %v1981
    %v2110 = vsub.f32 %v1768, %v1982
    %v2111 = vsub.f32 %v1773, %v1983
    %v2112 = vsub.f32 %v1778, %v1984
    %v2113 = vsub.f32 %v1783, %v1985
    %v2114 = vsub.f32 %v1788, %v1986
    %v2115 = vsub.f32 %v1793, %v1987
    %v2116 = vadd.f32 %v2052, 1e-05
    %v2117 = vadd.f32 %v2053, 1e-05
    %v2118 = vadd.f32 %v2054, 1e-05
    %v2119 = vadd.f32 %v2055, 1e-05
    %v2120 = vadd.f32 %v2056, 1e-05
    %v2121 = vadd.f32 %v2057, 1e-05
    %v2122 = vadd.f32 %v2058, 1e-05
    %v2123 = vadd.f32 %v2059, 1e-05
    %v2124 = vadd.f32 %v2060, 1e-05
    %v2125 = vadd.f32 %v2061, 1e-05
    %v2126 = vadd.f32 %v2062, 1e-05
    %v2127 = vadd.f32 %v2063, 1e-05
    %v2128 = vadd.f32 %v2064, 1e-05
    %v2129 = vadd.f32 %v2065, 1e-05
    %v2130 = vadd.f32 %v2066, 1e-05
    %v2131 = vadd.f32 %v2067, 1e-05
    %v2132 = vadd.f32 %v2068, 1e-05
    %v2133 = vadd.f32 %v2069, 1e-05
    %v2134 = vadd.f32 %v2070, 1e-05
    %v2135 = vadd.f32 %v2071, 1e-05
    %v2136 = vadd.f32 %v2072, 1e-05
    %v2137 = vadd.f32 %v2073, 1e-05
    %v2138 = vadd.f32 %v2074, 1e-05
    %v2139 = vadd.f32 %v2075, 1e-05
    %v2140 = vadd.f32 %v2076, 1e-05
    %v2141 = vadd.f32 %v2077, 1e-05
    %v2142 = vadd.f32 %v2078, 1e-05
    %v2143 = vadd.f32 %v2079, 1e-05
    %v2144 = vadd.f32 %v2080, 1e-05
    %v2145 = vadd.f32 %v2081, 1e-05
    %v2146 = vadd.f32 %v2082, 1e-05
    %v2147 = vadd.f32 %v2083, 1e-05
    %v2148 = vrsqrt.pop %v2116
    %v2149 = vrsqrt.pop %v2117
    %v2150 = vrsqrt.pop %v2118
    %v2151 = vrsqrt.pop %v2119
    %v2152 = vrsqrt.pop %v2120
    %v2153 = vrsqrt.pop %v2121
    %v2154 = vrsqrt.pop %v2122
    %v2155 = vrsqrt.pop %v2123
    %v2156 = vrsqrt.pop %v2124
    %v2157 = vrsqrt.pop %v2125
    %v2158 = vrsqrt.pop %v2126
    %v2159 = vrsqrt.pop %v2127
    %v2160 = vrsqrt.pop %v2128
    %v2161 = vrsqrt.pop %v2129
    %v2162 = vrsqrt.pop %v2130
    %v2163 = vrsqrt.pop %v2131
    %v2164 = vrsqrt.pop %v2132
    %v2165 = vrsqrt.pop %v2133
    %v2166 = vrsqrt.pop %v2134
    %v2167 = vrsqrt.pop %v2135
    %v2168 = vrsqrt.pop %v2136
    %v2169 = vrsqrt.pop %v2137
    %v2170 = vrsqrt.pop %v2138
    %v2171 = vrsqrt.pop %v2139
    %v2172 = vrsqrt.pop %v2140
    %v2173 = vrsqrt.pop %v2141
    %v2174 = vrsqrt.pop %v2142
    %v2175 = vrsqrt.pop %v2143
    %v2176 = vrsqrt.pop %v2144
    %v2177 = vrsqrt.pop %v2145
    %v2178 = vrsqrt.pop %v2146
    %v2179 = vrsqrt.pop %v2147
    %v2180 = vmul.f32 %v2084, %v2148
    %v2181 = vmul.f32 %v2085, %v2149
    %v2182 = vmul.f32 %v2086, %v2150
    %v2183 = vmul.f32 %v2087, %v2151
    %v2184 = vmul.f32 %v2088, %v2152
    %v2185 = vmul.f32 %v2089, %v2153
    %v2186 = vmul.f32 %v2090, %v2154
    %v2187 = vmul.f32 %v2091, %v2155
    %v2188 = vmul.f32 %v2092, %v2156
    %v2189 = vmul.f32 %v2093, %v2157
    %v2190 = vmul.f32 %v2094, %v2158
    %v2191 = vmul.f32 %v2095, %v2159
    %v2192 = vmul.f32 %v2096, %v2160
    %v2193 = vmul.f32 %v2097, %v2161
    %v2194 = vmul.f32 %v2098, %v2162
    %v2195 = vmul.f32 %v2099, %v2163
    %v2196 = vmul.f32 %v2100, %v2164
    %v2197 = vmul.f32 %v2101, %v2165
    %v2198 = vmul.f32 %v2102, %v2166
    %v2199 = vmul.f32 %v2103, %v2167
    %v2200 = vmul.f32 %v2104, %v2168
    %v2201 = vmul.f32 %v2105, %v2169
    %v2202 = vmul.f32 %v2106, %v2170
    %v2203 = vmul.f32 %v2107, %v2171
    %v2204 = vmul.f32 %v2108, %v2172
    %v2205 = vmul.f32 %v2109, %v2173
    %v2206 = vmul.f32 %v2110, %v2174
    %v2207 = vmul.f32 %v2111, %v2175
    %v2208 = vmul.f32 %v2112, %v2176
    %v2209 = vmul.f32 %v2113, %v2177
    %v2210 = vmul.f32 %v2114, %v2178
    %v2211 = vmul.f32 %v2115, %v2179
    %v2213 = vlaneseq
    %v2214 = vshrl.u32 %v2213, 7
    %v2215 = vsub.s32 0, %v2214
    %v2216 = vrot.slane %v1546, %v2215
    %v2218 = vmul.f32 %v2180, %v2216
    %v2219 = vmul.f32 %v2181, %v2216
    %v2220 = vmul.f32 %v2182, %v2216
    %v2221 = vmul.f32 %v2183, %v2216
    %v2222 = vmul.f32 %v2184, %v2216
    %v2223 = vmul.f32 %v2185, %v2216
    %v2224 = vmul.f32 %v2186, %v2216
    %v2225 = vmul.f32 %v2187, %v2216
    %v2226 = vmul.f32 %v2188, %v2216
    %v2227 = vmul.f32 %v2189, %v2216
    %v2228 = vmul.f32 %v2190, %v2216
    %v2229 = vmul.f32 %v2191, %v2216
    %v2230 = vmul.f32 %v2192, %v2216
    %v2231 = vmul.f32 %v2193, %v2216
    %v2232 = vmul.f32 %v2194, %v2216
    %v2233 = vmul.f32 %v2195, %v2216
    %v2234 = vmul.f32 %v2196, %v2216
    %v2235 = vmul.f32 %v2197, %v2216
    %v2236 = vmul.f32 %v2198, %v2216
    %v2237 = vmul.f32 %v2199, %v2216
    %v2238 = vmul.f32 %v2200, %v2216
    %v2239 = vmul.f32 %v2201, %v2216
    %v2240 = vmul.f32 %v2202, %v2216
    %v2241 = vmul.f32 %v2203, %v2216
    %v2242 = vmul.f32 %v2204, %v2216
    %v2243 = vmul.f32 %v2205, %v2216
    %v2244 = vmul.f32 %v2206, %v2216
    %v2245 = vmul.f32 %v2207, %v2216
    %v2246 = vmul.f32 %v2208, %v2216
    %v2247 = vmul.f32 %v2209, %v2216
    %v2248 = vmul.f32 %v2210, %v2216
    %v2249 = vmul.f32 %v2211, %v2216
    %v2251 = vlaneseq
    %v2252 = vshrl.u32 %v2251, 7
    %v2253 = vsub.s32 0, %v2252
    %v2254 = vrot.slane %v1547, %v2253
    %v2256 = vadd.f32 %v2218, %v2254
    %v2257 = vadd.f32 %v2219, %v2254
    %v2258 = vadd.f32 %v2220, %v2254
    %v2259 = vadd.f32 %v2221, %v2254
    %v2260 = vadd.f32 %v2222, %v2254
    %v2261 = vadd.f32 %v2223, %v2254
    %v2262 = vadd.f32 %v2224, %v2254
    %v2263 = vadd.f32 %v2225, %v2254
    %v2264 = vadd.f32 %v2226, %v2254
    %v2265 = vadd.f32 %v2227, %v2254
    %v2266 = vadd.f32 %v2228, %v2254
    %v2267 = vadd.f32 %v2229, %v2254
    %v2268 = vadd.f32 %v2230, %v2254
    %v2269 = vadd.f32 %v2231, %v2254
    %v2270 = vadd.f32 %v2232, %v2254
    %v2271 = vadd.f32 %v2233, %v2254
    %v2272 = vadd.f32 %v2234, %v2254
    %v2273 = vadd.f32 %v2235, %v2254
    %v2274 = vadd.f32 %v2236, %v2254
    %v2275 = vadd.f32 %v2237, %v2254
    %v2276 = vadd.f32 %v2238, %v2254
    %v2277 = vadd.f32 %v2239, %v2254
    %v2278 = vadd.f32 %v2240, %v2254
    %v2279 = vadd.f32 %v2241, %v2254
    %v2280 = vadd.f32 %v2242, %v2254
    %v2281 = vadd.f32 %v2243, %v2254
    %v2282 = vadd.f32 %v2244, %v2254
    %v2283 = vadd.f32 %v2245, %v2254
    %v2284 = vadd.f32 %v2246, %v2254
    %v2285 = vadd.f32 %v2247, %v2254
    %v2286 = vadd.f32 %v2248, %v2254
    %v2287 = vadd.f32 %v2249, %v2254
    %vm2288 = vcmp.gt.f32.partialorder %v2256, 0.0
    %vm2289 = vcmp.gt.f32.partialorder %v2257, 0.0
    %vm2290 = vcmp.gt.f32.partialorder %v2258, 0.0
    %vm2291 = vcmp.gt.f32.partialorder %v2259, 0.0
    %vm2292 = vcmp.gt.f32.partialorder %v2260, 0.0
    %vm2293 = vcmp.gt.f32.partialorder %v2261, 0.0
    %vm2294 = vcmp.gt.f32.partialorder %v2262, 0.0
    %vm2295 = vcmp.gt.f32.partialorder %v2263, 0.0
    %vm2296 = vcmp.gt.f32.partialorder %v2264, 0.0
    %vm2297 = vcmp.gt.f32.partialorder %v2265, 0.0
    %vm2298 = vcmp.gt.f32.partialorder %v2266, 0.0
    %vm2299 = vcmp.gt.f32.partialorder %v2267, 0.0
    %vm2300 = vcmp.gt.f32.partialorder %v2268, 0.0
    %vm2301 = vcmp.gt.f32.partialorder %v2269, 0.0
    %vm2302 = vcmp.gt.f32.partialorder %v2270, 0.0
    %vm2303 = vcmp.gt.f32.partialorder %v2271, 0.0
    %vm2304 = vcmp.gt.f32.partialorder %v2272, 0.0
    %vm2305 = vcmp.gt.f32.partialorder %v2273, 0.0
    %vm2306 = vcmp.gt.f32.partialorder %v2274, 0.0
    %vm2307 = vcmp.gt.f32.partialorder %v2275, 0.0
    %vm2308 = vcmp.gt.f32.partialorder %v2276, 0.0
    %vm2309 = vcmp.gt.f32.partialorder %v2277, 0.0
    %vm2310 = vcmp.gt.f32.partialorder %v2278, 0.0
    %vm2311 = vcmp.gt.f32.partialorder %v2279, 0.0
    %vm2312 = vcmp.gt.f32.partialorder %v2280, 0.0
    %vm2313 = vcmp.gt.f32.partialorder %v2281, 0.0
    %vm2314 = vcmp.gt.f32.partialorder %v2282, 0.0
    %vm2315 = vcmp.gt.f32.partialorder %v2283, 0.0
    %vm2316 = vcmp.gt.f32.partialorder %v2284, 0.0
    %vm2317 = vcmp.gt.f32.partialorder %v2285, 0.0
    %vm2318 = vcmp.gt.f32.partialorder %v2286, 0.0
    %vm2319 = vcmp.gt.f32.partialorder %v2287, 0.0
    %v2320 = vmul.f32 %v2256, 0.01
    %v2321 = vmul.f32 %v2257, 0.01
    %v2322 = vmul.f32 %v2258, 0.01
    %v2323 = vmul.f32 %v2259, 0.01
    %v2324 = vmul.f32 %v2260, 0.01
    %v2325 = vmul.f32 %v2261, 0.01
    %v2326 = vmul.f32 %v2262, 0.01
    %v2327 = vmul.f32 %v2263, 0.01
    %v2328 = vmul.f32 %v2264, 0.01
    %v2329 = vmul.f32 %v2265, 0.01
    %v2330 = vmul.f32 %v2266, 0.01
    %v2331 = vmul.f32 %v2267, 0.01
    %v2332 = vmul.f32 %v2268, 0.01
    %v2333 = vmul.f32 %v2269, 0.01
    %v2334 = vmul.f32 %v2270, 0.01
    %v2335 = vmul.f32 %v2271, 0.01
    %v2336 = vmul.f32 %v2272, 0.01
    %v2337 = vmul.f32 %v2273, 0.01
    %v2338 = vmul.f32 %v2274, 0.01
    %v2339 = vmul.f32 %v2275, 0.01
    %v2340 = vmul.f32 %v2276, 0.01
    %v2341 = vmul.f32 %v2277, 0.01
    %v2342 = vmul.f32 %v2278, 0.01
    %v2343 = vmul.f32 %v2279, 0.01
    %v2344 = vmul.f32 %v2280, 0.01
    %v2345 = vmul.f32 %v2281, 0.01
    %v2346 = vmul.f32 %v2282, 0.01
    %v2347 = vmul.f32 %v2283, 0.01
    %v2348 = vmul.f32 %v2284, 0.01
    %v2349 = vmul.f32 %v2285, 0.01
    %v2350 = vmul.f32 %v2286, 0.01
    %v2351 = vmul.f32 %v2287, 0.01
    %v2352 = vsel %vm2288, %v2256, %v2320
    %v2353 = vsel %vm2289, %v2257, %v2321
    %v2354 = vsel %vm2290, %v2258, %v2322
    %v2355 = vsel %vm2291, %v2259, %v2323
    %v2356 = vsel %vm2292, %v2260, %v2324
    %v2357 = vsel %vm2293, %v2261, %v2325
    %v2358 = vsel %vm2294, %v2262, %v2326
    %v2359 = vsel %vm2295, %v2263, %v2327
    %v2360 = vsel %vm2296, %v2264, %v2328
    %v2361 = vsel %vm2297, %v2265, %v2329
    %v2362 = vsel %vm2298, %v2266, %v2330
    %v2363 = vsel %vm2299, %v2267, %v2331
    %v2364 = vsel %vm2300, %v2268, %v2332
    %v2365 = vsel %vm2301, %v2269, %v2333
    %v2366 = vsel %vm2302, %v2270, %v2334
    %v2367 = vsel %vm2303, %v2271, %v2335
    %v2368 = vsel %vm2304, %v2272, %v2336
    %v2369 = vsel %vm2305, %v2273, %v2337
    %v2370 = vsel %vm2306, %v2274, %v2338
    %v2371 = vsel %vm2307, %v2275, %v2339
    %v2372 = vsel %vm2308, %v2276, %v2340
    %v2373 = vsel %vm2309, %v2277, %v2341
    %v2374 = vsel %vm2310, %v2278, %v2342
    %v2375 = vsel %vm2311, %v2279, %v2343
    %v2376 = vsel %vm2312, %v2280, %v2344
    %v2377 = vsel %vm2313, %v2281, %v2345
    %v2378 = vsel %vm2314, %v2282, %v2346
    %v2379 = vsel %vm2315, %v2283, %v2347
    %v2380 = vsel %vm2316, %v2284, %v2348
    %v2381 = vsel %vm2317, %v2285, %v2349
    %v2382 = vsel %vm2318, %v2286, %v2350
    %v2383 = vsel %vm2319, %v2287, %v2351
    %v2385 = vlaneseq
    %v2386 = vshrl.u32 %v2385, 7
    %v2387 = vsub.s32 0, %v2386
    %v2388 = vrot.slane %v1564, %v2387
    %2390 = vmatprep.subr.mxu0 0.0
    %2391 = vmatpush1.msra.mxu0 %v1548
    %2392 = vmatprep.subr.mxu0 0.0
    %2393 = vmatpush1.msra.mxu0 %v1549
    %2394 = vmatprep.subr.mxu0 0.0
    %2395 = vmatpush1.msra.mxu0 %v1550
    %2396 = vmatprep.subr.mxu0 0.0
    %2397 = vmatpush1.msra.mxu0 %v1551
    %2398 = vmatprep.subr.mxu0 0.0
    %2399 = vmatpush1.msra.mxu0 %v1552
    %2400 = vmatprep.subr.mxu0 0.0
    %2401 = vmatpush1.msra.mxu0 %v1553
    %2402 = vmatprep.subr.mxu0 0.0
    %2403 = vmatpush1.msra.mxu0 %v1554
    %2404 = vmatprep.subr.mxu0 0.0
    %2405 = vmatpush1.msra.mxu0 %v1555
    %2406 = vmatprep.subr.mxu0 0.0
    %2407 = vmatpush1.msra.mxu0 %v1556
    %2408 = vmatprep.subr.mxu0 0.0
    %2409 = vmatpush1.msra.mxu0 %v1557
    %2410 = vmatprep.subr.mxu0 0.0
    %2411 = vmatpush1.msra.mxu0 %v1558
    %2412 = vmatprep.subr.mxu0 0.0
    %2413 = vmatpush1.msra.mxu0 %v1559
    %2414 = vmatprep.subr.mxu0 0.0
    %2415 = vmatpush1.msra.mxu0 %v1560
    %2416 = vmatprep.subr.mxu0 0.0
    %2417 = vmatpush1.msra.mxu0 %v1561
    %2418 = vmatprep.subr.mxu0 0.0
    %2419 = vmatpush1.msra.mxu0 %v1562
    %2420 = vmatprep.subr.mxu0 0.0
    %2421 = vmatpush1.msra.mxu0 %v1563
    %2422 = vmatprep.subr.mxu0 0.0
    %2423 = vmatpush1.msra.mxu0 0.0
    %2424 = vmatprep.subr.mxu0 0.0
    %2425 = vmatpush1.msra.mxu0 0.0
    %2426 = vmatprep.subr.mxu0 0.0
    %2427 = vmatpush1.msra.mxu0 0.0
    %2428 = vmatprep.subr.mxu0 0.0
    %2429 = vmatpush1.msra.mxu0 0.0
    %2430 = vmatprep.subr.mxu0 0.0
    %2431 = vmatpush1.msra.mxu0 0.0
    %2432 = vmatprep.subr.mxu0 0.0
    %2433 = vmatpush1.msra.mxu0 0.0
    %2434 = vmatprep.subr.mxu0 0.0
    %2435 = vmatpush1.msra.mxu0 0.0
    %2436 = vmatprep.subr.mxu0 0.0
    %2437 = vmatpush1.msra.mxu0 0.0
    %2438 = vmatprep.subr.mxu0 0.0
    %2439 = vmatpush1.msra.mxu0 0.0
    %2440 = vmatprep.subr.mxu0 0.0
    %2441 = vmatpush1.msra.mxu0 0.0
    %2442 = vmatprep.subr.mxu0 0.0
    %2443 = vmatpush1.msra.mxu0 0.0
    %2444 = vmatprep.subr.mxu0 0.0
    %2445 = vmatpush1.msra.mxu0 0.0
    %2446 = vmatprep.subr.mxu0 0.0
    %2447 = vmatpush1.msra.mxu0 0.0
    %2448 = vmatprep.subr.mxu0 0.0
    %2449 = vmatpush1.msra.mxu0 0.0
    %2450 = vmatprep.subr.mxu0 0.0
    %2451 = vmatpush1.msra.mxu0 0.0
    %2452 = vmatprep.subr.mxu0 0.0
    %2453 = vmatpush1.msra.mxu0 0.0
    %2454 = vmatprep.mubr.f32.mxu0 0.0
    %2455 = vmatmul.mubr.f32.gmra.mrb[0].mxu0 %v2352
    %v2456 = vpop.f32.mrb[0].mxu0
    %v2457 = vadd.f32 %v2388, %v2456
    %v2458 = vpop.f32.mrb[0].mxu0
    %2459 = vmatprep.mubr.f32.mxu0 0.0
    %2460 = vmatmul.mubr.f32.gmra.mrb[0].mxu0 %v2353
    %v2461 = vpop.f32.mrb[0].mxu0
    %v2462 = vadd.f32 %v2388, %v2461
    %v2463 = vpop.f32.mrb[0].mxu0
    %2464 = vmatprep.mubr.f32.mxu0 0.0
    %2465 = vmatmul.mubr.f32.gmra.mrb[0].mxu0 %v2354
    %v2466 = vpop.f32.mrb[0].mxu0
    %v2467 = vadd.f32 %v2388, %v2466
    %v2468 = vpop.f32.mrb[0].mxu0
    %2469 = vmatprep.mubr.f32.mxu0 0.0
    %2470 = vmatmul.mubr.f32.gmra.mrb[0].mxu0 %v2355
    %v2471 = vpop.f32.mrb[0].mxu0
    %v2472 = vadd.f32 %v2388, %v2471
    %v2473 = vpop.f32.mrb[0].mxu0
    %2474 = vmatprep.mubr.f32.mxu0 0.0
    %2475 = vmatmul.mubr.f32.gmra.mrb[0].mxu0 %v2356
    %v2476 = vpop.f32.mrb[0].mxu0
    %v2477 = vadd.f32 %v2388, %v2476
    %v2478 = vpop.f32.mrb[0].mxu0
    %2479 = vmatprep.mubr.f32.mxu0 0.0
    %2480 = vmatmul.mubr.f32.gmra.mrb[0].mxu0 %v2357
    %v2481 = vpop.f32.mrb[0].mxu0
    %v2482 = vadd.f32 %v2388, %v2481
    %v2483 = vpop.f32.mrb[0].mxu0
    %2484 = vmatprep.mubr.f32.mxu0 0.0
    %2485 = vmatmul.mubr.f32.gmra.mrb[0].mxu0 %v2358
    %v2486 = vpop.f32.mrb[0].mxu0
    %v2487 = vadd.f32 %v2388, %v2486
    %v2488 = vpop.f32.mrb[0].mxu0
    %2489 = vmatprep.mubr.f32.mxu0 0.0
    %2490 = vmatmul.mubr.f32.gmra.mrb[0].mxu0 %v2359
    %v2491 = vpop.f32.mrb[0].mxu0
    %v2492 = vadd.f32 %v2388, %v2491
    %v2493 = vpop.f32.mrb[0].mxu0
    %2494 = vmatprep.mubr.f32.mxu0 0.0
    %2495 = vmatmul.mubr.f32.gmra.mrb[0].mxu0 %v2360
    %v2496 = vpop.f32.mrb[0].mxu0
    %v2497 = vadd.f32 %v2388, %v2496
    %v2498 = vpop.f32.mrb[0].mxu0
    %2499 = vmatprep.mubr.f32.mxu0 0.0
    %2500 = vmatmul.mubr.f32.gmra.mrb[0].mxu0 %v2361
    %v2501 = vpop.f32.mrb[0].mxu0
    %v2502 = vadd.f32 %v2388, %v2501
    %v2503 = vpop.f32.mrb[0].mxu0
    %2504 = vmatprep.mubr.f32.mxu0 0.0
    %2505 = vmatmul.mubr.f32.gmra.mrb[0].mxu0 %v2362
    %v2506 = vpop.f32.mrb[0].mxu0
    %v2507 = vadd.f32 %v2388, %v2506
    %v2508 = vpop.f32.mrb[0].mxu0
    %2509 = vmatprep.mubr.f32.mxu0 0.0
    %2510 = vmatmul.mubr.f32.gmra.mrb[0].mxu0 %v2363
    %v2511 = vpop.f32.mrb[0].mxu0
    %v2512 = vadd.f32 %v2388, %v2511
    %v2513 = vpop.f32.mrb[0].mxu0
    %2514 = vmatprep.mubr.f32.mxu0 0.0
    %2515 = vmatmul.mubr.f32.gmra.mrb[0].mxu0 %v2364
    %v2516 = vpop.f32.mrb[0].mxu0
    %v2517 = vadd.f32 %v2388, %v2516
    %v2518 = vpop.f32.mrb[0].mxu0
    %2519 = vmatprep.mubr.f32.mxu0 0.0
    %2520 = vmatmul.mubr.f32.gmra.mrb[0].mxu0 %v2365
    %v2521 = vpop.f32.mrb[0].mxu0
    %v2522 = vadd.f32 %v2388, %v2521
    %v2523 = vpop.f32.mrb[0].mxu0
    %2524 = vmatprep.mubr.f32.mxu0 0.0
    %2525 = vmatmul.mubr.f32.gmra.mrb[0].mxu0 %v2366
    %v2526 = vpop.f32.mrb[0].mxu0
    %v2527 = vadd.f32 %v2388, %v2526
    %v2528 = vpop.f32.mrb[0].mxu0
    %2529 = vmatprep.mubr.f32.mxu0 0.0
    %2530 = vmatmul.mubr.f32.gmra.mrb[0].mxu0 %v2367
    %v2531 = vpop.f32.mrb[0].mxu0
    %v2532 = vadd.f32 %v2388, %v2531
    %v2533 = vpop.f32.mrb[0].mxu0
    %2534 = vmatprep.mubr.f32.mxu0 0.0
    %2535 = vmatmul.mubr.f32.gmra.mrb[0].mxu0 %v2368
    %v2536 = vpop.f32.mrb[0].mxu0
    %v2537 = vadd.f32 %v2388, %v2536
    %v2538 = vpop.f32.mrb[0].mxu0
    %2539 = vmatprep.mubr.f32.mxu0 0.0
    %2540 = vmatmul.mubr.f32.gmra.mrb[0].mxu0 %v2369
    %v2541 = vpop.f32.mrb[0].mxu0
    %v2542 = vadd.f32 %v2388, %v2541
    %v2543 = vpop.f32.mrb[0].mxu0
    %2544 = vmatprep.mubr.f32.mxu0 0.0
    %2545 = vmatmul.mubr.f32.gmra.mrb[0].mxu0 %v2370
    %v2546 = vpop.f32.mrb[0].mxu0
    %v2547 = vadd.f32 %v2388, %v2546
    %v2548 = vpop.f32.mrb[0].mxu0
    %2549 = vmatprep.mubr.f32.mxu0 0.0
    %2550 = vmatmul.mubr.f32.gmra.mrb[0].mxu0 %v2371
    %v2551 = vpop.f32.mrb[0].mxu0
    %v2552 = vadd.f32 %v2388, %v2551
    %v2553 = vpop.f32.mrb[0].mxu0
    %2554 = vmatprep.mubr.f32.mxu0 0.0
    %2555 = vmatmul.mubr.f32.gmra.mrb[0].mxu0 %v2372
    %v2556 = vpop.f32.mrb[0].mxu0
    %v2557 = vadd.f32 %v2388, %v2556
    %v2558 = vpop.f32.mrb[0].mxu0
    %2559 = vmatprep.mubr.f32.mxu0 0.0
    %2560 = vmatmul.mubr.f32.gmra.mrb[0].mxu0 %v2373
    %v2561 = vpop.f32.mrb[0].mxu0
    %v2562 = vadd.f32 %v2388, %v2561
    %v2563 = vpop.f32.mrb[0].mxu0
    %2564 = vmatprep.mubr.f32.mxu0 0.0
    %2565 = vmatmul.mubr.f32.gmra.mrb[0].mxu0 %v2374
    %v2566 = vpop.f32.mrb[0].mxu0
    %v2567 = vadd.f32 %v2388, %v2566
    %v2568 = vpop.f32.mrb[0].mxu0
    %2569 = vmatprep.mubr.f32.mxu0 0.0
    %2570 = vmatmul.mubr.f32.gmra.mrb[0].mxu0 %v2375
    %v2571 = vpop.f32.mrb[0].mxu0
    %v2572 = vadd.f32 %v2388, %v2571
    %v2573 = vpop.f32.mrb[0].mxu0
    %2574 = vmatprep.mubr.f32.mxu0 0.0
    %2575 = vmatmul.mubr.f32.gmra.mrb[0].mxu0 %v2376
    %v2576 = vpop.f32.mrb[0].mxu0
    %v2577 = vadd.f32 %v2388, %v2576
    %v2578 = vpop.f32.mrb[0].mxu0
    %2579 = vmatprep.mubr.f32.mxu0 0.0
    %2580 = vmatmul.mubr.f32.gmra.mrb[0].mxu0 %v2377
    %v2581 = vpop.f32.mrb[0].mxu0
    %v2582 = vadd.f32 %v2388, %v2581
    %v2583 = vpop.f32.mrb[0].mxu0
    %2584 = vmatprep.mubr.f32.mxu0 0.0
    %2585 = vmatmul.mubr.f32.gmra.mrb[0].mxu0 %v2378
    %v2586 = vpop.f32.mrb[0].mxu0
    %v2587 = vadd.f32 %v2388, %v2586
    %v2588 = vpop.f32.mrb[0].mxu0
    %2589 = vmatprep.mubr.f32.mxu0 0.0
    %2590 = vmatmul.mubr.f32.gmra.mrb[0].mxu0 %v2379
    %v2591 = vpop.f32.mrb[0].mxu0
    %v2592 = vadd.f32 %v2388, %v2591
    %v2593 = vpop.f32.mrb[0].mxu0
    %2594 = vmatprep.mubr.f32.mxu0 0.0
    %2595 = vmatmul.mubr.f32.gmra.mrb[0].mxu0 %v2380
    %v2596 = vpop.f32.mrb[0].mxu0
    %v2597 = vadd.f32 %v2388, %v2596
    %v2598 = vpop.f32.mrb[0].mxu0
    %2599 = vmatprep.mubr.f32.mxu0 0.0
    %2600 = vmatmul.mubr.f32.gmra.mrb[0].mxu0 %v2381
    %v2601 = vpop.f32.mrb[0].mxu0
    %v2602 = vadd.f32 %v2388, %v2601
    %v2603 = vpop.f32.mrb[0].mxu0
    %2604 = vmatprep.mubr.f32.mxu0 0.0
    %2605 = vmatmul.mubr.f32.gmra.mrb[0].mxu0 %v2382
    %v2606 = vpop.f32.mrb[0].mxu0
    %v2607 = vadd.f32 %v2388, %v2606
    %v2608 = vpop.f32.mrb[0].mxu0
    %2609 = vmatprep.mubr.f32.mxu0 0.0
    %2610 = vmatmul.mubr.f32.gmra.mrb[0].mxu0 %v2383
    %v2611 = vpop.f32.mrb[0].mxu0
    %v2612 = vadd.f32 %v2388, %v2611
    %v2613 = vpop.f32.mrb[0].mxu0
    %2614 = vdwg.mxu0
    %v2615 = vld [vmem:[#allocation2] sm:$0xff]
    %v2616 = vld [vmem:[#allocation2 + $0x8] sm:$0xff]
    %v2617 = vld [vmem:[#allocation2 + $0x10] sm:$0xff]
    %v2618 = vld [vmem:[#allocation2 + $0x18] sm:$0xff]
    %v2619 = vld [vmem:[#allocation2 + $0x20] sm:$0xff]
    %v2620 = vld [vmem:[#allocation2 + $0x28] sm:$0xff]
    %v2621 = vld [vmem:[#allocation2 + $0x30] sm:$0xff]
    %v2622 = vld [vmem:[#allocation2 + $0x38] sm:$0xff]
    %v2623 = vld [vmem:[#allocation2 + $0x40] sm:$0xff]
    %v2624 = vld [vmem:[#allocation2 + $0x48] sm:$0xff]
    %v2625 = vld [vmem:[#allocation2 + $0x50] sm:$0xff]
    %v2626 = vld [vmem:[#allocation2 + $0x58] sm:$0xff]
    %v2627 = vld [vmem:[#allocation2 + $0x60] sm:$0xff]
    %v2628 = vld [vmem:[#allocation2 + $0x68] sm:$0xff]
    %v2629 = vld [vmem:[#allocation2 + $0x70] sm:$0xff]
    %v2630 = vld [vmem:[#allocation2 + $0x78] sm:$0xff]
    %v2631 = vmul.f32 %v2457, %v2615
    %v2632 = vmul.f32 %v2462, %v2616
    %v2633 = vmul.f32 %v2467, %v2617
    %v2634 = vmul.f32 %v2472, %v2618
    %v2635 = vmul.f32 %v2477, %v2619
    %v2636 = vmul.f32 %v2482, %v2620
    %v2637 = vmul.f32 %v2487, %v2621
    %v2638 = vmul.f32 %v2492, %v2622
    %v2639 = vmul.f32 %v2497, %v2623
    %v2640 = vmul.f32 %v2502, %v2624
    %v2641 = vmul.f32 %v2507, %v2625
    %v2642 = vmul.f32 %v2512, %v2626
    %v2643 = vmul.f32 %v2517, %v2627
    %v2644 = vmul.f32 %v2522, %v2628
    %v2645 = vmul.f32 %v2527, %v2629
    %v2646 = vmul.f32 %v2532, %v2630
    %v2647 = vmul.f32 %v2537, %v2615
    %v2648 = vmul.f32 %v2542, %v2616
    %v2649 = vmul.f32 %v2547, %v2617
    %v2650 = vmul.f32 %v2552, %v2618
    %v2651 = vmul.f32 %v2557, %v2619
    %v2652 = vmul.f32 %v2562, %v2620
    %v2653 = vmul.f32 %v2567, %v2621
    %v2654 = vmul.f32 %v2572, %v2622
    %v2655 = vmul.f32 %v2577, %v2623
    %v2656 = vmul.f32 %v2582, %v2624
    %v2657 = vmul.f32 %v2587, %v2625
    %v2658 = vmul.f32 %v2592, %v2626
    %v2659 = vmul.f32 %v2597, %v2627
    %v2660 = vmul.f32 %v2602, %v2628
    %v2661 = vmul.f32 %v2607, %v2629
    %v2662 = vmul.f32 %v2612, %v2630
    %2663 = vadd.xlane.f32.xlu0 %v2631
    %v2664 = vpop.xlane.xlu0 %2663
    %2665 = vadd.xlane.f32.xlu0 %v2632
    %v2666 = vpop.xlane.xlu0 %2665
    %2667 = vadd.xlane.f32.xlu0 %v2633
    %v2668 = vpop.xlane.xlu0 %2667
    %2669 = vadd.xlane.f32.xlu0 %v2634
    %v2670 = vpop.xlane.xlu0 %2669
    %2671 = vadd.xlane.f32.xlu0 %v2635
    %v2672 = vpop.xlane.xlu0 %2671
    %2673 = vadd.xlane.f32.xlu0 %v2636
    %v2674 = vpop.xlane.xlu0 %2673
    %2675 = vadd.xlane.f32.xlu0 %v2637
    %v2676 = vpop.xlane.xlu0 %2675
    %2677 = vadd.xlane.f32.xlu0 %v2638
    %v2678 = vpop.xlane.xlu0 %2677
    %2679 = vadd.xlane.f32.xlu0 %v2639
    %v2680 = vpop.xlane.xlu0 %2679
    %2681 = vadd.xlane.f32.xlu0 %v2640
    %v2682 = vpop.xlane.xlu0 %2681
    %2683 = vadd.xlane.f32.xlu0 %v2641
    %v2684 = vpop.xlane.xlu0 %2683
    %2685 = vadd.xlane.f32.xlu0 %v2642
    %v2686 = vpop.xlane.xlu0 %2685
    %2687 = vadd.xlane.f32.xlu0 %v2643
    %v2688 = vpop.xlane.xlu0 %2687
    %2689 = vadd.xlane.f32.xlu0 %v2644
    %v2690 = vpop.xlane.xlu0 %2689
    %2691 = vadd.xlane.f32.xlu0 %v2645
    %v2692 = vpop.xlane.xlu0 %2691
    %2693 = vadd.xlane.f32.xlu0 %v2646
    %v2694 = vpop.xlane.xlu0 %2693
    %2695 = vadd.xlane.f32.xlu0 %v2647
    %v2696 = vpop.xlane.xlu0 %2695
    %2697 = vadd.xlane.f32.xlu0 %v2648
    %v2698 = vpop.xlane.xlu0 %2697
    %2699 = vadd.xlane.f32.xlu0 %v2649
    %v2700 = vpop.xlane.xlu0 %2699
    %2701 = vadd.xlane.f32.xlu0 %v2650
    %v2702 = vpop.xlane.xlu0 %2701
    %2703 = vadd.xlane.f32.xlu0 %v2651
    %v2704 = vpop.xlane.xlu0 %2703
    %2705 = vadd.xlane.f32.xlu0 %v2652
    %v2706 = vpop.xlane.xlu0 %2705
    %2707 = vadd.xlane.f32.xlu0 %v2653
    %v2708 = vpop.xlane.xlu0 %2707
    %2709 = vadd.xlane.f32.xlu0 %v2654
    %v2710 = vpop.xlane.xlu0 %2709
    %2711 = vadd.xlane.f32.xlu0 %v2655
    %v2712 = vpop.xlane.xlu0 %2711
    %2713 = vadd.xlane.f32.xlu0 %v2656
    %v2714 = vpop.xlane.xlu0 %2713
    %2715 = vadd.xlane.f32.xlu0 %v2657
    %v2716 = vpop.xlane.xlu0 %2715
    %2717 = vadd.xlane.f32.xlu0 %v2658
    %v2718 = vpop.xlane.xlu0 %2717
    %2719 = vadd.xlane.f32.xlu0 %v2659
    %v2720 = vpop.xlane.xlu0 %2719
    %2721 = vadd.xlane.f32.xlu0 %v2660
    %v2722 = vpop.xlane.xlu0 %2721
    %2723 = vadd.xlane.f32.xlu0 %v2661
    %v2724 = vpop.xlane.xlu0 %2723
    %2725 = vadd.xlane.f32.xlu0 %v2662
    %v2726 = vpop.xlane.xlu0 %2725
    %v2727 = vld [vmem:[#allocation3] sm:$0xff]
    %v2728 = vld [vmem:[#allocation3 + $0x8] sm:$0xff]
    %v2729 = vld [vmem:[#allocation3 + $0x10] sm:$0xff]
    %v2730 = vld [vmem:[#allocation3 + $0x18] sm:$0xff]
    %v2731 = vld [vmem:[#allocation3 + $0x20] sm:$0xff]
    %v2732 = vld [vmem:[#allocation3 + $0x28] sm:$0xff]
    %v2733 = vld [vmem:[#allocation3 + $0x30] sm:$0xff]
    %v2734 = vld [vmem:[#allocation3 + $0x38] sm:$0xff]
    %v2735 = vld [vmem:[#allocation3 + $0x40] sm:$0xff]
    %v2736 = vld [vmem:[#allocation3 + $0x48] sm:$0xff]
    %v2737 = vld [vmem:[#allocation3 + $0x50] sm:$0xff]
    %v2738 = vld [vmem:[#allocation3 + $0x58] sm:$0xff]
    %v2739 = vld [vmem:[#allocation3 + $0x60] sm:$0xff]
    %v2740 = vld [vmem:[#allocation3 + $0x68] sm:$0xff]
    %v2741 = vld [vmem:[#allocation3 + $0x70] sm:$0xff]
    %v2742 = vld [vmem:[#allocation3 + $0x78] sm:$0xff]
    %v2743 = vmul.f32 %v2457, %v2727
    %v2744 = vmul.f32 %v2462, %v2728
    %v2745 = vmul.f32 %v2467, %v2729
    %v2746 = vmul.f32 %v2472, %v2730
    %v2747 = vmul.f32 %v2477, %v2731
    %v2748 = vmul.f32 %v2482, %v2732
    %v2749 = vmul.f32 %v2487, %v2733
    %v2750 = vmul.f32 %v2492, %v2734
    %v2751 = vmul.f32 %v2497, %v2735
    %v2752 = vmul.f32 %v2502, %v2736
    %v2753 = vmul.f32 %v2507, %v2737
    %v2754 = vmul.f32 %v2512, %v2738
    %v2755 = vmul.f32 %v2517, %v2739
    %v2756 = vmul.f32 %v2522, %v2740
    %v2757 = vmul.f32 %v2527, %v2741
    %v2758 = vmul.f32 %v2532, %v2742
    %v2759 = vmul.f32 %v2537, %v2727
    %v2760 = vmul.f32 %v2542, %v2728
    %v2761 = vmul.f32 %v2547, %v2729
    %v2762 = vmul.f32 %v2552, %v2730
    %v2763 = vmul.f32 %v2557, %v2731
    %v2764 = vmul.f32 %v2562, %v2732
    %v2765 = vmul.f32 %v2567, %v2733
    %v2766 = vmul.f32 %v2572, %v2734
    %v2767 = vmul.f32 %v2577, %v2735
    %v2768 = vmul.f32 %v2582, %v2736
    %v2769 = vmul.f32 %v2587, %v2737
    %v2770 = vmul.f32 %v2592, %v2738
    %v2771 = vmul.f32 %v2597, %v2739
    %v2772 = vmul.f32 %v2602, %v2740
    %v2773 = vmul.f32 %v2607, %v2741
    %v2774 = vmul.f32 %v2612, %v2742
    %2775 = vadd.xlane.f32.xlu0 %v2743
    %v2776 = vpop.xlane.xlu0 %2775
    %2777 = vadd.xlane.f32.xlu0 %v2744
    %v2778 = vpop.xlane.xlu0 %2777
    %2779 = vadd.xlane.f32.xlu0 %v2745
    %v2780 = vpop.xlane.xlu0 %2779
    %2781 = vadd.xlane.f32.xlu0 %v2746
    %v2782 = vpop.xlane.xlu0 %2781
    %2783 = vadd.xlane.f32.xlu0 %v2747
    %v2784 = vpop.xlane.xlu0 %2783
    %2785 = vadd.xlane.f32.xlu0 %v2748
    %v2786 = vpop.xlane.xlu0 %2785
    %2787 = vadd.xlane.f32.xlu0 %v2749
    %v2788 = vpop.xlane.xlu0 %2787
    %2789 = vadd.xlane.f32.xlu0 %v2750
    %v2790 = vpop.xlane.xlu0 %2789
    %2791 = vadd.xlane.f32.xlu0 %v2751
    %v2792 = vpop.xlane.xlu0 %2791
    %2793 = vadd.xlane.f32.xlu0 %v2752
    %v2794 = vpop.xlane.xlu0 %2793
    %2795 = vadd.xlane.f32.xlu0 %v2753
    %v2796 = vpop.xlane.xlu0 %2795
    %2797 = vadd.xlane.f32.xlu0 %v2754
    %v2798 = vpop.xlane.xlu0 %2797
    %2799 = vadd.xlane.f32.xlu0 %v2755
    %v2800 = vpop.xlane.xlu0 %2799
    %2801 = vadd.xlane.f32.xlu0 %v2756
    %v2802 = vpop.xlane.xlu0 %2801
    %2803 = vadd.xlane.f32.xlu0 %v2757
    %v2804 = vpop.xlane.xlu0 %2803
    %2805 = vadd.xlane.f32.xlu0 %v2758
    %v2806 = vpop.xlane.xlu0 %2805
    %2807 = vadd.xlane.f32.xlu0 %v2759
    %v2808 = vpop.xlane.xlu0 %2807
    %2809 = vadd.xlane.f32.xlu0 %v2760
    %v2810 = vpop.xlane.xlu0 %2809
    %2811 = vadd.xlane.f32.xlu0 %v2761
    %v2812 = vpop.xlane.xlu0 %2811
    %2813 = vadd.xlane.f32.xlu0 %v2762
    %v2814 = vpop.xlane.xlu0 %2813
    %2815 = vadd.xlane.f32.xlu0 %v2763
    %v2816 = vpop.xlane.xlu0 %2815
    %2817 = vadd.xlane.f32.xlu0 %v2764
    %v2818 = vpop.xlane.xlu0 %2817
    %2819 = vadd.xlane.f32.xlu0 %v2765
    %v2820 = vpop.xlane.xlu0 %2819
    %2821 = vadd.xlane.f32.xlu0 %v2766
    %v2822 = vpop.xlane.xlu0 %2821
    %2823 = vadd.xlane.f32.xlu0 %v2767
    %v2824 = vpop.xlane.xlu0 %2823
    %2825 = vadd.xlane.f32.xlu0 %v2768
    %v2826 = vpop.xlane.xlu0 %2825
    %2827 = vadd.xlane.f32.xlu0 %v2769
    %v2828 = vpop.xlane.xlu0 %2827
    %2829 = vadd.xlane.f32.xlu0 %v2770
    %v2830 = vpop.xlane.xlu0 %2829
    %2831 = vadd.xlane.f32.xlu0 %v2771
    %v2832 = vpop.xlane.xlu0 %2831
    %2833 = vadd.xlane.f32.xlu0 %v2772
    %v2834 = vpop.xlane.xlu0 %2833
    %2835 = vadd.xlane.f32.xlu0 %v2773
    %v2836 = vpop.xlane.xlu0 %2835
    %2837 = vadd.xlane.f32.xlu0 %v2774
    %v2838 = vpop.xlane.xlu0 %2837
    %v2839 = vmul.f32 %v2457, %v2457
    %v2840 = vmul.f32 %v2462, %v2462
    %v2841 = vmul.f32 %v2467, %v2467
    %v2842 = vmul.f32 %v2472, %v2472
    %v2843 = vmul.f32 %v2477, %v2477
    %v2844 = vmul.f32 %v2482, %v2482
    %v2845 = vmul.f32 %v2487, %v2487
    %v2846 = vmul.f32 %v2492, %v2492
    %v2847 = vmul.f32 %v2497, %v2497
    %v2848 = vmul.f32 %v2502, %v2502
    %v2849 = vmul.f32 %v2507, %v2507
    %v2850 = vmul.f32 %v2512, %v2512
    %v2851 = vmul.f32 %v2517, %v2517
    %v2852 = vmul.f32 %v2522, %v2522
    %v2853 = vmul.f32 %v2527, %v2527
    %v2854 = vmul.f32 %v2532, %v2532
    %v2855 = vmul.f32 %v2537, %v2537
    %v2856 = vmul.f32 %v2542, %v2542
    %v2857 = vmul.f32 %v2547, %v2547
    %v2858 = vmul.f32 %v2552, %v2552
    %v2859 = vmul.f32 %v2557, %v2557
    %v2860 = vmul.f32 %v2562, %v2562
    %v2861 = vmul.f32 %v2567, %v2567
    %v2862 = vmul.f32 %v2572, %v2572
    %v2863 = vmul.f32 %v2577, %v2577
    %v2864 = vmul.f32 %v2582, %v2582
    %v2865 = vmul.f32 %v2587, %v2587
    %v2866 = vmul.f32 %v2592, %v2592
    %v2867 = vmul.f32 %v2597, %v2597
    %v2868 = vmul.f32 %v2602, %v2602
    %v2869 = vmul.f32 %v2607, %v2607
    %v2870 = vmul.f32 %v2612, %v2612
    %2871 = vadd.xlane.f32.xlu0 %v2839
    %v2872 = vpop.xlane.xlu0 %2871
    %2873 = vadd.xlane.f32.xlu0 %v2840
    %v2874 = vpop.xlane.xlu0 %2873
    %2875 = vadd.xlane.f32.xlu0 %v2841
    %v2876 = vpop.xlane.xlu0 %2875
    %2877 = vadd.xlane.f32.xlu0 %v2842
    %v2878 = vpop.xlane.xlu0 %2877
    %2879 = vadd.xlane.f32.xlu0 %v2843
    %v2880 = vpop.xlane.xlu0 %2879
    %2881 = vadd.xlane.f32.xlu0 %v2844
    %v2882 = vpop.xlane.xlu0 %2881
    %2883 = vadd.xlane.f32.xlu0 %v2845
    %v2884 = vpop.xlane.xlu0 %2883
    %2885 = vadd.xlane.f32.xlu0 %v2846
    %v2886 = vpop.xlane.xlu0 %2885
    %2887 = vadd.xlane.f32.xlu0 %v2847
    %v2888 = vpop.xlane.xlu0 %2887
    %2889 = vadd.xlane.f32.xlu0 %v2848
    %v2890 = vpop.xlane.xlu0 %2889
    %2891 = vadd.xlane.f32.xlu0 %v2849
    %v2892 = vpop.xlane.xlu0 %2891
    %2893 = vadd.xlane.f32.xlu0 %v2850
    %v2894 = vpop.xlane.xlu0 %2893
    %2895 = vadd.xlane.f32.xlu0 %v2851
    %v2896 = vpop.xlane.xlu0 %2895
    %2897 = vadd.xlane.f32.xlu0 %v2852
    %v2898 = vpop.xlane.xlu0 %2897
    %2899 = vadd.xlane.f32.xlu0 %v2853
    %v2900 = vpop.xlane.xlu0 %2899
    %2901 = vadd.xlane.f32.xlu0 %v2854
    %v2902 = vpop.xlane.xlu0 %2901
    %2903 = vadd.xlane.f32.xlu0 %v2855
    %v2904 = vpop.xlane.xlu0 %2903
    %2905 = vadd.xlane.f32.xlu0 %v2856
    %v2906 = vpop.xlane.xlu0 %2905
    %2907 = vadd.xlane.f32.xlu0 %v2857
    %v2908 = vpop.xlane.xlu0 %2907
    %2909 = vadd.xlane.f32.xlu0 %v2858
    %v2910 = vpop.xlane.xlu0 %2909
    %2911 = vadd.xlane.f32.xlu0 %v2859
    %v2912 = vpop.xlane.xlu0 %2911
    %2913 = vadd.xlane.f32.xlu0 %v2860
    %v2914 = vpop.xlane.xlu0 %2913
    %2915 = vadd.xlane.f32.xlu0 %v2861
    %v2916 = vpop.xlane.xlu0 %2915
    %2917 = vadd.xlane.f32.xlu0 %v2862
    %v2918 = vpop.xlane.xlu0 %2917
    %2919 = vadd.xlane.f32.xlu0 %v2863
    %v2920 = vpop.xlane.xlu0 %2919
    %2921 = vadd.xlane.f32.xlu0 %v2864
    %v2922 = vpop.xlane.xlu0 %2921
    %2923 = vadd.xlane.f32.xlu0 %v2865
    %v2924 = vpop.xlane.xlu0 %2923
    %2925 = vadd.xlane.f32.xlu0 %v2866
    %v2926 = vpop.xlane.xlu0 %2925
    %2927 = vadd.xlane.f32.xlu0 %v2867
    %v2928 = vpop.xlane.xlu0 %2927
    %2929 = vadd.xlane.f32.xlu0 %v2868
    %v2930 = vpop.xlane.xlu0 %2929
    %2931 = vadd.xlane.f32.xlu0 %v2869
    %v2932 = vpop.xlane.xlu0 %2931
    %2933 = vadd.xlane.f32.xlu0 %v2870
    %v2934 = vpop.xlane.xlu0 %2933
    %v2935 = vrsqrt.pop %v2872
    %v2936 = vrsqrt.pop %v2874
    %v2937 = vrsqrt.pop %v2876
    %v2938 = vrsqrt.pop %v2878
    %v2939 = vrsqrt.pop %v2880
    %v2940 = vrsqrt.pop %v2882
    %v2941 = vrsqrt.pop %v2884
    %v2942 = vrsqrt.pop %v2886
    %v2943 = vrsqrt.pop %v2888
    %v2944 = vrsqrt.pop %v2890
    %v2945 = vrsqrt.pop %v2892
    %v2946 = vrsqrt.pop %v2894
    %v2947 = vrsqrt.pop %v2896
    %v2948 = vrsqrt.pop %v2898
    %v2949 = vrsqrt.pop %v2900
    %v2950 = vrsqrt.pop %v2902
    %v2951 = vrsqrt.pop %v2904
    %v2952 = vrsqrt.pop %v2906
    %v2953 = vrsqrt.pop %v2908
    %v2954 = vrsqrt.pop %v2910
    %v2955 = vrsqrt.pop %v2912
    %v2956 = vrsqrt.pop %v2914
    %v2957 = vrsqrt.pop %v2916
    %v2958 = vrsqrt.pop %v2918
    %v2959 = vrsqrt.pop %v2920
    %v2960 = vrsqrt.pop %v2922
    %v2961 = vrsqrt.pop %v2924
    %v2962 = vrsqrt.pop %v2926
    %v2963 = vrsqrt.pop %v2928
    %v2964 = vrsqrt.pop %v2930
    %v2965 = vrsqrt.pop %v2932
    %v2966 = vrsqrt.pop %v2934
    %v2967 = vmul.f32 %v2664, %v2935
    %v2968 = vmul.f32 %v2666, %v2936
    %v2969 = vmul.f32 %v2668, %v2937
    %v2970 = vmul.f32 %v2670, %v2938
    %v2971 = vmul.f32 %v2672, %v2939
    %v2972 = vmul.f32 %v2674, %v2940
    %v2973 = vmul.f32 %v2676, %v2941
    %v2974 = vmul.f32 %v2678, %v2942
    %v2975 = vmul.f32 %v2680, %v2943
    %v2976 = vmul.f32 %v2682, %v2944
    %v2977 = vmul.f32 %v2684, %v2945
    %v2978 = vmul.f32 %v2686, %v2946
    %v2979 = vmul.f32 %v2688, %v2947
    %v2980 = vmul.f32 %v2690, %v2948
    %v2981 = vmul.f32 %v2692, %v2949
    %v2982 = vmul.f32 %v2694, %v2950
    %v2983 = vmul.f32 %v2696, %v2951
    %v2984 = vmul.f32 %v2698, %v2952
    %v2985 = vmul.f32 %v2700, %v2953
    %v2986 = vmul.f32 %v2702, %v2954
    %v2987 = vmul.f32 %v2704, %v2955
    %v2988 = vmul.f32 %v2706, %v2956
    %v2989 = vmul.f32 %v2708, %v2957
    %v2990 = vmul.f32 %v2710, %v2958
    %v2991 = vmul.f32 %v2712, %v2959
    %v2992 = vmul.f32 %v2714, %v2960
    %v2993 = vmul.f32 %v2716, %v2961
    %v2994 = vmul.f32 %v2718, %v2962
    %v2995 = vmul.f32 %v2720, %v2963
    %v2996 = vmul.f32 %v2722, %v2964
    %v2997 = vmul.f32 %v2724, %v2965
    %v2998 = vmul.f32 %v2726, %v2966
    %v2999 = vmul.f32 %v2776, %v2935
    %v3000 = vmul.f32 %v2778, %v2936
    %v3001 = vmul.f32 %v2780, %v2937
    %v3002 = vmul.f32 %v2782, %v2938
    %v3003 = vmul.f32 %v2784, %v2939
    %v3004 = vmul.f32 %v2786, %v2940
    %v3005 = vmul.f32 %v2788, %v2941
    %v3006 = vmul.f32 %v2790, %v2942
    %v3007 = vmul.f32 %v2792, %v2943
    %v3008 = vmul.f32 %v2794, %v2944
    %v3009 = vmul.f32 %v2796, %v2945
    %v3010 = vmul.f32 %v2798, %v2946
    %v3011 = vmul.f32 %v2800, %v2947
    %v3012 = vmul.f32 %v2802, %v2948
    %v3013 = vmul.f32 %v2804, %v2949
    %v3014 = vmul.f32 %v2806, %v2950
    %v3015 = vmul.f32 %v2808, %v2951
    %v3016 = vmul.f32 %v2810, %v2952
    %v3017 = vmul.f32 %v2812, %v2953
    %v3018 = vmul.f32 %v2814, %v2954
    %v3019 = vmul.f32 %v2816, %v2955
    %v3020 = vmul.f32 %v2818, %v2956
    %v3021 = vmul.f32 %v2820, %v2957
    %v3022 = vmul.f32 %v2822, %v2958
    %v3023 = vmul.f32 %v2824, %v2959
    %v3024 = vmul.f32 %v2826, %v2960
    %v3025 = vmul.f32 %v2828, %v2961
    %v3026 = vmul.f32 %v2830, %v2962
    %v3027 = vmul.f32 %v2832, %v2963
    %v3028 = vmul.f32 %v2834, %v2964
    %v3029 = vmul.f32 %v2836, %v2965
    %v3030 = vmul.f32 %v2838, %v2966
    %vm3031 = vcmp.gt.f32.partialorder %v2967, %v2999
    %vm3032 = vcmp.gt.f32.partialorder %v2968, %v3000
    %vm3033 = vcmp.gt.f32.partialorder %v2969, %v3001
    %vm3034 = vcmp.gt.f32.partialorder %v2970, %v3002
    %vm3035 = vcmp.gt.f32.partialorder %v2971, %v3003
    %vm3036 = vcmp.gt.f32.partialorder %v2972, %v3004
    %vm3037 = vcmp.gt.f32.partialorder %v2973, %v3005
    %vm3038 = vcmp.gt.f32.partialorder %v2974, %v3006
    %vm3039 = vcmp.gt.f32.partialorder %v2975, %v3007
    %vm3040 = vcmp.gt.f32.partialorder %v2976, %v3008
    %vm3041 = vcmp.gt.f32.partialorder %v2977, %v3009
    %vm3042 = vcmp.gt.f32.partialorder %v2978, %v3010
    %vm3043 = vcmp.gt.f32.partialorder %v2979, %v3011
    %vm3044 = vcmp.gt.f32.partialorder %v2980, %v3012
    %vm3045 = vcmp.gt.f32.partialorder %v2981, %v3013
    %vm3046 = vcmp.gt.f32.partialorder %v2982, %v3014
    %vm3047 = vcmp.gt.f32.partialorder %v2983, %v3015
    %vm3048 = vcmp.gt.f32.partialorder %v2984, %v3016
    %vm3049 = vcmp.gt.f32.partialorder %v2985, %v3017
    %vm3050 = vcmp.gt.f32.partialorder %v2986, %v3018
    %vm3051 = vcmp.gt.f32.partialorder %v2987, %v3019
    %vm3052 = vcmp.gt.f32.partialorder %v2988, %v3020
    %vm3053 = vcmp.gt.f32.partialorder %v2989, %v3021
    %vm3054 = vcmp.gt.f32.partialorder %v2990, %v3022
    %vm3055 = vcmp.gt.f32.partialorder %v2991, %v3023
    %vm3056 = vcmp.gt.f32.partialorder %v2992, %v3024
    %vm3057 = vcmp.gt.f32.partialorder %v2993, %v3025
    %vm3058 = vcmp.gt.f32.partialorder %v2994, %v3026
    %vm3059 = vcmp.gt.f32.partialorder %v2995, %v3027
    %vm3060 = vcmp.gt.f32.partialorder %v2996, %v3028
    %vm3061 = vcmp.gt.f32.partialorder %v2997, %v3029
    %vm3062 = vcmp.gt.f32.partialorder %v2998, %v3030
    %v3063 = vsel %vm3031, 1, 0
    %v3064 = vsel %vm3032, 1, 0
    %v3065 = vsel %vm3033, 1, 0
    %v3066 = vsel %vm3034, 1, 0
    %v3067 = vsel %vm3035, 1, 0
    %v3068 = vsel %vm3036, 1, 0
    %v3069 = vsel %vm3037, 1, 0
    %v3070 = vsel %vm3038, 1, 0
    %v3071 = vsel %vm3039, 1, 0
    %v3072 = vsel %vm3040, 1, 0
    %v3073 = vsel %vm3041, 1, 0
    %v3074 = vsel %vm3042, 1, 0
    %v3075 = vsel %vm3043, 1, 0
    %v3076 = vsel %vm3044, 1, 0
    %v3077 = vsel %vm3045, 1, 0
    %v3078 = vsel %vm3046, 1, 0
    %v3079 = vsel %vm3047, 1, 0
    %v3080 = vsel %vm3048, 1, 0
    %v3081 = vsel %vm3049, 1, 0
    %v3082 = vsel %vm3050, 1, 0
    %v3083 = vsel %vm3051, 1, 0
    %v3084 = vsel %vm3052, 1, 0
    %v3085 = vsel %vm3053, 1, 0
    %v3086 = vsel %vm3054, 1, 0
    %v3087 = vsel %vm3055, 1, 0
    %v3088 = vsel %vm3056, 1, 0
    %v3089 = vsel %vm3057, 1, 0
    %v3090 = vsel %vm3058, 1, 0
    %v3091 = vsel %vm3059, 1, 0
    %v3092 = vsel %vm3060, 1, 0
    %v3093 = vsel %vm3061, 1, 0
    %v3094 = vsel %vm3062, 1, 0
    %v3095 = vcvt.s32.f32 %v3063
    %v3096 = vcvt.s32.f32 %v3064
    %v3097 = vcvt.s32.f32 %v3065
    %v3098 = vcvt.s32.f32 %v3066
    %v3099 = vcvt.s32.f32 %v3067
    %v3100 = vcvt.s32.f32 %v3068
    %v3101 = vcvt.s32.f32 %v3069
    %v3102 = vcvt.s32.f32 %v3070
    %v3103 = vcvt.s32.f32 %v3071
    %v3104 = vcvt.s32.f32 %v3072
    %v3105 = vcvt.s32.f32 %v3073
    %v3106 = vcvt.s32.f32 %v3074
    %v3107 = vcvt.s32.f32 %v3075
    %v3108 = vcvt.s32.f32 %v3076
    %v3109 = vcvt.s32.f32 %v3077
    %v3110 = vcvt.s32.f32 %v3078
    %v3111 = vcvt.s32.f32 %v3079
    %v3112 = vcvt.s32.f32 %v3080
    %v3113 = vcvt.s32.f32 %v3081
    %v3114 = vcvt.s32.f32 %v3082
    %v3115 = vcvt.s32.f32 %v3083
    %v3116 = vcvt.s32.f32 %v3084
    %v3117 = vcvt.s32.f32 %v3085
    %v3118 = vcvt.s32.f32 %v3086
    %v3119 = vcvt.s32.f32 %v3087
    %v3120 = vcvt.s32.f32 %v3088
    %v3121 = vcvt.s32.f32 %v3089
    %v3122 = vcvt.s32.f32 %v3090
    %v3123 = vcvt.s32.f32 %v3091
    %v3124 = vcvt.s32.f32 %v3092
    %v3125 = vcvt.s32.f32 %v3093
    %v3126 = vcvt.s32.f32 %v3094
    %v3159 = vlaneseq
    %v3160 = vand.u32 %v3159, 127
    %v3161 = vlaneseq
    %v3162 = vshrl.u32 %v3161, 7
    %v3163 = vsub.s32 %v3160, %v3162
    %v3164 = vrot.slane %v3095, %v3163
    %v3165 = vadd.s32 %v3160, 4294967288
    %v3166 = vlaneseq
    %v3167 = vshrl.u32 %v3166, 7
    %v3168 = vsub.s32 %v3165, %v3167
    %v3169 = vrot.slane %v3096, %v3168
    %vm3170 = vcmask 130112
    %v3171 = vsel %vm3170, %v3169, %v3164
    %v3172 = vadd.s32 %v3160, 4294967280
    %v3173 = vlaneseq
    %v3174 = vshrl.u32 %v3173, 7
    %v3175 = vsub.s32 %v3172, %v3174
    %v3176 = vrot.slane %v3097, %v3175
    %vm3177 = vcmask 195712
    %v3178 = vsel %vm3177, %v3176, %v3171
    %v3179 = vadd.s32 %v3160, 4294967272
    %v3180 = vlaneseq
    %v3181 = vshrl.u32 %v3180, 7
    %v3182 = vsub.s32 %v3179, %v3181
    %v3183 = vrot.slane %v3098, %v3182
    %vm3184 = vcmask 261312
    %v3185 = vsel %vm3184, %v3183, %v3178
    %v3186 = vadd.s32 %v3160, 4294967264
    %v3187 = vlaneseq
    %v3188 = vshrl.u32 %v3187, 7
    %v3189 = vsub.s32 %v3186, %v3188
    %v3190 = vrot.slane %v3099, %v3189
    %vm3191 = vcmask 326912
    %v3192 = vsel %vm3191, %v3190, %v3185
    %v3193 = vadd.s32 %v3160, 4294967256
    %v3194 = vlaneseq
    %v3195 = vshrl.u32 %v3194, 7
    %v3196 = vsub.s32 %v3193, %v3195
    %v3197 = vrot.slane %v3100, %v3196
    %vm3198 = vcmask 392512
    %v3199 = vsel %vm3198, %v3197, %v3192
    %v3200 = vadd.s32 %v3160, 4294967248
    %v3201 = vlaneseq
    %v3202 = vshrl.u32 %v3201, 7
    %v3203 = vsub.s32 %v3200, %v3202
    %v3204 = vrot.slane %v3101, %v3203
    %vm3205 = vcmask 458112
    %v3206 = vsel %vm3205, %v3204, %v3199
    %v3207 = vadd.s32 %v3160, 4294967240
    %v3208 = vlaneseq
    %v3209 = vshrl.u32 %v3208, 7
    %v3210 = vsub.s32 %v3207, %v3209
    %v3211 = vrot.slane %v3102, %v3210
    %vm3212 = vcmask 523712
    %v3213 = vsel %vm3212, %v3211, %v3206
    %v3214 = vadd.s32 %v3160, 4294967232
    %v3215 = vlaneseq
    %v3216 = vshrl.u32 %v3215, 7
    %v3217 = vsub.s32 %v3214, %v3216
    %v3218 = vrot.slane %v3103, %v3217
    %vm3219 = vcmask 589312
    %v3220 = vsel %vm3219, %v3218, %v3213
    %v3221 = vadd.s32 %v3160, 4294967224
    %v3222 = vlaneseq
    %v3223 = vshrl.u32 %v3222, 7
    %v3224 = vsub.s32 %v3221, %v3223
    %v3225 = vrot.slane %v3104, %v3224
    %vm3226 = vcmask 654912
    %v3227 = vsel %vm3226, %v3225, %v3220
    %v3228 = vadd.s32 %v3160, 4294967216
    %v3229 = vlaneseq
    %v3230 = vshrl.u32 %v3229, 7
    %v3231 = vsub.s32 %v3228, %v3230
    %v3232 = vrot.slane %v3105, %v3231
    %vm3233 = vcmask 720512
    %v3234 = vsel %vm3233, %v3232, %v3227
    %v3235 = vadd.s32 %v3160, 4294967208
    %v3236 = vlaneseq
    %v3237 = vshrl.u32 %v3236, 7
    %v3238 = vsub.s32 %v3235, %v3237
    %v3239 = vrot.slane %v3106, %v3238
    %vm3240 = vcmask 786112
    %v3241 = vsel %vm3240, %v3239, %v3234
    %v3242 = vadd.s32 %v3160, 4294967200
    %v3243 = vlaneseq
    %v3244 = vshrl.u32 %v3243, 7
    %v3245 = vsub.s32 %v3242, %v3244
    %v3246 = vrot.slane %v3107, %v3245
    %vm3247 = vcmask 851712
    %v3248 = vsel %vm3247, %v3246, %v3241
    %v3249 = vadd.s32 %v3160, 4294967192
    %v3250 = vlaneseq
    %v3251 = vshrl.u32 %v3250, 7
    %v3252 = vsub.s32 %v3249, %v3251
    %v3253 = vrot.slane %v3108, %v3252
    %vm3254 = vcmask 917312
    %v3255 = vsel %vm3254, %v3253, %v3248
    %v3256 = vadd.s32 %v3160, 4294967184
    %v3257 = vlaneseq
    %v3258 = vshrl.u32 %v3257, 7
    %v3259 = vsub.s32 %v3256, %v3258
    %v3260 = vrot.slane %v3109, %v3259
    %vm3261 = vcmask 982912
    %v3262 = vsel %vm3261, %v3260, %v3255
    %v3263 = vadd.s32 %v3160, 4294967176
    %v3264 = vlaneseq
    %v3265 = vshrl.u32 %v3264, 7
    %v3266 = vsub.s32 %v3263, %v3265
    %v3267 = vrot.slane %v3110, %v3266
    %vm3268 = vcmask 1048512
    %v3269 = vsel %vm3268, %v3267, %v3262
    %v3270 = vlaneseq
    %v3271 = vshrl.u32 %v3270, 7
    %v3272 = vsub.s32 %v3160, %v3271
    %v3273 = vrot.slane %v3111, %v3272
    %v3274 = vlaneseq
    %v3275 = vshrl.u32 %v3274, 7
    %v3276 = vsub.s32 %v3165, %v3275
    %v3277 = vrot.slane %v3112, %v3276
    %v3278 = vsel %vm3170, %v3277, %v3273
    %v3279 = vlaneseq
    %v3280 = vshrl.u32 %v3279, 7
    %v3281 = vsub.s32 %v3172, %v3280
    %v3282 = vrot.slane %v3113, %v3281
    %v3283 = vsel %vm3177, %v3282, %v3278
    %v3284 = vlaneseq
    %v3285 = vshrl.u32 %v3284, 7
    %v3286 = vsub.s32 %v3179, %v3285
    %v3287 = vrot.slane %v3114, %v3286
    %v3288 = vsel %vm3184, %v3287, %v3283
    %v3289 = vlaneseq
    %v3290 = vshrl.u32 %v3289, 7
    %v3291 = vsub.s32 %v3186, %v3290
    %v3292 = vrot.slane %v3115, %v3291
    %v3293 = vsel %vm3191, %v3292, %v3288
    %v3294 = vlaneseq
    %v3295 = vshrl.u32 %v3294, 7
    %v3296 = vsub.s32 %v3193, %v3295
    %v3297 = vrot.slane %v3116, %v3296
    %v3298 = vsel %vm3198, %v3297, %v3293
    %v3299 = vlaneseq
    %v3300 = vshrl.u32 %v3299, 7
    %v3301 = vsub.s32 %v3200, %v3300
    %v3302 = vrot.slane %v3117, %v3301
    %v3303 = vsel %vm3205, %v3302, %v3298
    %v3304 = vlaneseq
    %v3305 = vshrl.u32 %v3304, 7
    %v3306 = vsub.s32 %v3207, %v3305
    %v3307 = vrot.slane %v3118, %v3306
    %v3308 = vsel %vm3212, %v3307, %v3303
    %v3309 = vlaneseq
    %v3310 = vshrl.u32 %v3309, 7
    %v3311 = vsub.s32 %v3214, %v3310
    %v3312 = vrot.slane %v3119, %v3311
    %v3313 = vsel %vm3219, %v3312, %v3308
    %v3314 = vlaneseq
    %v3315 = vshrl.u32 %v3314, 7
    %v3316 = vsub.s32 %v3221, %v3315
    %v3317 = vrot.slane %v3120, %v3316
    %v3318 = vsel %vm3226, %v3317, %v3313
    %v3319 = vlaneseq
    %v3320 = vshrl.u32 %v3319, 7
    %v3321 = vsub.s32 %v3228, %v3320
    %v3322 = vrot.slane %v3121, %v3321
    %v3323 = vsel %vm3233, %v3322, %v3318
    %v3324 = vlaneseq
    %v3325 = vshrl.u32 %v3324, 7
    %v3326 = vsub.s32 %v3235, %v3325
    %v3327 = vrot.slane %v3122, %v3326
    %v3328 = vsel %vm3240, %v3327, %v3323
    %v3329 = vlaneseq
    %v3330 = vshrl.u32 %v3329, 7
    %v3331 = vsub.s32 %v3242, %v3330
    %v3332 = vrot.slane %v3123, %v3331
    %v3333 = vsel %vm3247, %v3332, %v3328
    %v3334 = vlaneseq
    %v3335 = vshrl.u32 %v3334, 7
    %v3336 = vsub.s32 %v3249, %v3335
    %v3337 = vrot.slane %v3124, %v3336
    %v3338 = vsel %vm3254, %v3337, %v3333
    %v3339 = vlaneseq
    %v3340 = vshrl.u32 %v3339, 7
    %v3341 = vsub.s32 %v3256, %v3340
    %v3342 = vrot.slane %v3125, %v3341
    %v3343 = vsel %vm3261, %v3342, %v3338
    %v3344 = vlaneseq
    %v3345 = vshrl.u32 %v3344, 7
    %v3346 = vsub.s32 %v3263, %v3345
    %v3347 = vrot.slane %v3126, %v3346
    %v3348 = vsel %vm3268, %v3347, %v3343
    %vm3349 = vcmask 1041409
    %v3350 = vsel %vm3349, %v3348, %v3269
    %3352 = vst [vmem:[#allocation18] sm:$0x3] %v3350
    %v3385 = vlaneseq
    %v3386 = vshrl.u32 %v3385, 7
    %v3387 = vsub.s32 %v3160, %v3386
    %v3388 = vrot.slane %v2967, %v3387
    %v3389 = vlaneseq
    %v3390 = vshrl.u32 %v3389, 7
    %v3391 = vsub.s32 %v3165, %v3390
    %v3392 = vrot.slane %v2968, %v3391
    %v3393 = vsel %vm3170, %v3392, %v3388
    %v3394 = vlaneseq
    %v3395 = vshrl.u32 %v3394, 7
    %v3396 = vsub.s32 %v3172, %v3395
    %v3397 = vrot.slane %v2969, %v3396
    %v3398 = vsel %vm3177, %v3397, %v3393
    %v3399 = vlaneseq
    %v3400 = vshrl.u32 %v3399, 7
    %v3401 = vsub.s32 %v3179, %v3400
    %v3402 = vrot.slane %v2970, %v3401
    %v3403 = vsel %vm3184, %v3402, %v3398
    %v3404 = vlaneseq
    %v3405 = vshrl.u32 %v3404, 7
    %v3406 = vsub.s32 %v3186, %v3405
    %v3407 = vrot.slane %v2971, %v3406
    %v3408 = vsel %vm3191, %v3407, %v3403
    %v3409 = vlaneseq
    %v3410 = vshrl.u32 %v3409, 7
    %v3411 = vsub.s32 %v3193, %v3410
    %v3412 = vrot.slane %v2972, %v3411
    %v3413 = vsel %vm3198, %v3412, %v3408
    %v3414 = vlaneseq
    %v3415 = vshrl.u32 %v3414, 7
    %v3416 = vsub.s32 %v3200, %v3415
    %v3417 = vrot.slane %v2973, %v3416
    %v3418 = vsel %vm3205, %v3417, %v3413
    %v3419 = vlaneseq
    %v3420 = vshrl.u32 %v3419, 7
    %v3421 = vsub.s32 %v3207, %v3420
    %v3422 = vrot.slane %v2974, %v3421
    %v3423 = vsel %vm3212, %v3422, %v3418
    %v3424 = vlaneseq
    %v3425 = vshrl.u32 %v3424, 7
    %v3426 = vsub.s32 %v3214, %v3425
    %v3427 = vrot.slane %v2975, %v3426
    %v3428 = vsel %vm3219, %v3427, %v3423
    %v3429 = vlaneseq
    %v3430 = vshrl.u32 %v3429, 7
    %v3431 = vsub.s32 %v3221, %v3430
    %v3432 = vrot.slane %v2976, %v3431
    %v3433 = vsel %vm3226, %v3432, %v3428
    %v3434 = vlaneseq
    %v3435 = vshrl.u32 %v3434, 7
    %v3436 = vsub.s32 %v3228, %v3435
    %v3437 = vrot.slane %v2977, %v3436
    %v3438 = vsel %vm3233, %v3437, %v3433
    %v3439 = vlaneseq
    %v3440 = vshrl.u32 %v3439, 7
    %v3441 = vsub.s32 %v3235, %v3440
    %v3442 = vrot.slane %v2978, %v3441
    %v3443 = vsel %vm3240, %v3442, %v3438
    %v3444 = vlaneseq
    %v3445 = vshrl.u32 %v3444, 7
    %v3446 = vsub.s32 %v3242, %v3445
    %v3447 = vrot.slane %v2979, %v3446
    %v3448 = vsel %vm3247, %v3447, %v3443
    %v3449 = vlaneseq
    %v3450 = vshrl.u32 %v3449, 7
    %v3451 = vsub.s32 %v3249, %v3450
    %v3452 = vrot.slane %v2980, %v3451
    %v3453 = vsel %vm3254, %v3452, %v3448
    %v3454 = vlaneseq
    %v3455 = vshrl.u32 %v3454, 7
    %v3456 = vsub.s32 %v3256, %v3455
    %v3457 = vrot.slane %v2981, %v3456
    %v3458 = vsel %vm3261, %v3457, %v3453
    %v3459 = vlaneseq
    %v3460 = vshrl.u32 %v3459, 7
    %v3461 = vsub.s32 %v3263, %v3460
    %v3462 = vrot.slane %v2982, %v3461
    %v3463 = vsel %vm3268, %v3462, %v3458
    %v3464 = vlaneseq
    %v3465 = vshrl.u32 %v3464, 7
    %v3466 = vsub.s32 %v3160, %v3465
    %v3467 = vrot.slane %v2983, %v3466
    %v3468 = vlaneseq
    %v3469 = vshrl.u32 %v3468, 7
    %v3470 = vsub.s32 %v3165, %v3469
    %v3471 = vrot.slane %v2984, %v3470
    %v3472 = vsel %vm3170, %v3471, %v3467
    %v3473 = vlaneseq
    %v3474 = vshrl.u32 %v3473, 7
    %v3475 = vsub.s32 %v3172, %v3474
    %v3476 = vrot.slane %v2985, %v3475
    %v3477 = vsel %vm3177, %v3476, %v3472
    %v3478 = vlaneseq
    %v3479 = vshrl.u32 %v3478, 7
    %v3480 = vsub.s32 %v3179, %v3479
    %v3481 = vrot.slane %v2986, %v3480
    %v3482 = vsel %vm3184, %v3481, %v3477
    %v3483 = vlaneseq
    %v3484 = vshrl.u32 %v3483, 7
    %v3485 = vsub.s32 %v3186, %v3484
    %v3486 = vrot.slane %v2987, %v3485
    %v3487 = vsel %vm3191, %v3486, %v3482
    %v3488 = vlaneseq
    %v3489 = vshrl.u32 %v3488, 7
    %v3490 = vsub.s32 %v3193, %v3489
    %v3491 = vrot.slane %v2988, %v3490
    %v3492 = vsel %vm3198, %v3491, %v3487
    %v3493 = vlaneseq
    %v3494 = vshrl.u32 %v3493, 7
    %v3495 = vsub.s32 %v3200, %v3494
    %v3496 = vrot.slane %v2989, %v3495
    %v3497 = vsel %vm3205, %v3496, %v3492
    %v3498 = vlaneseq
    %v3499 = vshrl.u32 %v3498, 7
    %v3500 = vsub.s32 %v3207, %v3499
    %v3501 = vrot.slane %v2990, %v3500
    %v3502 = vsel %vm3212, %v3501, %v3497
    %v3503 = vlaneseq
    %v3504 = vshrl.u32 %v3503, 7
    %v3505 = vsub.s32 %v3214, %v3504
    %v3506 = vrot.slane %v2991, %v3505
    %v3507 = vsel %vm3219, %v3506, %v3502
    %v3508 = vlaneseq
    %v3509 = vshrl.u32 %v3508, 7
    %v3510 = vsub.s32 %v3221, %v3509
    %v3511 = vrot.slane %v2992, %v3510
    %v3512 = vsel %vm3226, %v3511, %v3507
    %v3513 = vlaneseq
    %v3514 = vshrl.u32 %v3513, 7
    %v3515 = vsub.s32 %v3228, %v3514
    %v3516 = vrot.slane %v2993, %v3515
    %v3517 = vsel %vm3233, %v3516, %v3512
    %v3518 = vlaneseq
    %v3519 = vshrl.u32 %v3518, 7
    %v3520 = vsub.s32 %v3235, %v3519
    %v3521 = vrot.slane %v2994, %v3520
    %v3522 = vsel %vm3240, %v3521, %v3517
    %v3523 = vlaneseq
    %v3524 = vshrl.u32 %v3523, 7
    %v3525 = vsub.s32 %v3242, %v3524
    %v3526 = vrot.slane %v2995, %v3525
    %v3527 = vsel %vm3247, %v3526, %v3522
    %v3528 = vlaneseq
    %v3529 = vshrl.u32 %v3528, 7
    %v3530 = vsub.s32 %v3249, %v3529
    %v3531 = vrot.slane %v2996, %v3530
    %v3532 = vsel %vm3254, %v3531, %v3527
    %v3533 = vlaneseq
    %v3534 = vshrl.u32 %v3533, 7
    %v3535 = vsub.s32 %v3256, %v3534
    %v3536 = vrot.slane %v2997, %v3535
    %v3537 = vsel %vm3261, %v3536, %v3532
    %v3538 = vlaneseq
    %v3539 = vshrl.u32 %v3538, 7
    %v3540 = vsub.s32 %v3263, %v3539
    %v3541 = vrot.slane %v2998, %v3540
    %v3542 = vsel %vm3268, %v3541, %v3537
    %v3543 = vsel %vm3349, %v3542, %v3463
    %3545 = vst [vmem:[#allocation19] sm:$0x3] %v3543
    %v3578 = vlaneseq
    %v3579 = vshrl.u32 %v3578, 7
    %v3580 = vsub.s32 %v3160, %v3579
    %v3581 = vrot.slane %v2999, %v3580
    %v3582 = vlaneseq
    %v3583 = vshrl.u32 %v3582, 7
    %v3584 = vsub.s32 %v3165, %v3583
    %v3585 = vrot.slane %v3000, %v3584
    %v3586 = vsel %vm3170, %v3585, %v3581
    %v3587 = vlaneseq
    %v3588 = vshrl.u32 %v3587, 7
    %v3589 = vsub.s32 %v3172, %v3588
    %v3590 = vrot.slane %v3001, %v3589
    %v3591 = vsel %vm3177, %v3590, %v3586
    %v3592 = vlaneseq
    %v3593 = vshrl.u32 %v3592, 7
    %v3594 = vsub.s32 %v3179, %v3593
    %v3595 = vrot.slane %v3002, %v3594
    %v3596 = vsel %vm3184, %v3595, %v3591
    %v3597 = vlaneseq
    %v3598 = vshrl.u32 %v3597, 7
    %v3599 = vsub.s32 %v3186, %v3598
    %v3600 = vrot.slane %v3003, %v3599
    %v3601 = vsel %vm3191, %v3600, %v3596
    %v3602 = vlaneseq
    %v3603 = vshrl.u32 %v3602, 7
    %v3604 = vsub.s32 %v3193, %v3603
    %v3605 = vrot.slane %v3004, %v3604
    %v3606 = vsel %vm3198, %v3605, %v3601
    %v3607 = vlaneseq
    %v3608 = vshrl.u32 %v3607, 7
    %v3609 = vsub.s32 %v3200, %v3608
    %v3610 = vrot.slane %v3005, %v3609
    %v3611 = vsel %vm3205, %v3610, %v3606
    %v3612 = vlaneseq
    %v3613 = vshrl.u32 %v3612, 7
    %v3614 = vsub.s32 %v3207, %v3613
    %v3615 = vrot.slane %v3006, %v3614
    %v3616 = vsel %vm3212, %v3615, %v3611
    %v3617 = vlaneseq
    %v3618 = vshrl.u32 %v3617, 7
    %v3619 = vsub.s32 %v3214, %v3618
    %v3620 = vrot.slane %v3007, %v3619
    %v3621 = vsel %vm3219, %v3620, %v3616
    %v3622 = vlaneseq
    %v3623 = vshrl.u32 %v3622, 7
    %v3624 = vsub.s32 %v3221, %v3623
    %v3625 = vrot.slane %v3008, %v3624
    %v3626 = vsel %vm3226, %v3625, %v3621
    %v3627 = vlaneseq
    %v3628 = vshrl.u32 %v3627, 7
    %v3629 = vsub.s32 %v3228, %v3628
    %v3630 = vrot.slane %v3009, %v3629
    %v3631 = vsel %vm3233, %v3630, %v3626
    %v3632 = vlaneseq
    %v3633 = vshrl.u32 %v3632, 7
    %v3634 = vsub.s32 %v3235, %v3633
    %v3635 = vrot.slane %v3010, %v3634
    %v3636 = vsel %vm3240, %v3635, %v3631
    %v3637 = vlaneseq
    %v3638 = vshrl.u32 %v3637, 7
    %v3639 = vsub.s32 %v3242, %v3638
    %v3640 = vrot.slane %v3011, %v3639
    %v3641 = vsel %vm3247, %v3640, %v3636
    %v3642 = vlaneseq
    %v3643 = vshrl.u32 %v3642, 7
    %v3644 = vsub.s32 %v3249, %v3643
    %v3645 = vrot.slane %v3012, %v3644
    %v3646 = vsel %vm3254, %v3645, %v3641
    %v3647 = vlaneseq
    %v3648 = vshrl.u32 %v3647, 7
    %v3649 = vsub.s32 %v3256, %v3648
    %v3650 = vrot.slane %v3013, %v3649
    %v3651 = vsel %vm3261, %v3650, %v3646
    %v3652 = vlaneseq
    %v3653 = vshrl.u32 %v3652, 7
    %v3654 = vsub.s32 %v3263, %v3653
    %v3655 = vrot.slane %v3014, %v3654
    %v3656 = vsel %vm3268, %v3655, %v3651
    %v3657 = vlaneseq
    %v3658 = vshrl.u32 %v3657, 7
    %v3659 = vsub.s32 %v3160, %v3658
    %v3660 = vrot.slane %v3015, %v3659
    %v3661 = vlaneseq
    %v3662 = vshrl.u32 %v3661, 7
    %v3663 = vsub.s32 %v3165, %v3662
    %v3664 = vrot.slane %v3016, %v3663
    %v3665 = vsel %vm3170, %v3664, %v3660
    %v3666 = vlaneseq
    %v3667 = vshrl.u32 %v3666, 7
    %v3668 = vsub.s32 %v3172, %v3667
    %v3669 = vrot.slane %v3017, %v3668
    %v3670 = vsel %vm3177, %v3669, %v3665
    %v3671 = vlaneseq
    %v3672 = vshrl.u32 %v3671, 7
    %v3673 = vsub.s32 %v3179, %v3672
    %v3674 = vrot.slane %v3018, %v3673
    %v3675 = vsel %vm3184, %v3674, %v3670
    %v3676 = vlaneseq
    %v3677 = vshrl.u32 %v3676, 7
    %v3678 = vsub.s32 %v3186, %v3677
    %v3679 = vrot.slane %v3019, %v3678
    %v3680 = vsel %vm3191, %v3679, %v3675
    %v3681 = vlaneseq
    %v3682 = vshrl.u32 %v3681, 7
    %v3683 = vsub.s32 %v3193, %v3682
    %v3684 = vrot.slane %v3020, %v3683
    %v3685 = vsel %vm3198, %v3684, %v3680
    %v3686 = vlaneseq
    %v3687 = vshrl.u32 %v3686, 7
    %v3688 = vsub.s32 %v3200, %v3687
    %v3689 = vrot.slane %v3021, %v3688
    %v3690 = vsel %vm3205, %v3689, %v3685
    %v3691 = vlaneseq
    %v3692 = vshrl.u32 %v3691, 7
    %v3693 = vsub.s32 %v3207, %v3692
    %v3694 = vrot.slane %v3022, %v3693
    %v3695 = vsel %vm3212, %v3694, %v3690
    %v3696 = vlaneseq
    %v3697 = vshrl.u32 %v3696, 7
    %v3698 = vsub.s32 %v3214, %v3697
    %v3699 = vrot.slane %v3023, %v3698
    %v3700 = vsel %vm3219, %v3699, %v3695
    %v3701 = vlaneseq
    %v3702 = vshrl.u32 %v3701, 7
    %v3703 = vsub.s32 %v3221, %v3702
    %v3704 = vrot.slane %v3024, %v3703
    %v3705 = vsel %vm3226, %v3704, %v3700
    %v3706 = vlaneseq
    %v3707 = vshrl.u32 %v3706, 7
    %v3708 = vsub.s32 %v3228, %v3707
    %v3709 = vrot.slane %v3025, %v3708
    %v3710 = vsel %vm3233, %v3709, %v3705
    %v3711 = vlaneseq
    %v3712 = vshrl.u32 %v3711, 7
    %v3713 = vsub.s32 %v3235, %v3712
    %v3714 = vrot.slane %v3026, %v3713
    %v3715 = vsel %vm3240, %v3714, %v3710
    %v3716 = vlaneseq
    %v3717 = vshrl.u32 %v3716, 7
    %v3718 = vsub.s32 %v3242, %v3717
    %v3719 = vrot.slane %v3027, %v3718
    %v3720 = vsel %vm3247, %v3719, %v3715
    %v3721 = vlaneseq
    %v3722 = vshrl.u32 %v3721, 7
    %v3723 = vsub.s32 %v3249, %v3722
    %v3724 = vrot.slane %v3028, %v3723
    %v3725 = vsel %vm3254, %v3724, %v3720
    %v3726 = vlaneseq
    %v3727 = vshrl.u32 %v3726, 7
    %v3728 = vsub.s32 %v3256, %v3727
    %v3729 = vrot.slane %v3029, %v3728
    %v3730 = vsel %vm3261, %v3729, %v3725
    %v3731 = vlaneseq
    %v3732 = vshrl.u32 %v3731, 7
    %v3733 = vsub.s32 %v3263, %v3732
    %v3734 = vrot.slane %v3030, %v3733
    %v3735 = vsel %vm3268, %v3734, %v3730
    %v3736 = vsel %vm3349, %v3735, %v3656
    %3738 = vst [vmem:[#allocation21] sm:$0x3] %v3736
    // Predicated region
    $region78: #{embedding_model_forward.1} parent=1 // pred_check
      _
    $region79: #{embedding_model_forward.1} parent=1 // pred_check_branch
      %3740 = sbr.rel (0) target = $region81
    $region80: #{embedding_model_forward.1} parent=1 // pred_region
      %s3742 = ssub.s32 32, 32
      %3743 = vsyncadd [#allocation6], %s3742
      %s3745 = sshll.u32 [#allocation18], 4
      %s3746 = int_to_ptr.vmem [resolvable:$true] %s3745
      %3748 = dma.vmem_to_hbm [thread:$0]  %s3746, 32, %s10, [#allocation6]
    $region81: #{embedding_model_forward.1} parent=1 // pred_fallthru
      _
    // Predicated region
    $region82: #{embedding_model_forward.1} parent=1 // pred_check
      _
    $region83: #{embedding_model_forward.1} parent=1 // pred_check_branch
      %3750 = sbr.rel (0) target = $region85
    $region84: #{embedding_model_forward.1} parent=1 // pred_region
      %s3752 = ssub.s32 32, 32
      %3753 = vsyncadd [#allocation20], %s3752
      %s3755 = sshll.u32 [#allocation19], 4
      %s3756 = int_to_ptr.vmem [resolvable:$true] %s3755
      %3758 = dma.vmem_to_hbm [thread:$0]  %s3756, 32, %s11, [#allocation20]
    $region85: #{embedding_model_forward.1} parent=1 // pred_fallthru
      _
    // Predicated region
    $region86: #{embedding_model_forward.1} parent=1 // pred_check
      _
    $region87: #{embedding_model_forward.1} parent=1 // pred_check_branch
      %3760 = sbr.rel (0) target = $region89
    $region88: #{embedding_model_forward.1} parent=1 // pred_region
      %s3762 = ssub.s32 32, 32
      %3763 = vsyncadd [#allocation20], %s3762
      %s3765 = sshll.u32 [#allocation21], 4
      %s3766 = int_to_ptr.vmem [resolvable:$true] %s3765
      %3768 = dma.vmem_to_hbm [thread:$0]  %s3766, 32, %s12, [#allocation20]
    $region89: #{embedding_model_forward.1} parent=1 // pred_fallthru
      _
    // Predicated region
    $region90: #{embedding_model_forward.1} parent=1 // pred_check
      _
    $region91: #{embedding_model_forward.1} parent=1 // pred_check_branch
      %3770 = sbr.rel (0) target = $region93
    $region92: #{embedding_model_forward.1} parent=1 // pred_region
      %3771 = dma.done [#allocation6], 32
    $region93: #{embedding_model_forward.1} parent=1 // pred_fallthru
      _
    // Predicated region
    $region94: #{embedding_model_forward.1} parent=1 // pred_check
      _
    $region95: #{embedding_model_forward.1} parent=1 // pred_check_branch
      %3773 = sbr.rel (0) target = $region97
    $region96: #{embedding_model_forward.1} parent=1 // pred_region
      %3774 = dma.done [#allocation20], 32
    $region97: #{embedding_model_forward.1} parent=1 // pred_fallthru
      _
    // Predicated region
    $region98: #{embedding_model_forward.1} parent=1 // pred_check
      _
    $region99: #{embedding_model_forward.1} parent=1 // pred_check_branch
      %3776 = sbr.rel (0) target = $region101
    $region100: #{embedding_model_forward.1} parent=1 // pred_region
      %3777 = dma.done [#allocation20], 32
    $region101: #{embedding_model_forward.1} parent=1 // pred_fallthru
      _
    %3778 = vsyncpa [#allocation5], 1
    %3779 = vsyncpa [#allocation8], 1
    %3780 = vsyncpa [#allocation11], 1
    %3781 = vsyncpa [#allocation14], 1
    %3782 = vsyncpa [#allocation17], 1
    %3783 = vsyncpa [#allocation6], 1
    %3784 = vsyncpa [#allocation20], 1

</llo_original>
